<compile_context>
chip_gen: v6e
topology: v6e:2x2x1
jax: 0.10.0
libtpu: 0.0.40
codegen_flags: <defaults>
</compile_context>

<pallas_src>
import functools

import jax
import jax.numpy as jnp
from jax import lax
from jax.experimental import pallas as pl
from jax.experimental.pallas import tpu as pltpu


def _block_kernel(x_ref, s1_ref, b1_ref, w1t_ref, s2_ref, b2_ref, w2t_ref,
                  wdt_ref, m1_ref, m2_ref, sel_ref, out_ref,
                  a_ref, p1_ref, c1_ref, bb_ref, p2_ref,
                  *, NB, Cin, Cout, H, W, Ho, Wo, stride, downsample):
    f32 = jnp.float32
    bf16 = jnp.bfloat16
    HW = H * W
    HWo = Ho * Wo
    M2 = NB * HWo

    # ---- BN1 (eval-mode affine) + ReLU, kept in NCHW-flat layout ----------
    x = x_ref[...].astype(f32)                                # (NB, Cin, HW)
    a_ref[...] = jnp.maximum(x * s1_ref[...] + b1_ref[...], 0.0)

    # ---- conv1 im2col slab: (9*Cin, NB*HW) bf16 ---------------------------
    # Row block t holds tap (dy, dx) = (t//3 - 1, t%3 - 1); lanes are the NB
    # images' flattened spatial planes concatenated.  Shifts are lane rolls,
    # halo handling is a 0/1 mask multiply (no padded planes).
    for n in range(NB):
        a_n = a_ref[n]                                        # (Cin, HW) f32
        csl = slice(n * HW, (n + 1) * HW)
        for t in range(9):
            dy, dx = t // 3 - 1, t % 3 - 1
            shift = (-(dy * W + dx)) % HW
            rolled = pltpu.roll(a_n, shift, 1) if shift else a_n
            p1_ref[t * Cin:(t + 1) * Cin, csl] = (
                rolled * m1_ref[t:t + 1, :]).astype(bf16)

    # ---- conv1 as a single MXU matmul (bf16 operands, f32 accumulate) -----
    c1_ref[...] = jnp.dot(w1t_ref[...], p1_ref[...],
                          preferred_element_type=f32)         # (Cout, NB*HW)

    # ---- stride handling (dense conv subsampled via a 0/1 selection matmul),
    #      then BN2 + ReLU ---------------------------------------------------
    if stride == 1:
        bb_ref[...] = jnp.maximum(c1_ref[...] * s2_ref[...] + b2_ref[...], 0.0)
    else:
        sel = sel_ref[...]                                    # (HW, HWo) 0/1
        for n in range(NB):
            sub = jnp.dot(c1_ref[:, n * HW:(n + 1) * HW], sel,
                          preferred_element_type=f32)         # (Cout, HWo)
            bb_ref[:, n * HWo:(n + 1) * HWo] = jnp.maximum(
                sub * s2_ref[...] + b2_ref[...], 0.0)

    # ---- conv2 im2col slab: (9*Cout, NB*HWo) bf16 --------------------------
    # bb is lane-concatenated across images; rolling the concatenated axis is
    # safe because the masks zero every position whose true source pixel lies
    # outside its own image.
    for t in range(9):
        dy, dx = t // 3 - 1, t % 3 - 1
        shift = (-(dy * Wo + dx)) % M2
        bb = bb_ref[...]                                      # (Cout, NB*HWo)
        rolled = pltpu.roll(bb, shift, 1) if shift else bb
        p2_ref[t * Cout:(t + 1) * Cout, :] = (
            rolled * m2_ref[t:t + 1, :]).astype(bf16)

    # ---- conv2 as a single MXU matmul; reuse c1_ref as its output buffer ---
    c1_ref[:, 0:M2] = jnp.dot(w2t_ref[...], p2_ref[...],
                              preferred_element_type=f32)     # (Cout, NB*HWo)

    # ---- residual + lane-dense output store (Cout sublanes, H*W lanes) -----
    for n in range(NB):
        if downsample:
            if stride == 1:
                a_n = a_ref[n]                                # (Cin, HWo==HW)
            else:
                a_n = jnp.dot(a_ref[n], sel_ref[...],
                              preferred_element_type=f32)     # (Cin, HWo)
            res = jnp.dot(wdt_ref[...], a_n.astype(bf16),
                          preferred_element_type=f32)         # (Cout, HWo)
        else:
            res = x_ref[n].astype(f32)                        # identity shortcut
        out_ref[n] = (c1_ref[:, n * HWo:(n + 1) * HWo] + res).astype(out_ref.dtype)


def _full_spec(a):
    nd = a.ndim
    return pl.BlockSpec(a.shape, lambda i, _nd=nd: (0,) * _nd)


def _tap_masks(Hh, Ww):
    h = jnp.arange(Hh)
    w = jnp.arange(Ww)
    rows = []
    for t in range(9):
        dy, dx = t // 3 - 1, t % 3 - 1
        hv = (h + dy >= 0) & (h + dy < Hh)
        wv = (w + dx >= 0) & (w + dx < Ww)
        rows.append((hv[:, None] & wv[None, :]).reshape(-1))
    return jnp.stack(rows).astype(jnp.float32)                # (9, Hh*Ww)


def _pick_nb(N, scratch_bytes, budget=8 * 1024 * 1024, nb_max=8):
    divs = [d for d in range(1, N + 1)
            if N % d == 0 and d <= nb_max and scratch_bytes(d) <= budget]
    if not divs:
        return 1
    pref = [d for d in divs if N // d >= 2]   # keep >= 2 grid steps (v7x: 2 TCs)
    return max(pref) if pref else max(divs)


def cifar_basic_block_v2(x_nchw, params, *, stride, downsample):
    """Forward pass of CIFARBasicBlockV2 (eval-mode BN). NCHW in, NCHW out."""
    N, Cin, H, W = x_nchw.shape
    Cout = params["w1"].shape[-1]
    Ho = (H + 2 - 3) // stride + 1
    Wo = (W + 2 - 3) // stride + 1
    HW, HWo = H * W, Ho * Wo
    if not downsample:
        assert stride == 1 and Cin == Cout, (
            "identity shortcut requires stride == 1 and Cin == Cout")

    def scratch_bytes(nb):
        return (nb * HW * (4 * Cin + 2 * 9 * Cin + 4 * Cout + 4 * Cin)
                + nb * HWo * (4 * Cout + 2 * 9 * Cout + 4 * Cout))

    NB = _pick_nb(N, scratch_bytes)

    eps = 1e-5
    s1 = (params["bn1_gamma"] / jnp.sqrt(params["bn1_var"] + eps)).astype(jnp.float32)
    b1 = (params["bn1_beta"] - params["bn1_mean"] * s1).astype(jnp.float32)
    s2 = (params["bn2_gamma"] / jnp.sqrt(params["bn2_var"] + eps)).astype(jnp.float32)
    b2 = (params["bn2_beta"] - params["bn2_mean"] * s2).astype(jnp.float32)
    s1, b1 = s1.reshape(Cin, 1), b1.reshape(Cin, 1)
    s2, b2 = s2.reshape(Cout, 1), b2.reshape(Cout, 1)

    # HWIO weights -> (Cout, 9*Cin) / (Cout, 9*Cout) bf16 for the MXU.
    w1t = params["w1"].reshape(9 * Cin, Cout).T.astype(jnp.bfloat16)
    w2t = params["w2"].reshape(9 * Cout, Cout).T.astype(jnp.bfloat16)
    wd = params.get("wd")
    if wd is None:
        wd = jnp.zeros((Cin, Cout), jnp.float32)               # unused dummy
    wdt = wd.T.astype(jnp.bfloat16)                            # (Cout, Cin)

    m1 = _tap_masks(H, W)                                      # (9, HW)
    m2 = jnp.tile(_tap_masks(Ho, Wo), (1, NB))                 # (9, NB*HWo)

    if stride > 1:
        src = (jnp.arange(Ho)[:, None] * stride * W
               + jnp.arange(Wo)[None, :] * stride).reshape(-1)
        sel = (jnp.arange(HW)[:, None] == src[None, :]).astype(jnp.float32)
    else:
        sel = jnp.zeros((8, 128), jnp.float32)                 # unused dummy

    x_flat = x_nchw.reshape(N, Cin, HW)                        # free reshape

    kern = functools.partial(
        _block_kernel, NB=NB, Cin=Cin, Cout=Cout, H=H, W=W, Ho=Ho, Wo=Wo,
        stride=stride, downsample=downsample)

    out_flat = pl.pallas_call(
        kern,
        out_shape=jax.ShapeDtypeStruct((N, Cout, HWo), x_nchw.dtype),
        grid=(N // NB,),
        in_specs=[
            pl.BlockSpec((NB, Cin, HW), lambda i: (i, 0, 0)),
            _full_spec(s1), _full_spec(b1), _full_spec(w1t),
            _full_spec(s2), _full_spec(b2), _full_spec(w2t),
            _full_spec(wdt), _full_spec(m1), _full_spec(m2), _full_spec(sel),
        ],
        out_specs=pl.BlockSpec((NB, Cout, HWo), lambda i: (i, 0, 0)),
        scratch_shapes=[
            pltpu.VMEM((NB, Cin, HW), jnp.float32),            # relu(bn1(x))
            pltpu.VMEM((9 * Cin, NB * HW), jnp.bfloat16),      # conv1 im2col slab
            pltpu.VMEM((Cout, NB * HW), jnp.float32),          # conv1 dense / conv2 out
            pltpu.VMEM((Cout, NB * HWo), jnp.float32),         # relu(bn2(conv1))
            pltpu.VMEM((9 * Cout, NB * HWo), jnp.bfloat16),    # conv2 im2col slab
        ],
        compiler_params=pltpu.CompilerParams(
            dimension_semantics=("parallel",)),
    )(x_flat, s1, b1, w1t, s2, b2, w2t, wdt, m1, m2, sel)

    return out_flat.reshape(N, Cout, Ho, Wo)                   # free reshape (NCHW)


def ref_forward(x_nchw, params, *, stride, downsample):
    """Pure-JAX reference (eval-mode BN) for numerical verification."""
    eps = 1e-5

    def bn(x, g, b, m, v):
        s = (g / jnp.sqrt(v + eps))[None, :, None, None]
        return (x - m[None, :, None, None]) * s + b[None, :, None, None]

    dn = ("NCHW", "HWIO", "NCHW")
    a = jax.nn.relu(bn(x_nchw, params["bn1_gamma"], params["bn1_beta"],
                       params["bn1_mean"], params["bn1_var"]))
    if downsample:
        wd_hwio = params["wd"].reshape(1, 1, *params["wd"].shape)
        residual = lax.conv_general_dilated(
            a, wd_hwio, (stride, stride), "VALID",
            dimension_numbers=dn, precision=lax.Precision.HIGHEST)
    else:
        residual = x_nchw
    b_ = lax.conv_general_dilated(a, params["w1"], (stride, stride),
                                  ((1, 1), (1, 1)), dimension_numbers=dn,
                                  precision=lax.Precision.HIGHEST)
    b_ = jax.nn.relu(bn(b_, params["bn2_gamma"], params["bn2_beta"],
                        params["bn2_mean"], params["bn2_var"]))
    c = lax.conv_general_dilated(b_, params["w2"], (1, 1),
                                 ((1, 1), (1, 1)), dimension_numbers=dn,
                                 precision=lax.Precision.HIGHEST)
    return c + residual


if __name__ == "__main__":
    root = jax.random.PRNGKey(0)

    def make_params(key, Cin, Cout, downsample):
        ks = jax.random.split(key, 12)
        p = {
            "bn1_gamma": 1.0 + 0.1 * jax.random.normal(ks[0], (Cin,), jnp.float32),
            "bn1_beta": 0.1 * jax.random.normal(ks[1], (Cin,), jnp.float32),
            "bn1_mean": 0.1 * jax.random.normal(ks[2], (Cin,), jnp.float32),
            "bn1_var": jax.nn.softplus(jax.random.normal(ks[3], (Cin,), jnp.float32)) + 0.5,
            "w1": 0.2 * jax.random.normal(ks[4], (3, 3, Cin, Cout), jnp.float32),
            "bn2_gamma": 1.0 + 0.1 * jax.random.normal(ks[5], (Cout,), jnp.float32),
            "bn2_beta": 0.1 * jax.random.normal(ks[6], (Cout,), jnp.float32),
            "bn2_mean": 0.1 * jax.random.normal(ks[7], (Cout,), jnp.float32),
            "bn2_var": jax.nn.softplus(jax.random.normal(ks[8], (Cout,), jnp.float32)) + 0.5,
            "w2": 0.2 * jax.random.normal(ks[9], (3, 3, Cout, Cout), jnp.float32),
        }
        if downsample:
            p["wd"] = 0.2 * jax.random.normal(ks[10], (Cin, Cout), jnp.float32)
        return p

    configs = [
        dict(N=8, Cin=8, Cout=16, H=16, W=16, stride=1, downsample=True),
        dict(N=8, Cin=8, Cout=16, H=16, W=16, stride=2, downsample=True),
        dict(N=8, Cin=16, Cout=16, H=16, W=16, stride=1, downsample=False),
    ]
    for i, cfg in enumerate(configs):
        kx, kp = jax.random.split(jax.random.fold_in(root, i))
        x = jax.random.normal(kx, (cfg["N"], cfg["Cin"], cfg["H"], cfg["W"]),
                              jnp.float32)
        params = make_params(kp, cfg["Cin"], cfg["Cout"], cfg["downsample"])

        out = cifar_basic_block_v2(x, params, stride=cfg["stride"],
                                   downsample=cfg["downsample"])
        out = jax.block_until_ready(out)
        ref = ref_forward(x, params, stride=cfg["stride"],
                          downsample=cfg["downsample"])
        assert out.shape == ref.shape, (out.shape, ref.shape)

        # bf16 MXU operands (f32 accumulation) -> loose per-element tolerance
        # plus a tight aggregate relative-error check (catches real bugs).
        rel = float(jnp.linalg.norm(out - ref) / (jnp.linalg.norm(ref) + 1e-6))
        ok = bool(jnp.allclose(out, ref, rtol=2e-2, atol=1e-1)) and rel < 2e-2
        if not ok:
            max_err = float(jnp.max(jnp.abs(out - ref)))
            raise AssertionError(
                f"config {i}: kernel/reference mismatch "
                f"(max abs err {max_err:.3e}, rel {rel:.3e})")

    print("KERNEL_OK")
</pallas_src>

<mosaic_0001>
module attributes {stable_mosaic.version = 11 : i64} {
  func.func @_block_kernel(%arg0: i32, %arg1: memref<4x8x256xf32, #tpu.memory_space<vmem>>, %arg2: memref<8x1xf32, #tpu.memory_space<vmem>>, %arg3: memref<8x1xf32, #tpu.memory_space<vmem>>, %arg4: memref<16x72xbf16, #tpu.memory_space<vmem>>, %arg5: memref<16x1xf32, #tpu.memory_space<vmem>>, %arg6: memref<16x1xf32, #tpu.memory_space<vmem>>, %arg7: memref<16x144xbf16, #tpu.memory_space<vmem>>, %arg8: memref<16x8xbf16, #tpu.memory_space<vmem>>, %arg9: memref<9x256xf32, #tpu.memory_space<vmem>>, %arg10: memref<9x1024xf32, #tpu.memory_space<vmem>>, %arg11: memref<8x128xf32, #tpu.memory_space<vmem>>, %arg12: memref<4x16x256xf32, #tpu.memory_space<vmem>>, %arg13: memref<4x8x256xf32, #tpu.memory_space<vmem>>, %arg14: memref<72x1024xbf16, #tpu.memory_space<vmem>>, %arg15: memref<16x1024xf32, #tpu.memory_space<vmem>>, %arg16: memref<16x1024xf32, #tpu.memory_space<vmem>>, %arg17: memref<144x1024xbf16, #tpu.memory_space<vmem>>) attributes {dimension_semantics = [#tpu.dimension_semantics<parallel>], iteration_bounds = array<i64: 2>, scalar_prefetch = 0 : i64, scratch_operands = 5 : i64, tpu.core_type = #tpu.core_type<tc>, window_params = [{transform_indices = @transform_0, window_bounds = array<i64: 4, 8, 256>}, {pipeline_mode = #tpu.pipeline_mode<synchronous>, transform_indices = @transform_1, window_bounds = array<i64: 8, 1>}, {pipeline_mode = #tpu.pipeline_mode<synchronous>, transform_indices = @transform_2, window_bounds = array<i64: 8, 1>}, {pipeline_mode = #tpu.pipeline_mode<synchronous>, transform_indices = @transform_3, window_bounds = array<i64: 16, 72>}, {pipeline_mode = #tpu.pipeline_mode<synchronous>, transform_indices = @transform_4, window_bounds = array<i64: 16, 1>}, {pipeline_mode = #tpu.pipeline_mode<synchronous>, transform_indices = @transform_5, window_bounds = array<i64: 16, 1>}, {pipeline_mode = #tpu.pipeline_mode<synchronous>, transform_indices = @transform_6, window_bounds = array<i64: 16, 144>}, {pipeline_mode = #tpu.pipeline_mode<synchronous>, transform_indices = @transform_7, window_bounds = array<i64: 16, 8>}, {pipeline_mode = #tpu.pipeline_mode<synchronous>, transform_indices = @transform_8, window_bounds = array<i64: 9, 256>}, {pipeline_mode = #tpu.pipeline_mode<synchronous>, transform_indices = @transform_9, window_bounds = array<i64: 9, 1024>}, {pipeline_mode = #tpu.pipeline_mode<synchronous>, transform_indices = @transform_10, window_bounds = array<i64: 8, 128>}, {transform_indices = @transform_11, window_bounds = array<i64: 4, 16, 256>}]} {
    %c0 = arith.constant 0 : index
    %c0_0 = arith.constant 0 : index
    %c0_1 = arith.constant 0 : index
    %0 = vector.load %arg1[%c0, %c0_0, %c0_1] : memref<4x8x256xf32, #tpu.memory_space<vmem>>, vector<4x8x256xf32>
    %c0_2 = arith.constant 0 : index
    %c0_3 = arith.constant 0 : index
    %1 = vector.load %arg2[%c0_2, %c0_3] : memref<8x1xf32, #tpu.memory_space<vmem>>, vector<8x1xf32>
    %2 = vector.shape_cast %1 : vector<8x1xf32> to vector<1x8x1xf32>
    %3 = vector.broadcast %2 : vector<1x8x1xf32> to vector<4x8x256xf32>
    %4 = arith.mulf %0, %3 : vector<4x8x256xf32>
    %c0_4 = arith.constant 0 : index
    %c0_5 = arith.constant 0 : index
    %5 = vector.load %arg3[%c0_4, %c0_5] : memref<8x1xf32, #tpu.memory_space<vmem>>, vector<8x1xf32>
    %6 = vector.shape_cast %5 : vector<8x1xf32> to vector<1x8x1xf32>
    %7 = vector.broadcast %6 : vector<1x8x1xf32> to vector<4x8x256xf32>
    %8 = arith.addf %4, %7 : vector<4x8x256xf32>
    %cst = arith.constant 0.000000e+00 : f32
    %9 = vector.broadcast %cst : f32 to vector<4x8x256xf32>
    %10 = arith.maximumf %8, %9 : vector<4x8x256xf32>
    %c0_6 = arith.constant 0 : index
    %c0_7 = arith.constant 0 : index
    %c0_8 = arith.constant 0 : index
    %11 = vector.load %arg13[%c0_6, %c0_7, %c0_8] : memref<4x8x256xf32, #tpu.memory_space<vmem>>, vector<4x8x256xf32>
    tpu.vector_store %arg13[%c0_6, %c0_7, %c0_8], %10 {strides = array<i32>} : memref<4x8x256xf32, #tpu.memory_space<vmem>>, vector<4x8x256xf32>,
    %c0_9 = arith.constant 0 : index
    %c0_10 = arith.constant 0 : index
    %c0_11 = arith.constant 0 : index
    %12 = vector.load %arg13[%c0_9, %c0_10, %c0_11] : memref<4x8x256xf32, #tpu.memory_space<vmem>>, vector<1x8x256xf32>
    %13 = vector.shape_cast %12 : vector<1x8x256xf32> to vector<8x256xf32>
    %c17_i32 = arith.constant 17 : i32
    %14 = tpu.dynamic_rotate %13 by %c17_i32 dim 1 : vector<8x256xf32>, i32 -> vector<8x256xf32>
    %c0_12 = arith.constant 0 : index
    %c0_13 = arith.constant 0 : index
    %15 = vector.load %arg9[%c0_12, %c0_13] : memref<9x256xf32, #tpu.memory_space<vmem>>, vector<1x256xf32>
    %16 = vector.broadcast %15 : vector<1x256xf32> to vector<8x256xf32>
    %17 = arith.mulf %14, %16 : vector<8x256xf32>
    %18 = arith.truncf %17 : vector<8x256xf32> to vector<8x256xbf16>
    %c0_14 = arith.constant 0 : index
    %c0_15 = arith.constant 0 : index
    %19 = vector.load %arg14[%c0_14, %c0_15] : memref<72x1024xbf16, #tpu.memory_space<vmem>>, vector<8x256xbf16>
    tpu.vector_store %arg14[%c0_14, %c0_15], %18 {strides = array<i32>} : memref<72x1024xbf16, #tpu.memory_space<vmem>>, vector<8x256xbf16>,
    %c16_i32 = arith.constant 16 : i32
    %20 = tpu.dynamic_rotate %13 by %c16_i32 dim 1 : vector<8x256xf32>, i32 -> vector<8x256xf32>
    %c1 = arith.constant 1 : index
    %c0_16 = arith.constant 0 : index
    %21 = vector.load %arg9[%c1, %c0_16] : memref<9x256xf32, #tpu.memory_space<vmem>>, vector<1x256xf32>
    %22 = vector.broadcast %21 : vector<1x256xf32> to vector<8x256xf32>
    %23 = arith.mulf %20, %22 : vector<8x256xf32>
    %24 = arith.truncf %23 : vector<8x256xf32> to vector<8x256xbf16>
    %c8 = arith.constant 8 : index
    %c0_17 = arith.constant 0 : index
    %25 = vector.load %arg14[%c8, %c0_17] : memref<72x1024xbf16, #tpu.memory_space<vmem>>, vector<8x256xbf16>
    tpu.vector_store %arg14[%c8, %c0_17], %24 {strides = array<i32>} : memref<72x1024xbf16, #tpu.memory_space<vmem>>, vector<8x256xbf16>,
    %c15_i32 = arith.constant 15 : i32
    %26 = tpu.dynamic_rotate %13 by %c15_i32 dim 1 : vector<8x256xf32>, i32 -> vector<8x256xf32>
    %c2 = arith.constant 2 : index
    %c0_18 = arith.constant 0 : index
    %27 = vector.load %arg9[%c2, %c0_18] : memref<9x256xf32, #tpu.memory_space<vmem>>, vector<1x256xf32>
    %28 = vector.broadcast %27 : vector<1x256xf32> to vector<8x256xf32>
    %29 = arith.mulf %26, %28 : vector<8x256xf32>
    %30 = arith.truncf %29 : vector<8x256xf32> to vector<8x256xbf16>
    %c16 = arith.constant 16 : index
    %c0_19 = arith.constant 0 : index
    %31 = vector.load %arg14[%c16, %c0_19] : memref<72x1024xbf16, #tpu.memory_space<vmem>>, vector<8x256xbf16>
    tpu.vector_store %arg14[%c16, %c0_19], %30 {strides = array<i32>} : memref<72x1024xbf16, #tpu.memory_space<vmem>>, vector<8x256xbf16>,
    %c1_i32 = arith.constant 1 : i32
    %32 = tpu.dynamic_rotate %13 by %c1_i32 dim 1 : vector<8x256xf32>, i32 -> vector<8x256xf32>
    %c3 = arith.constant 3 : index
    %c0_20 = arith.constant 0 : index
    %33 = vector.load %arg9[%c3, %c0_20] : memref<9x256xf32, #tpu.memory_space<vmem>>, vector<1x256xf32>
    %34 = vector.broadcast %33 : vector<1x256xf32> to vector<8x256xf32>
    %35 = arith.mulf %32, %34 : vector<8x256xf32>
    %36 = arith.truncf %35 : vector<8x256xf32> to vector<8x256xbf16>
    %c24 = arith.constant 24 : index
    %c0_21 = arith.constant 0 : index
    %37 = vector.load %arg14[%c24, %c0_21] : memref<72x1024xbf16, #tpu.memory_space<vmem>>, vector<8x256xbf16>
    tpu.vector_store %arg14[%c24, %c0_21], %36 {strides = array<i32>} : memref<72x1024xbf16, #tpu.memory_space<vmem>>, vector<8x256xbf16>,
    %c4 = arith.constant 4 : index
    %c0_22 = arith.constant 0 : index
    %38 = vector.load %arg9[%c4, %c0_22] : memref<9x256xf32, #tpu.memory_space<vmem>>, vector<1x256xf32>
    %39 = vector.broadcast %38 : vector<1x256xf32> to vector<8x256xf32>
    %40 = arith.mulf %13, %39 : vector<8x256xf32>
    %41 = arith.truncf %40 : vector<8x256xf32> to vector<8x256xbf16>
    %c32 = arith.constant 32 : index
    %c0_23 = arith.constant 0 : index
    %42 = vector.load %arg14[%c32, %c0_23] : memref<72x1024xbf16, #tpu.memory_space<vmem>>, vector<8x256xbf16>
    tpu.vector_store %arg14[%c32, %c0_23], %41 {strides = array<i32>} : memref<72x1024xbf16, #tpu.memory_space<vmem>>, vector<8x256xbf16>,
    %c255_i32 = arith.constant 255 : i32
    %43 = tpu.dynamic_rotate %13 by %c255_i32 dim 1 : vector<8x256xf32>, i32 -> vector<8x256xf32>
    %c5 = arith.constant 5 : index
    %c0_24 = arith.constant 0 : index
    %44 = vector.load %arg9[%c5, %c0_24] : memref<9x256xf32, #tpu.memory_space<vmem>>, vector<1x256xf32>
    %45 = vector.broadcast %44 : vector<1x256xf32> to vector<8x256xf32>
    %46 = arith.mulf %43, %45 : vector<8x256xf32>
    %47 = arith.truncf %46 : vector<8x256xf32> to vector<8x256xbf16>
    %c40 = arith.constant 40 : index
    %c0_25 = arith.constant 0 : index
    %48 = vector.load %arg14[%c40, %c0_25] : memref<72x1024xbf16, #tpu.memory_space<vmem>>, vector<8x256xbf16>
    tpu.vector_store %arg14[%c40, %c0_25], %47 {strides = array<i32>} : memref<72x1024xbf16, #tpu.memory_space<vmem>>, vector<8x256xbf16>,
    %c241_i32 = arith.constant 241 : i32
    %49 = tpu.dynamic_rotate %13 by %c241_i32 dim 1 : vector<8x256xf32>, i32 -> vector<8x256xf32>
    %c6 = arith.constant 6 : index
    %c0_26 = arith.constant 0 : index
    %50 = vector.load %arg9[%c6, %c0_26] : memref<9x256xf32, #tpu.memory_space<vmem>>, vector<1x256xf32>
    %51 = vector.broadcast %50 : vector<1x256xf32> to vector<8x256xf32>
    %52 = arith.mulf %49, %51 : vector<8x256xf32>
    %53 = arith.truncf %52 : vector<8x256xf32> to vector<8x256xbf16>
    %c48 = arith.constant 48 : index
    %c0_27 = arith.constant 0 : index
    %54 = vector.load %arg14[%c48, %c0_27] : memref<72x1024xbf16, #tpu.memory_space<vmem>>, vector<8x256xbf16>
    tpu.vector_store %arg14[%c48, %c0_27], %53 {strides = array<i32>} : memref<72x1024xbf16, #tpu.memory_space<vmem>>, vector<8x256xbf16>,
    %c240_i32 = arith.constant 240 : i32
    %55 = tpu.dynamic_rotate %13 by %c240_i32 dim 1 : vector<8x256xf32>, i32 -> vector<8x256xf32>
    %c7 = arith.constant 7 : index
    %c0_28 = arith.constant 0 : index
    %56 = vector.load %arg9[%c7, %c0_28] : memref<9x256xf32, #tpu.memory_space<vmem>>, vector<1x256xf32>
    %57 = vector.broadcast %56 : vector<1x256xf32> to vector<8x256xf32>
    %58 = arith.mulf %55, %57 : vector<8x256xf32>
    %59 = arith.truncf %58 : vector<8x256xf32> to vector<8x256xbf16>
    %c56 = arith.constant 56 : index
    %c0_29 = arith.constant 0 : index
    %60 = vector.load %arg14[%c56, %c0_29] : memref<72x1024xbf16, #tpu.memory_space<vmem>>, vector<8x256xbf16>
    tpu.vector_store %arg14[%c56, %c0_29], %59 {strides = array<i32>} : memref<72x1024xbf16, #tpu.memory_space<vmem>>, vector<8x256xbf16>,
    %c239_i32 = arith.constant 239 : i32
    %61 = tpu.dynamic_rotate %13 by %c239_i32 dim 1 : vector<8x256xf32>, i32 -> vector<8x256xf32>
    %c8_30 = arith.constant 8 : index
    %c0_31 = arith.constant 0 : index
    %62 = vector.load %arg9[%c8_30, %c0_31] : memref<9x256xf32, #tpu.memory_space<vmem>>, vector<1x256xf32>
    %63 = vector.broadcast %62 : vector<1x256xf32> to vector<8x256xf32>
    %64 = arith.mulf %61, %63 : vector<8x256xf32>
    %65 = arith.truncf %64 : vector<8x256xf32> to vector<8x256xbf16>
    %c64 = arith.constant 64 : index
    %c0_32 = arith.constant 0 : index
    %66 = vector.load %arg14[%c64, %c0_32] : memref<72x1024xbf16, #tpu.memory_space<vmem>>, vector<8x256xbf16>
    tpu.vector_store %arg14[%c64, %c0_32], %65 {strides = array<i32>} : memref<72x1024xbf16, #tpu.memory_space<vmem>>, vector<8x256xbf16>,
    %c1_33 = arith.constant 1 : index
    %c0_34 = arith.constant 0 : index
    %c0_35 = arith.constant 0 : index
    %67 = vector.load %arg13[%c1_33, %c0_34, %c0_35] : memref<4x8x256xf32, #tpu.memory_space<vmem>>, vector<1x8x256xf32>
    %68 = vector.shape_cast %67 : vector<1x8x256xf32> to vector<8x256xf32>
    %c17_i32_36 = arith.constant 17 : i32
    %69 = tpu.dynamic_rotate %68 by %c17_i32_36 dim 1 : vector<8x256xf32>, i32 -> vector<8x256xf32>
    %c0_37 = arith.constant 0 : index
    %c0_38 = arith.constant 0 : index
    %70 = vector.load %arg9[%c0_37, %c0_38] : memref<9x256xf32, #tpu.memory_space<vmem>>, vector<1x256xf32>
    %71 = vector.broadcast %70 : vector<1x256xf32> to vector<8x256xf32>
    %72 = arith.mulf %69, %71 : vector<8x256xf32>
    %73 = arith.truncf %72 : vector<8x256xf32> to vector<8x256xbf16>
    %c0_39 = arith.constant 0 : index
    %c256 = arith.constant 256 : index
    %74 = vector.load %arg14[%c0_39, %c256] : memref<72x1024xbf16, #tpu.memory_space<vmem>>, vector<8x256xbf16>
    tpu.vector_store %arg14[%c0_39, %c256], %73 {strides = array<i32>} : memref<72x1024xbf16, #tpu.memory_space<vmem>>, vector<8x256xbf16>,
    %c16_i32_40 = arith.constant 16 : i32
    %75 = tpu.dynamic_rotate %68 by %c16_i32_40 dim 1 : vector<8x256xf32>, i32 -> vector<8x256xf32>
    %c1_41 = arith.constant 1 : index
    %c0_42 = arith.constant 0 : index
    %76 = vector.load %arg9[%c1_41, %c0_42] : memref<9x256xf32, #tpu.memory_space<vmem>>, vector<1x256xf32>
    %77 = vector.broadcast %76 : vector<1x256xf32> to vector<8x256xf32>
    %78 = arith.mulf %75, %77 : vector<8x256xf32>
    %79 = arith.truncf %78 : vector<8x256xf32> to vector<8x256xbf16>
    %c8_43 = arith.constant 8 : index
    %c256_44 = arith.constant 256 : index
    %80 = vector.load %arg14[%c8_43, %c256_44] : memref<72x1024xbf16, #tpu.memory_space<vmem>>, vector<8x256xbf16>
    tpu.vector_store %arg14[%c8_43, %c256_44], %79 {strides = array<i32>} : memref<72x1024xbf16, #tpu.memory_space<vmem>>, vector<8x256xbf16>,
    %c15_i32_45 = arith.constant 15 : i32
    %81 = tpu.dynamic_rotate %68 by %c15_i32_45 dim 1 : vector<8x256xf32>, i32 -> vector<8x256xf32>
    %c2_46 = arith.constant 2 : index
    %c0_47 = arith.constant 0 : index
    %82 = vector.load %arg9[%c2_46, %c0_47] : memref<9x256xf32, #tpu.memory_space<vmem>>, vector<1x256xf32>
    %83 = vector.broadcast %82 : vector<1x256xf32> to vector<8x256xf32>
    %84 = arith.mulf %81, %83 : vector<8x256xf32>
    %85 = arith.truncf %84 : vector<8x256xf32> to vector<8x256xbf16>
    %c16_48 = arith.constant 16 : index
    %c256_49 = arith.constant 256 : index
    %86 = vector.load %arg14[%c16_48, %c256_49] : memref<72x1024xbf16, #tpu.memory_space<vmem>>, vector<8x256xbf16>
    tpu.vector_store %arg14[%c16_48, %c256_49], %85 {strides = array<i32>} : memref<72x1024xbf16, #tpu.memory_space<vmem>>, vector<8x256xbf16>,
    %c1_i32_50 = arith.constant 1 : i32
    %87 = tpu.dynamic_rotate %68 by %c1_i32_50 dim 1 : vector<8x256xf32>, i32 -> vector<8x256xf32>
    %c3_51 = arith.constant 3 : index
    %c0_52 = arith.constant 0 : index
    %88 = vector.load %arg9[%c3_51, %c0_52] : memref<9x256xf32, #tpu.memory_space<vmem>>, vector<1x256xf32>
    %89 = vector.broadcast %88 : vector<1x256xf32> to vector<8x256xf32>
    %90 = arith.mulf %87, %89 : vector<8x256xf32>
    %91 = arith.truncf %90 : vector<8x256xf32> to vector<8x256xbf16>
    %c24_53 = arith.constant 24 : index
    %c256_54 = arith.constant 256 : index
    %92 = vector.load %arg14[%c24_53, %c256_54] : memref<72x1024xbf16, #tpu.memory_space<vmem>>, vector<8x256xbf16>
    tpu.vector_store %arg14[%c24_53, %c256_54], %91 {strides = array<i32>} : memref<72x1024xbf16, #tpu.memory_space<vmem>>, vector<8x256xbf16>,
    %c4_55 = arith.constant 4 : index
    %c0_56 = arith.constant 0 : index
    %93 = vector.load %arg9[%c4_55, %c0_56] : memref<9x256xf32, #tpu.memory_space<vmem>>, vector<1x256xf32>
    %94 = vector.broadcast %93 : vector<1x256xf32> to vector<8x256xf32>
    %95 = arith.mulf %68, %94 : vector<8x256xf32>
    %96 = arith.truncf %95 : vector<8x256xf32> to vector<8x256xbf16>
    %c32_57 = arith.constant 32 : index
    %c256_58 = arith.constant 256 : index
    %97 = vector.load %arg14[%c32_57, %c256_58] : memref<72x1024xbf16, #tpu.memory_space<vmem>>, vector<8x256xbf16>
    tpu.vector_store %arg14[%c32_57, %c256_58], %96 {strides = array<i32>} : memref<72x1024xbf16, #tpu.memory_space<vmem>>, vector<8x256xbf16>,
    %c255_i32_59 = arith.constant 255 : i32
    %98 = tpu.dynamic_rotate %68 by %c255_i32_59 dim 1 : vector<8x256xf32>, i32 -> vector<8x256xf32>
    %c5_60 = arith.constant 5 : index
    %c0_61 = arith.constant 0 : index
    %99 = vector.load %arg9[%c5_60, %c0_61] : memref<9x256xf32, #tpu.memory_space<vmem>>, vector<1x256xf32>
    %100 = vector.broadcast %99 : vector<1x256xf32> to vector<8x256xf32>
    %101 = arith.mulf %98, %100 : vector<8x256xf32>
    %102 = arith.truncf %101 : vector<8x256xf32> to vector<8x256xbf16>
    %c40_62 = arith.constant 40 : index
    %c256_63 = arith.constant 256 : index
    %103 = vector.load %arg14[%c40_62, %c256_63] : memref<72x1024xbf16, #tpu.memory_space<vmem>>, vector<8x256xbf16>
    tpu.vector_store %arg14[%c40_62, %c256_63], %102 {strides = array<i32>} : memref<72x1024xbf16, #tpu.memory_space<vmem>>, vector<8x256xbf16>,
    %c241_i32_64 = arith.constant 241 : i32
    %104 = tpu.dynamic_rotate %68 by %c241_i32_64 dim 1 : vector<8x256xf32>, i32 -> vector<8x256xf32>
    %c6_65 = arith.constant 6 : index
    %c0_66 = arith.constant 0 : index
    %105 = vector.load %arg9[%c6_65, %c0_66] : memref<9x256xf32, #tpu.memory_space<vmem>>, vector<1x256xf32>
    %106 = vector.broadcast %105 : vector<1x256xf32> to vector<8x256xf32>
    %107 = arith.mulf %104, %106 : vector<8x256xf32>
    %108 = arith.truncf %107 : vector<8x256xf32> to vector<8x256xbf16>
    %c48_67 = arith.constant 48 : index
    %c256_68 = arith.constant 256 : index
    %109 = vector.load %arg14[%c48_67, %c256_68] : memref<72x1024xbf16, #tpu.memory_space<vmem>>, vector<8x256xbf16>
    tpu.vector_store %arg14[%c48_67, %c256_68], %108 {strides = array<i32>} : memref<72x1024xbf16, #tpu.memory_space<vmem>>, vector<8x256xbf16>,
    %c240_i32_69 = arith.constant 240 : i32
    %110 = tpu.dynamic_rotate %68 by %c240_i32_69 dim 1 : vector<8x256xf32>, i32 -> vector<8x256xf32>
    %c7_70 = arith.constant 7 : index
    %c0_71 = arith.constant 0 : index
    %111 = vector.load %arg9[%c7_70, %c0_71] : memref<9x256xf32, #tpu.memory_space<vmem>>, vector<1x256xf32>
    %112 = vector.broadcast %111 : vector<1x256xf32> to vector<8x256xf32>
    %113 = arith.mulf %110, %112 : vector<8x256xf32>
    %114 = arith.truncf %113 : vector<8x256xf32> to vector<8x256xbf16>
    %c56_72 = arith.constant 56 : index
    %c256_73 = arith.constant 256 : index
    %115 = vector.load %arg14[%c56_72, %c256_73] : memref<72x1024xbf16, #tpu.memory_space<vmem>>, vector<8x256xbf16>
    tpu.vector_store %arg14[%c56_72, %c256_73], %114 {strides = array<i32>} : memref<72x1024xbf16, #tpu.memory_space<vmem>>, vector<8x256xbf16>,
    %c239_i32_74 = arith.constant 239 : i32
    %116 = tpu.dynamic_rotate %68 by %c239_i32_74 dim 1 : vector<8x256xf32>, i32 -> vector<8x256xf32>
    %c8_75 = arith.constant 8 : index
    %c0_76 = arith.constant 0 : index
    %117 = vector.load %arg9[%c8_75, %c0_76] : memref<9x256xf32, #tpu.memory_space<vmem>>, vector<1x256xf32>
    %118 = vector.broadcast %117 : vector<1x256xf32> to vector<8x256xf32>
    %119 = arith.mulf %116, %118 : vector<8x256xf32>
    %120 = arith.truncf %119 : vector<8x256xf32> to vector<8x256xbf16>
    %c64_77 = arith.constant 64 : index
    %c256_78 = arith.constant 256 : index
    %121 = vector.load %arg14[%c64_77, %c256_78] : memref<72x1024xbf16, #tpu.memory_space<vmem>>, vector<8x256xbf16>
    tpu.vector_store %arg14[%c64_77, %c256_78], %120 {strides = array<i32>} : memref<72x1024xbf16, #tpu.memory_space<vmem>>, vector<8x256xbf16>,
    %c2_79 = arith.constant 2 : index
    %c0_80 = arith.constant 0 : index
    %c0_81 = arith.constant 0 : index
    %122 = vector.load %arg13[%c2_79, %c0_80, %c0_81] : memref<4x8x256xf32, #tpu.memory_space<vmem>>, vector<1x8x256xf32>
    %123 = vector.shape_cast %122 : vector<1x8x256xf32> to vector<8x256xf32>
    %c17_i32_82 = arith.constant 17 : i32
    %124 = tpu.dynamic_rotate %123 by %c17_i32_82 dim 1 : vector<8x256xf32>, i32 -> vector<8x256xf32>
    %c0_83 = arith.constant 0 : index
    %c0_84 = arith.constant 0 : index
    %125 = vector.load %arg9[%c0_83, %c0_84] : memref<9x256xf32, #tpu.memory_space<vmem>>, vector<1x256xf32>
    %126 = vector.broadcast %125 : vector<1x256xf32> to vector<8x256xf32>
    %127 = arith.mulf %124, %126 : vector<8x256xf32>
    %128 = arith.truncf %127 : vector<8x256xf32> to vector<8x256xbf16>
    %c0_85 = arith.constant 0 : index
    %c512 = arith.constant 512 : index
    %129 = vector.load %arg14[%c0_85, %c512] : memref<72x1024xbf16, #tpu.memory_space<vmem>>, vector<8x256xbf16>
    tpu.vector_store %arg14[%c0_85, %c512], %128 {strides = array<i32>} : memref<72x1024xbf16, #tpu.memory_space<vmem>>, vector<8x256xbf16>,
    %c16_i32_86 = arith.constant 16 : i32
    %130 = tpu.dynamic_rotate %123 by %c16_i32_86 dim 1 : vector<8x256xf32>, i32 -> vector<8x256xf32>
    %c1_87 = arith.constant 1 : index
    %c0_88 = arith.constant 0 : index
    %131 = vector.load %arg9[%c1_87, %c0_88] : memref<9x256xf32, #tpu.memory_space<vmem>>, vector<1x256xf32>
    %132 = vector.broadcast %131 : vector<1x256xf32> to vector<8x256xf32>
    %133 = arith.mulf %130, %132 : vector<8x256xf32>
    %134 = arith.truncf %133 : vector<8x256xf32> to vector<8x256xbf16>
    %c8_89 = arith.constant 8 : index
    %c512_90 = arith.constant 512 : index
    %135 = vector.load %arg14[%c8_89, %c512_90] : memref<72x1024xbf16, #tpu.memory_space<vmem>>, vector<8x256xbf16>
    tpu.vector_store %arg14[%c8_89, %c512_90], %134 {strides = array<i32>} : memref<72x1024xbf16, #tpu.memory_space<vmem>>, vector<8x256xbf16>,
    %c15_i32_91 = arith.constant 15 : i32
    %136 = tpu.dynamic_rotate %123 by %c15_i32_91 dim 1 : vector<8x256xf32>, i32 -> vector<8x256xf32>
    %c2_92 = arith.constant 2 : index
    %c0_93 = arith.constant 0 : index
    %137 = vector.load %arg9[%c2_92, %c0_93] : memref<9x256xf32, #tpu.memory_space<vmem>>, vector<1x256xf32>
    %138 = vector.broadcast %137 : vector<1x256xf32> to vector<8x256xf32>
    %139 = arith.mulf %136, %138 : vector<8x256xf32>
    %140 = arith.truncf %139 : vector<8x256xf32> to vector<8x256xbf16>
    %c16_94 = arith.constant 16 : index
    %c512_95 = arith.constant 512 : index
    %141 = vector.load %arg14[%c16_94, %c512_95] : memref<72x1024xbf16, #tpu.memory_space<vmem>>, vector<8x256xbf16>
    tpu.vector_store %arg14[%c16_94, %c512_95], %140 {strides = array<i32>} : memref<72x1024xbf16, #tpu.memory_space<vmem>>, vector<8x256xbf16>,
    %c1_i32_96 = arith.constant 1 : i32
    %142 = tpu.dynamic_rotate %123 by %c1_i32_96 dim 1 : vector<8x256xf32>, i32 -> vector<8x256xf32>
    %c3_97 = arith.constant 3 : index
    %c0_98 = arith.constant 0 : index
    %143 = vector.load %arg9[%c3_97, %c0_98] : memref<9x256xf32, #tpu.memory_space<vmem>>, vector<1x256xf32>
    %144 = vector.broadcast %143 : vector<1x256xf32> to vector<8x256xf32>
    %145 = arith.mulf %142, %144 : vector<8x256xf32>
    %146 = arith.truncf %145 : vector<8x256xf32> to vector<8x256xbf16>
    %c24_99 = arith.constant 24 : index
    %c512_100 = arith.constant 512 : index
    %147 = vector.load %arg14[%c24_99, %c512_100] : memref<72x1024xbf16, #tpu.memory_space<vmem>>, vector<8x256xbf16>
    tpu.vector_store %arg14[%c24_99, %c512_100], %146 {strides = array<i32>} : memref<72x1024xbf16, #tpu.memory_space<vmem>>, vector<8x256xbf16>,
    %c4_101 = arith.constant 4 : index
    %c0_102 = arith.constant 0 : index
    %148 = vector.load %arg9[%c4_101, %c0_102] : memref<9x256xf32, #tpu.memory_space<vmem>>, vector<1x256xf32>
    %149 = vector.broadcast %148 : vector<1x256xf32> to vector<8x256xf32>
    %150 = arith.mulf %123, %149 : vector<8x256xf32>
    %151 = arith.truncf %150 : vector<8x256xf32> to vector<8x256xbf16>
    %c32_103 = arith.constant 32 : index
    %c512_104 = arith.constant 512 : index
    %152 = vector.load %arg14[%c32_103, %c512_104] : memref<72x1024xbf16, #tpu.memory_space<vmem>>, vector<8x256xbf16>
    tpu.vector_store %arg14[%c32_103, %c512_104], %151 {strides = array<i32>} : memref<72x1024xbf16, #tpu.memory_space<vmem>>, vector<8x256xbf16>,
    %c255_i32_105 = arith.constant 255 : i32
    %153 = tpu.dynamic_rotate %123 by %c255_i32_105 dim 1 : vector<8x256xf32>, i32 -> vector<8x256xf32>
    %c5_106 = arith.constant 5 : index
    %c0_107 = arith.constant 0 : index
    %154 = vector.load %arg9[%c5_106, %c0_107] : memref<9x256xf32, #tpu.memory_space<vmem>>, vector<1x256xf32>
    %155 = vector.broadcast %154 : vector<1x256xf32> to vector<8x256xf32>
    %156 = arith.mulf %153, %155 : vector<8x256xf32>
    %157 = arith.truncf %156 : vector<8x256xf32> to vector<8x256xbf16>
    %c40_108 = arith.constant 40 : index
    %c512_109 = arith.constant 512 : index
    %158 = vector.load %arg14[%c40_108, %c512_109] : memref<72x1024xbf16, #tpu.memory_space<vmem>>, vector<8x256xbf16>
    tpu.vector_store %arg14[%c40_108, %c512_109], %157 {strides = array<i32>} : memref<72x1024xbf16, #tpu.memory_space<vmem>>, vector<8x256xbf16>,
    %c241_i32_110 = arith.constant 241 : i32
    %159 = tpu.dynamic_rotate %123 by %c241_i32_110 dim 1 : vector<8x256xf32>, i32 -> vector<8x256xf32>
    %c6_111 = arith.constant 6 : index
    %c0_112 = arith.constant 0 : index
    %160 = vector.load %arg9[%c6_111, %c0_112] : memref<9x256xf32, #tpu.memory_space<vmem>>, vector<1x256xf32>
    %161 = vector.broadcast %160 : vector<1x256xf32> to vector<8x256xf32>
    %162 = arith.mulf %159, %161 : vector<8x256xf32>
    %163 = arith.truncf %162 : vector<8x256xf32> to vector<8x256xbf16>
    %c48_113 = arith.constant 48 : index
    %c512_114 = arith.constant 512 : index
    %164 = vector.load %arg14[%c48_113, %c512_114] : memref<72x1024xbf16, #tpu.memory_space<vmem>>, vector<8x256xbf16>
    tpu.vector_store %arg14[%c48_113, %c512_114], %163 {strides = array<i32>} : memref<72x1024xbf16, #tpu.memory_space<vmem>>, vector<8x256xbf16>,
    %c240_i32_115 = arith.constant 240 : i32
    %165 = tpu.dynamic_rotate %123 by %c240_i32_115 dim 1 : vector<8x256xf32>, i32 -> vector<8x256xf32>
    %c7_116 = arith.constant 7 : index
    %c0_117 = arith.constant 0 : index
    %166 = vector.load %arg9[%c7_116, %c0_117] : memref<9x256xf32, #tpu.memory_space<vmem>>, vector<1x256xf32>
    %167 = vector.broadcast %166 : vector<1x256xf32> to vector<8x256xf32>
    %168 = arith.mulf %165, %167 : vector<8x256xf32>
    %169 = arith.truncf %168 : vector<8x256xf32> to vector<8x256xbf16>
    %c56_118 = arith.constant 56 : index
    %c512_119 = arith.constant 512 : index
    %170 = vector.load %arg14[%c56_118, %c512_119] : memref<72x1024xbf16, #tpu.memory_space<vmem>>, vector<8x256xbf16>
    tpu.vector_store %arg14[%c56_118, %c512_119], %169 {strides = array<i32>} : memref<72x1024xbf16, #tpu.memory_space<vmem>>, vector<8x256xbf16>,
    %c239_i32_120 = arith.constant 239 : i32
    %171 = tpu.dynamic_rotate %123 by %c239_i32_120 dim 1 : vector<8x256xf32>, i32 -> vector<8x256xf32>
    %c8_121 = arith.constant 8 : index
    %c0_122 = arith.constant 0 : index
    %172 = vector.load %arg9[%c8_121, %c0_122] : memref<9x256xf32, #tpu.memory_space<vmem>>, vector<1x256xf32>
    %173 = vector.broadcast %172 : vector<1x256xf32> to vector<8x256xf32>
    %174 = arith.mulf %171, %173 : vector<8x256xf32>
    %175 = arith.truncf %174 : vector<8x256xf32> to vector<8x256xbf16>
    %c64_123 = arith.constant 64 : index
    %c512_124 = arith.constant 512 : index
    %176 = vector.load %arg14[%c64_123, %c512_124] : memref<72x1024xbf16, #tpu.memory_space<vmem>>, vector<8x256xbf16>
    tpu.vector_store %arg14[%c64_123, %c512_124], %175 {strides = array<i32>} : memref<72x1024xbf16, #tpu.memory_space<vmem>>, vector<8x256xbf16>,
    %c3_125 = arith.constant 3 : index
    %c0_126 = arith.constant 0 : index
    %c0_127 = arith.constant 0 : index
    %177 = vector.load %arg13[%c3_125, %c0_126, %c0_127] : memref<4x8x256xf32, #tpu.memory_space<vmem>>, vector<1x8x256xf32>
    %178 = vector.shape_cast %177 : vector<1x8x256xf32> to vector<8x256xf32>
    %c17_i32_128 = arith.constant 17 : i32
    %179 = tpu.dynamic_rotate %178 by %c17_i32_128 dim 1 : vector<8x256xf32>, i32 -> vector<8x256xf32>
    %c0_129 = arith.constant 0 : index
    %c0_130 = arith.constant 0 : index
    %180 = vector.load %arg9[%c0_129, %c0_130] : memref<9x256xf32, #tpu.memory_space<vmem>>, vector<1x256xf32>
    %181 = vector.broadcast %180 : vector<1x256xf32> to vector<8x256xf32>
    %182 = arith.mulf %179, %181 : vector<8x256xf32>
    %183 = arith.truncf %182 : vector<8x256xf32> to vector<8x256xbf16>
    %c0_131 = arith.constant 0 : index
    %c768 = arith.constant 768 : index
    %184 = vector.load %arg14[%c0_131, %c768] : memref<72x1024xbf16, #tpu.memory_space<vmem>>, vector<8x256xbf16>
    tpu.vector_store %arg14[%c0_131, %c768], %183 {strides = array<i32>} : memref<72x1024xbf16, #tpu.memory_space<vmem>>, vector<8x256xbf16>,
    %c16_i32_132 = arith.constant 16 : i32
    %185 = tpu.dynamic_rotate %178 by %c16_i32_132 dim 1 : vector<8x256xf32>, i32 -> vector<8x256xf32>
    %c1_133 = arith.constant 1 : index
    %c0_134 = arith.constant 0 : index
    %186 = vector.load %arg9[%c1_133, %c0_134] : memref<9x256xf32, #tpu.memory_space<vmem>>, vector<1x256xf32>
    %187 = vector.broadcast %186 : vector<1x256xf32> to vector<8x256xf32>
    %188 = arith.mulf %185, %187 : vector<8x256xf32>
    %189 = arith.truncf %188 : vector<8x256xf32> to vector<8x256xbf16>
    %c8_135 = arith.constant 8 : index
    %c768_136 = arith.constant 768 : index
    %190 = vector.load %arg14[%c8_135, %c768_136] : memref<72x1024xbf16, #tpu.memory_space<vmem>>, vector<8x256xbf16>
    tpu.vector_store %arg14[%c8_135, %c768_136], %189 {strides = array<i32>} : memref<72x1024xbf16, #tpu.memory_space<vmem>>, vector<8x256xbf16>,
    %c15_i32_137 = arith.constant 15 : i32
    %191 = tpu.dynamic_rotate %178 by %c15_i32_137 dim 1 : vector<8x256xf32>, i32 -> vector<8x256xf32>
    %c2_138 = arith.constant 2 : index
    %c0_139 = arith.constant 0 : index
    %192 = vector.load %arg9[%c2_138, %c0_139] : memref<9x256xf32, #tpu.memory_space<vmem>>, vector<1x256xf32>
    %193 = vector.broadcast %192 : vector<1x256xf32> to vector<8x256xf32>
    %194 = arith.mulf %191, %193 : vector<8x256xf32>
    %195 = arith.truncf %194 : vector<8x256xf32> to vector<8x256xbf16>
    %c16_140 = arith.constant 16 : index
    %c768_141 = arith.constant 768 : index
    %196 = vector.load %arg14[%c16_140, %c768_141] : memref<72x1024xbf16, #tpu.memory_space<vmem>>, vector<8x256xbf16>
    tpu.vector_store %arg14[%c16_140, %c768_141], %195 {strides = array<i32>} : memref<72x1024xbf16, #tpu.memory_space<vmem>>, vector<8x256xbf16>,
    %c1_i32_142 = arith.constant 1 : i32
    %197 = tpu.dynamic_rotate %178 by %c1_i32_142 dim 1 : vector<8x256xf32>, i32 -> vector<8x256xf32>
    %c3_143 = arith.constant 3 : index
    %c0_144 = arith.constant 0 : index
    %198 = vector.load %arg9[%c3_143, %c0_144] : memref<9x256xf32, #tpu.memory_space<vmem>>, vector<1x256xf32>
    %199 = vector.broadcast %198 : vector<1x256xf32> to vector<8x256xf32>
    %200 = arith.mulf %197, %199 : vector<8x256xf32>
    %201 = arith.truncf %200 : vector<8x256xf32> to vector<8x256xbf16>
    %c24_145 = arith.constant 24 : index
    %c768_146 = arith.constant 768 : index
    %202 = vector.load %arg14[%c24_145, %c768_146] : memref<72x1024xbf16, #tpu.memory_space<vmem>>, vector<8x256xbf16>
    tpu.vector_store %arg14[%c24_145, %c768_146], %201 {strides = array<i32>} : memref<72x1024xbf16, #tpu.memory_space<vmem>>, vector<8x256xbf16>,
    %c4_147 = arith.constant 4 : index
    %c0_148 = arith.constant 0 : index
    %203 = vector.load %arg9[%c4_147, %c0_148] : memref<9x256xf32, #tpu.memory_space<vmem>>, vector<1x256xf32>
    %204 = vector.broadcast %203 : vector<1x256xf32> to vector<8x256xf32>
    %205 = arith.mulf %178, %204 : vector<8x256xf32>
    %206 = arith.truncf %205 : vector<8x256xf32> to vector<8x256xbf16>
    %c32_149 = arith.constant 32 : index
    %c768_150 = arith.constant 768 : index
    %207 = vector.load %arg14[%c32_149, %c768_150] : memref<72x1024xbf16, #tpu.memory_space<vmem>>, vector<8x256xbf16>
    tpu.vector_store %arg14[%c32_149, %c768_150], %206 {strides = array<i32>} : memref<72x1024xbf16, #tpu.memory_space<vmem>>, vector<8x256xbf16>,
    %c255_i32_151 = arith.constant 255 : i32
    %208 = tpu.dynamic_rotate %178 by %c255_i32_151 dim 1 : vector<8x256xf32>, i32 -> vector<8x256xf32>
    %c5_152 = arith.constant 5 : index
    %c0_153 = arith.constant 0 : index
    %209 = vector.load %arg9[%c5_152, %c0_153] : memref<9x256xf32, #tpu.memory_space<vmem>>, vector<1x256xf32>
    %210 = vector.broadcast %209 : vector<1x256xf32> to vector<8x256xf32>
    %211 = arith.mulf %208, %210 : vector<8x256xf32>
    %212 = arith.truncf %211 : vector<8x256xf32> to vector<8x256xbf16>
    %c40_154 = arith.constant 40 : index
    %c768_155 = arith.constant 768 : index
    %213 = vector.load %arg14[%c40_154, %c768_155] : memref<72x1024xbf16, #tpu.memory_space<vmem>>, vector<8x256xbf16>
    tpu.vector_store %arg14[%c40_154, %c768_155], %212 {strides = array<i32>} : memref<72x1024xbf16, #tpu.memory_space<vmem>>, vector<8x256xbf16>,
    %c241_i32_156 = arith.constant 241 : i32
    %214 = tpu.dynamic_rotate %178 by %c241_i32_156 dim 1 : vector<8x256xf32>, i32 -> vector<8x256xf32>
    %c6_157 = arith.constant 6 : index
    %c0_158 = arith.constant 0 : index
    %215 = vector.load %arg9[%c6_157, %c0_158] : memref<9x256xf32, #tpu.memory_space<vmem>>, vector<1x256xf32>
    %216 = vector.broadcast %215 : vector<1x256xf32> to vector<8x256xf32>
    %217 = arith.mulf %214, %216 : vector<8x256xf32>
    %218 = arith.truncf %217 : vector<8x256xf32> to vector<8x256xbf16>
    %c48_159 = arith.constant 48 : index
    %c768_160 = arith.constant 768 : index
    %219 = vector.load %arg14[%c48_159, %c768_160] : memref<72x1024xbf16, #tpu.memory_space<vmem>>, vector<8x256xbf16>
    tpu.vector_store %arg14[%c48_159, %c768_160], %218 {strides = array<i32>} : memref<72x1024xbf16, #tpu.memory_space<vmem>>, vector<8x256xbf16>,
    %c240_i32_161 = arith.constant 240 : i32
    %220 = tpu.dynamic_rotate %178 by %c240_i32_161 dim 1 : vector<8x256xf32>, i32 -> vector<8x256xf32>
    %c7_162 = arith.constant 7 : index
    %c0_163 = arith.constant 0 : index
    %221 = vector.load %arg9[%c7_162, %c0_163] : memref<9x256xf32, #tpu.memory_space<vmem>>, vector<1x256xf32>
    %222 = vector.broadcast %221 : vector<1x256xf32> to vector<8x256xf32>
    %223 = arith.mulf %220, %222 : vector<8x256xf32>
    %224 = arith.truncf %223 : vector<8x256xf32> to vector<8x256xbf16>
    %c56_164 = arith.constant 56 : index
    %c768_165 = arith.constant 768 : index
    %225 = vector.load %arg14[%c56_164, %c768_165] : memref<72x1024xbf16, #tpu.memory_space<vmem>>, vector<8x256xbf16>
    tpu.vector_store %arg14[%c56_164, %c768_165], %224 {strides = array<i32>} : memref<72x1024xbf16, #tpu.memory_space<vmem>>, vector<8x256xbf16>,
    %c239_i32_166 = arith.constant 239 : i32
    %226 = tpu.dynamic_rotate %178 by %c239_i32_166 dim 1 : vector<8x256xf32>, i32 -> vector<8x256xf32>
    %c8_167 = arith.constant 8 : index
    %c0_168 = arith.constant 0 : index
    %227 = vector.load %arg9[%c8_167, %c0_168] : memref<9x256xf32, #tpu.memory_space<vmem>>, vector<1x256xf32>
    %228 = vector.broadcast %227 : vector<1x256xf32> to vector<8x256xf32>
    %229 = arith.mulf %226, %228 : vector<8x256xf32>
    %230 = arith.truncf %229 : vector<8x256xf32> to vector<8x256xbf16>
    %c64_169 = arith.constant 64 : index
    %c768_170 = arith.constant 768 : index
    %231 = vector.load %arg14[%c64_169, %c768_170] : memref<72x1024xbf16, #tpu.memory_space<vmem>>, vector<8x256xbf16>
    tpu.vector_store %arg14[%c64_169, %c768_170], %230 {strides = array<i32>} : memref<72x1024xbf16, #tpu.memory_space<vmem>>, vector<8x256xbf16>,
    %c0_171 = arith.constant 0 : index
    %c0_172 = arith.constant 0 : index
    %232 = vector.load %arg4[%c0_171, %c0_172] : memref<16x72xbf16, #tpu.memory_space<vmem>>, vector<16x72xbf16>
    %c0_173 = arith.constant 0 : index
    %c0_174 = arith.constant 0 : index
    %233 = vector.load %arg14[%c0_173, %c0_174] : memref<72x1024xbf16, #tpu.memory_space<vmem>>, vector<72x1024xbf16>
    %cst_175 = arith.constant dense<0.000000e+00> : vector<16x1024xf32>
    %234 = tpu.matmul %232, %233, %cst_175 {dimension_numbers = #tpu.dot_dimension_numbers<[1], [0], [0], [1], [0, 0, 1, 1], [], []>} : vector<16x72xbf16>, vector<72x1024xbf16>, vector<16x1024xf32> -> vector<16x1024xf32>
    %c0_176 = arith.constant 0 : index
    %c0_177 = arith.constant 0 : index
    %235 = vector.load %arg15[%c0_176, %c0_177] : memref<16x1024xf32, #tpu.memory_space<vmem>>, vector<16x1024xf32>
    tpu.vector_store %arg15[%c0_176, %c0_177], %234 {strides = array<i32>} : memref<16x1024xf32, #tpu.memory_space<vmem>>, vector<16x1024xf32>,
    %c0_178 = arith.constant 0 : index
    %c0_179 = arith.constant 0 : index
    %236 = vector.load %arg15[%c0_178, %c0_179] : memref<16x1024xf32, #tpu.memory_space<vmem>>, vector<16x1024xf32>
    %c0_180 = arith.constant 0 : index
    %c0_181 = arith.constant 0 : index
    %237 = vector.load %arg5[%c0_180, %c0_181] : memref<16x1xf32, #tpu.memory_space<vmem>>, vector<16x1xf32>
    %238 = vector.broadcast %237 : vector<16x1xf32> to vector<16x1024xf32>
    %239 = arith.mulf %236, %238 : vector<16x1024xf32>
    %c0_182 = arith.constant 0 : index
    %c0_183 = arith.constant 0 : index
    %240 = vector.load %arg6[%c0_182, %c0_183] : memref<16x1xf32, #tpu.memory_space<vmem>>, vector<16x1xf32>
    %241 = vector.broadcast %240 : vector<16x1xf32> to vector<16x1024xf32>
    %242 = arith.addf %239, %241 : vector<16x1024xf32>
    %cst_184 = arith.constant 0.000000e+00 : f32
    %243 = vector.broadcast %cst_184 : f32 to vector<16x1024xf32>
    %244 = arith.maximumf %242, %243 : vector<16x1024xf32>
    %c0_185 = arith.constant 0 : index
    %c0_186 = arith.constant 0 : index
    %245 = vector.load %arg16[%c0_185, %c0_186] : memref<16x1024xf32, #tpu.memory_space<vmem>>, vector<16x1024xf32>
    tpu.vector_store %arg16[%c0_185, %c0_186], %244 {strides = array<i32>} : memref<16x1024xf32, #tpu.memory_space<vmem>>, vector<16x1024xf32>,
    %c0_187 = arith.constant 0 : index
    %c0_188 = arith.constant 0 : index
    %246 = vector.load %arg16[%c0_187, %c0_188] : memref<16x1024xf32, #tpu.memory_space<vmem>>, vector<16x1024xf32>
    %c17_i32_189 = arith.constant 17 : i32
    %247 = tpu.dynamic_rotate %246 by %c17_i32_189 dim 1 : vector<16x1024xf32>, i32 -> vector<16x1024xf32>
    %c0_190 = arith.constant 0 : index
    %c0_191 = arith.constant 0 : index
    %248 = vector.load %arg10[%c0_190, %c0_191] : memref<9x1024xf32, #tpu.memory_space<vmem>>, vector<1x1024xf32>
    %249 = vector.broadcast %248 : vector<1x1024xf32> to vector<16x1024xf32>
    %250 = arith.mulf %247, %249 : vector<16x1024xf32>
    %251 = arith.truncf %250 : vector<16x1024xf32> to vector<16x1024xbf16>
    %c0_192 = arith.constant 0 : index
    %c0_193 = arith.constant 0 : index
    %252 = vector.load %arg17[%c0_192, %c0_193] : memref<144x1024xbf16, #tpu.memory_space<vmem>>, vector<16x1024xbf16>
    tpu.vector_store %arg17[%c0_192, %c0_193], %251 {strides = array<i32>} : memref<144x1024xbf16, #tpu.memory_space<vmem>>, vector<16x1024xbf16>,
    %c0_194 = arith.constant 0 : index
    %c0_195 = arith.constant 0 : index
    %253 = vector.load %arg16[%c0_194, %c0_195] : memref<16x1024xf32, #tpu.memory_space<vmem>>, vector<16x1024xf32>
    %c16_i32_196 = arith.constant 16 : i32
    %254 = tpu.dynamic_rotate %253 by %c16_i32_196 dim 1 : vector<16x1024xf32>, i32 -> vector<16x1024xf32>
    %c1_197 = arith.constant 1 : index
    %c0_198 = arith.constant 0 : index
    %255 = vector.load %arg10[%c1_197, %c0_198] : memref<9x1024xf32, #tpu.memory_space<vmem>>, vector<1x1024xf32>
    %256 = vector.broadcast %255 : vector<1x1024xf32> to vector<16x1024xf32>
    %257 = arith.mulf %254, %256 : vector<16x1024xf32>
    %258 = arith.truncf %257 : vector<16x1024xf32> to vector<16x1024xbf16>
    %c16_199 = arith.constant 16 : index
    %c0_200 = arith.constant 0 : index
    %259 = vector.load %arg17[%c16_199, %c0_200] : memref<144x1024xbf16, #tpu.memory_space<vmem>>, vector<16x1024xbf16>
    tpu.vector_store %arg17[%c16_199, %c0_200], %258 {strides = array<i32>} : memref<144x1024xbf16, #tpu.memory_space<vmem>>, vector<16x1024xbf16>,
    %c0_201 = arith.constant 0 : index
    %c0_202 = arith.constant 0 : index
    %260 = vector.load %arg16[%c0_201, %c0_202] : memref<16x1024xf32, #tpu.memory_space<vmem>>, vector<16x1024xf32>
    %c15_i32_203 = arith.constant 15 : i32
    %261 = tpu.dynamic_rotate %260 by %c15_i32_203 dim 1 : vector<16x1024xf32>, i32 -> vector<16x1024xf32>
    %c2_204 = arith.constant 2 : index
    %c0_205 = arith.constant 0 : index
    %262 = vector.load %arg10[%c2_204, %c0_205] : memref<9x1024xf32, #tpu.memory_space<vmem>>, vector<1x1024xf32>
    %263 = vector.broadcast %262 : vector<1x1024xf32> to vector<16x1024xf32>
    %264 = arith.mulf %261, %263 : vector<16x1024xf32>
    %265 = arith.truncf %264 : vector<16x1024xf32> to vector<16x1024xbf16>
    %c32_206 = arith.constant 32 : index
    %c0_207 = arith.constant 0 : index
    %266 = vector.load %arg17[%c32_206, %c0_207] : memref<144x1024xbf16, #tpu.memory_space<vmem>>, vector<16x1024xbf16>
    tpu.vector_store %arg17[%c32_206, %c0_207], %265 {strides = array<i32>} : memref<144x1024xbf16, #tpu.memory_space<vmem>>, vector<16x1024xbf16>,
    %c0_208 = arith.constant 0 : index
    %c0_209 = arith.constant 0 : index
    %267 = vector.load %arg16[%c0_208, %c0_209] : memref<16x1024xf32, #tpu.memory_space<vmem>>, vector<16x1024xf32>
    %c1_i32_210 = arith.constant 1 : i32
    %268 = tpu.dynamic_rotate %267 by %c1_i32_210 dim 1 : vector<16x1024xf32>, i32 -> vector<16x1024xf32>
    %c3_211 = arith.constant 3 : index
    %c0_212 = arith.constant 0 : index
    %269 = vector.load %arg10[%c3_211, %c0_212] : memref<9x1024xf32, #tpu.memory_space<vmem>>, vector<1x1024xf32>
    %270 = vector.broadcast %269 : vector<1x1024xf32> to vector<16x1024xf32>
    %271 = arith.mulf %268, %270 : vector<16x1024xf32>
    %272 = arith.truncf %271 : vector<16x1024xf32> to vector<16x1024xbf16>
    %c48_213 = arith.constant 48 : index
    %c0_214 = arith.constant 0 : index
    %273 = vector.load %arg17[%c48_213, %c0_214] : memref<144x1024xbf16, #tpu.memory_space<vmem>>, vector<16x1024xbf16>
    tpu.vector_store %arg17[%c48_213, %c0_214], %272 {strides = array<i32>} : memref<144x1024xbf16, #tpu.memory_space<vmem>>, vector<16x1024xbf16>,
    %c0_215 = arith.constant 0 : index
    %c0_216 = arith.constant 0 : index
    %274 = vector.load %arg16[%c0_215, %c0_216] : memref<16x1024xf32, #tpu.memory_space<vmem>>, vector<16x1024xf32>
    %c4_217 = arith.constant 4 : index
    %c0_218 = arith.constant 0 : index
    %275 = vector.load %arg10[%c4_217, %c0_218] : memref<9x1024xf32, #tpu.memory_space<vmem>>, vector<1x1024xf32>
    %276 = vector.broadcast %275 : vector<1x1024xf32> to vector<16x1024xf32>
    %277 = arith.mulf %274, %276 : vector<16x1024xf32>
    %278 = arith.truncf %277 : vector<16x1024xf32> to vector<16x1024xbf16>
    %c64_219 = arith.constant 64 : index
    %c0_220 = arith.constant 0 : index
    %279 = vector.load %arg17[%c64_219, %c0_220] : memref<144x1024xbf16, #tpu.memory_space<vmem>>, vector<16x1024xbf16>
    tpu.vector_store %arg17[%c64_219, %c0_220], %278 {strides = array<i32>} : memref<144x1024xbf16, #tpu.memory_space<vmem>>, vector<16x1024xbf16>,
    %c0_221 = arith.constant 0 : index
    %c0_222 = arith.constant 0 : index
    %280 = vector.load %arg16[%c0_221, %c0_222] : memref<16x1024xf32, #tpu.memory_space<vmem>>, vector<16x1024xf32>
    %c1023_i32 = arith.constant 1023 : i32
    %281 = tpu.dynamic_rotate %280 by %c1023_i32 dim 1 : vector<16x1024xf32>, i32 -> vector<16x1024xf32>
    %c5_223 = arith.constant 5 : index
    %c0_224 = arith.constant 0 : index
    %282 = vector.load %arg10[%c5_223, %c0_224] : memref<9x1024xf32, #tpu.memory_space<vmem>>, vector<1x1024xf32>
    %283 = vector.broadcast %282 : vector<1x1024xf32> to vector<16x1024xf32>
    %284 = arith.mulf %281, %283 : vector<16x1024xf32>
    %285 = arith.truncf %284 : vector<16x1024xf32> to vector<16x1024xbf16>
    %c80 = arith.constant 80 : index
    %c0_225 = arith.constant 0 : index
    %286 = vector.load %arg17[%c80, %c0_225] : memref<144x1024xbf16, #tpu.memory_space<vmem>>, vector<16x1024xbf16>
    tpu.vector_store %arg17[%c80, %c0_225], %285 {strides = array<i32>} : memref<144x1024xbf16, #tpu.memory_space<vmem>>, vector<16x1024xbf16>,
    %c0_226 = arith.constant 0 : index
    %c0_227 = arith.constant 0 : index
    %287 = vector.load %arg16[%c0_226, %c0_227] : memref<16x1024xf32, #tpu.memory_space<vmem>>, vector<16x1024xf32>
    %c1009_i32 = arith.constant 1009 : i32
    %288 = tpu.dynamic_rotate %287 by %c1009_i32 dim 1 : vector<16x1024xf32>, i32 -> vector<16x1024xf32>
    %c6_228 = arith.constant 6 : index
    %c0_229 = arith.constant 0 : index
    %289 = vector.load %arg10[%c6_228, %c0_229] : memref<9x1024xf32, #tpu.memory_space<vmem>>, vector<1x1024xf32>
    %290 = vector.broadcast %289 : vector<1x1024xf32> to vector<16x1024xf32>
    %291 = arith.mulf %288, %290 : vector<16x1024xf32>
    %292 = arith.truncf %291 : vector<16x1024xf32> to vector<16x1024xbf16>
    %c96 = arith.constant 96 : index
    %c0_230 = arith.constant 0 : index
    %293 = vector.load %arg17[%c96, %c0_230] : memref<144x1024xbf16, #tpu.memory_space<vmem>>, vector<16x1024xbf16>
    tpu.vector_store %arg17[%c96, %c0_230], %292 {strides = array<i32>} : memref<144x1024xbf16, #tpu.memory_space<vmem>>, vector<16x1024xbf16>,
    %c0_231 = arith.constant 0 : index
    %c0_232 = arith.constant 0 : index
    %294 = vector.load %arg16[%c0_231, %c0_232] : memref<16x1024xf32, #tpu.memory_space<vmem>>, vector<16x1024xf32>
    %c1008_i32 = arith.constant 1008 : i32
    %295 = tpu.dynamic_rotate %294 by %c1008_i32 dim 1 : vector<16x1024xf32>, i32 -> vector<16x1024xf32>
    %c7_233 = arith.constant 7 : index
    %c0_234 = arith.constant 0 : index
    %296 = vector.load %arg10[%c7_233, %c0_234] : memref<9x1024xf32, #tpu.memory_space<vmem>>, vector<1x1024xf32>
    %297 = vector.broadcast %296 : vector<1x1024xf32> to vector<16x1024xf32>
    %298 = arith.mulf %295, %297 : vector<16x1024xf32>
    %299 = arith.truncf %298 : vector<16x1024xf32> to vector<16x1024xbf16>
    %c112 = arith.constant 112 : index
    %c0_235 = arith.constant 0 : index
    %300 = vector.load %arg17[%c112, %c0_235] : memref<144x1024xbf16, #tpu.memory_space<vmem>>, vector<16x1024xbf16>
    tpu.vector_store %arg17[%c112, %c0_235], %299 {strides = array<i32>} : memref<144x1024xbf16, #tpu.memory_space<vmem>>, vector<16x1024xbf16>,
    %c0_236 = arith.constant 0 : index
    %c0_237 = arith.constant 0 : index
    %301 = vector.load %arg16[%c0_236, %c0_237] : memref<16x1024xf32, #tpu.memory_space<vmem>>, vector<16x1024xf32>
    %c1007_i32 = arith.constant 1007 : i32
    %302 = tpu.dynamic_rotate %301 by %c1007_i32 dim 1 : vector<16x1024xf32>, i32 -> vector<16x1024xf32>
    %c8_238 = arith.constant 8 : index
    %c0_239 = arith.constant 0 : index
    %303 = vector.load %arg10[%c8_238, %c0_239] : memref<9x1024xf32, #tpu.memory_space<vmem>>, vector<1x1024xf32>
    %304 = vector.broadcast %303 : vector<1x1024xf32> to vector<16x1024xf32>
    %305 = arith.mulf %302, %304 : vector<16x1024xf32>
    %306 = arith.truncf %305 : vector<16x1024xf32> to vector<16x1024xbf16>
    %c128 = arith.constant 128 : index
    %c0_240 = arith.constant 0 : index
    %307 = vector.load %arg17[%c128, %c0_240] : memref<144x1024xbf16, #tpu.memory_space<vmem>>, vector<16x1024xbf16>
    tpu.vector_store %arg17[%c128, %c0_240], %306 {strides = array<i32>} : memref<144x1024xbf16, #tpu.memory_space<vmem>>, vector<16x1024xbf16>,
    %c0_241 = arith.constant 0 : index
    %c0_242 = arith.constant 0 : index
    %308 = vector.load %arg7[%c0_241, %c0_242] : memref<16x144xbf16, #tpu.memory_space<vmem>>, vector<16x144xbf16>
    %c0_243 = arith.constant 0 : index
    %c0_244 = arith.constant 0 : index
    %309 = vector.load %arg17[%c0_243, %c0_244] : memref<144x1024xbf16, #tpu.memory_space<vmem>>, vector<144x1024xbf16>
    %cst_245 = arith.constant dense<0.000000e+00> : vector<16x1024xf32>
    %310 = tpu.matmul %308, %309, %cst_245 {dimension_numbers = #tpu.dot_dimension_numbers<[1], [0], [0], [1], [0, 0, 1, 1], [], []>} : vector<16x144xbf16>, vector<144x1024xbf16>, vector<16x1024xf32> -> vector<16x1024xf32>
    %c0_246 = arith.constant 0 : index
    %c0_247 = arith.constant 0 : index
    %311 = vector.load %arg15[%c0_246, %c0_247] : memref<16x1024xf32, #tpu.memory_space<vmem>>, vector<16x1024xf32>
    tpu.vector_store %arg15[%c0_246, %c0_247], %310 {strides = array<i32>} : memref<16x1024xf32, #tpu.memory_space<vmem>>, vector<16x1024xf32>,
    %c0_248 = arith.constant 0 : index
    %c0_249 = arith.constant 0 : index
    %c0_250 = arith.constant 0 : index
    %312 = vector.load %arg13[%c0_248, %c0_249, %c0_250] : memref<4x8x256xf32, #tpu.memory_space<vmem>>, vector<1x8x256xf32>
    %313 = vector.shape_cast %312 : vector<1x8x256xf32> to vector<8x256xf32>
    %c0_251 = arith.constant 0 : index
    %c0_252 = arith.constant 0 : index
    %314 = vector.load %arg8[%c0_251, %c0_252] : memref<16x8xbf16, #tpu.memory_space<vmem>>, vector<16x8xbf16>
    %315 = arith.truncf %313 : vector<8x256xf32> to vector<8x256xbf16>
    %cst_253 = arith.constant dense<0.000000e+00> : vector<16x256xf32>
    %316 = tpu.matmul %314, %315, %cst_253 {dimension_numbers = #tpu.dot_dimension_numbers<[1], [0], [0], [1], [0, 0, 1, 1], [], []>} : vector<16x8xbf16>, vector<8x256xbf16>, vector<16x256xf32> -> vector<16x256xf32>
    %c0_254 = arith.constant 0 : index
    %c0_255 = arith.constant 0 : index
    %317 = vector.load %arg15[%c0_254, %c0_255] : memref<16x1024xf32, #tpu.memory_space<vmem>>, vector<16x256xf32>
    %318 = arith.addf %317, %316 : vector<16x256xf32>
    %c0_256 = arith.constant 0 : index
    %c0_257 = arith.constant 0 : index
    %c0_258 = arith.constant 0 : index
    %319 = vector.load %arg12[%c0_256, %c0_257, %c0_258] : memref<4x16x256xf32, #tpu.memory_space<vmem>>, vector<1x16x256xf32>
    %320 = vector.shape_cast %319 : vector<1x16x256xf32> to vector<16x256xf32>
    %321 = vector.shape_cast %318 : vector<16x256xf32> to vector<1x16x256xf32>
    tpu.vector_store %arg12[%c0_256, %c0_257, %c0_258], %321 {strides = array<i32>} : memref<4x16x256xf32, #tpu.memory_space<vmem>>, vector<1x16x256xf32>,
    %c1_259 = arith.constant 1 : index
    %c0_260 = arith.constant 0 : index
    %c0_261 = arith.constant 0 : index
    %322 = vector.load %arg13[%c1_259, %c0_260, %c0_261] : memref<4x8x256xf32, #tpu.memory_space<vmem>>, vector<1x8x256xf32>
    %323 = vector.shape_cast %322 : vector<1x8x256xf32> to vector<8x256xf32>
    %c0_262 = arith.constant 0 : index
    %c0_263 = arith.constant 0 : index
    %324 = vector.load %arg8[%c0_262, %c0_263] : memref<16x8xbf16, #tpu.memory_space<vmem>>, vector<16x8xbf16>
    %325 = arith.truncf %323 : vector<8x256xf32> to vector<8x256xbf16>
    %cst_264 = arith.constant dense<0.000000e+00> : vector<16x256xf32>
    %326 = tpu.matmul %324, %325, %cst_264 {dimension_numbers = #tpu.dot_dimension_numbers<[1], [0], [0], [1], [0, 0, 1, 1], [], []>} : vector<16x8xbf16>, vector<8x256xbf16>, vector<16x256xf32> -> vector<16x256xf32>
    %c0_265 = arith.constant 0 : index
    %c256_266 = arith.constant 256 : index
    %327 = vector.load %arg15[%c0_265, %c256_266] : memref<16x1024xf32, #tpu.memory_space<vmem>>, vector<16x256xf32>
    %328 = arith.addf %327, %326 : vector<16x256xf32>
    %c1_267 = arith.constant 1 : index
    %c0_268 = arith.constant 0 : index
    %c0_269 = arith.constant 0 : index
    %329 = vector.load %arg12[%c1_267, %c0_268, %c0_269] : memref<4x16x256xf32, #tpu.memory_space<vmem>>, vector<1x16x256xf32>
    %330 = vector.shape_cast %329 : vector<1x16x256xf32> to vector<16x256xf32>
    %331 = vector.shape_cast %328 : vector<16x256xf32> to vector<1x16x256xf32>
    tpu.vector_store %arg12[%c1_267, %c0_268, %c0_269], %331 {strides = array<i32>} : memref<4x16x256xf32, #tpu.memory_space<vmem>>, vector<1x16x256xf32>,
    %c2_270 = arith.constant 2 : index
    %c0_271 = arith.constant 0 : index
    %c0_272 = arith.constant 0 : index
    %332 = vector.load %arg13[%c2_270, %c0_271, %c0_272] : memref<4x8x256xf32, #tpu.memory_space<vmem>>, vector<1x8x256xf32>
    %333 = vector.shape_cast %332 : vector<1x8x256xf32> to vector<8x256xf32>
    %c0_273 = arith.constant 0 : index
    %c0_274 = arith.constant 0 : index
    %334 = vector.load %arg8[%c0_273, %c0_274] : memref<16x8xbf16, #tpu.memory_space<vmem>>, vector<16x8xbf16>
    %335 = arith.truncf %333 : vector<8x256xf32> to vector<8x256xbf16>
    %cst_275 = arith.constant dense<0.000000e+00> : vector<16x256xf32>
    %336 = tpu.matmul %334, %335, %cst_275 {dimension_numbers = #tpu.dot_dimension_numbers<[1], [0], [0], [1], [0, 0, 1, 1], [], []>} : vector<16x8xbf16>, vector<8x256xbf16>, vector<16x256xf32> -> vector<16x256xf32>
    %c0_276 = arith.constant 0 : index
    %c512_277 = arith.constant 512 : index
    %337 = vector.load %arg15[%c0_276, %c512_277] : memref<16x1024xf32, #tpu.memory_space<vmem>>, vector<16x256xf32>
    %338 = arith.addf %337, %336 : vector<16x256xf32>
    %c2_278 = arith.constant 2 : index
    %c0_279 = arith.constant 0 : index
    %c0_280 = arith.constant 0 : index
    %339 = vector.load %arg12[%c2_278, %c0_279, %c0_280] : memref<4x16x256xf32, #tpu.memory_space<vmem>>, vector<1x16x256xf32>
    %340 = vector.shape_cast %339 : vector<1x16x256xf32> to vector<16x256xf32>
    %341 = vector.shape_cast %338 : vector<16x256xf32> to vector<1x16x256xf32>
    tpu.vector_store %arg12[%c2_278, %c0_279, %c0_280], %341 {strides = array<i32>} : memref<4x16x256xf32, #tpu.memory_space<vmem>>, vector<1x16x256xf32>,
    %c3_281 = arith.constant 3 : index
    %c0_282 = arith.constant 0 : index
    %c0_283 = arith.constant 0 : index
    %342 = vector.load %arg13[%c3_281, %c0_282, %c0_283] : memref<4x8x256xf32, #tpu.memory_space<vmem>>, vector<1x8x256xf32>
    %343 = vector.shape_cast %342 : vector<1x8x256xf32> to vector<8x256xf32>
    %c0_284 = arith.constant 0 : index
    %c0_285 = arith.constant 0 : index
    %344 = vector.load %arg8[%c0_284, %c0_285] : memref<16x8xbf16, #tpu.memory_space<vmem>>, vector<16x8xbf16>
    %345 = arith.truncf %343 : vector<8x256xf32> to vector<8x256xbf16>
    %cst_286 = arith.constant dense<0.000000e+00> : vector<16x256xf32>
    %346 = tpu.matmul %344, %345, %cst_286 {dimension_numbers = #tpu.dot_dimension_numbers<[1], [0], [0], [1], [0, 0, 1, 1], [], []>} : vector<16x8xbf16>, vector<8x256xbf16>, vector<16x256xf32> -> vector<16x256xf32>
    %c0_287 = arith.constant 0 : index
    %c768_288 = arith.constant 768 : index
    %347 = vector.load %arg15[%c0_287, %c768_288] : memref<16x1024xf32, #tpu.memory_space<vmem>>, vector<16x256xf32>
    %348 = arith.addf %347, %346 : vector<16x256xf32>
    %c3_289 = arith.constant 3 : index
    %c0_290 = arith.constant 0 : index
    %c0_291 = arith.constant 0 : index
    %349 = vector.load %arg12[%c3_289, %c0_290, %c0_291] : memref<4x16x256xf32, #tpu.memory_space<vmem>>, vector<1x16x256xf32>
    %350 = vector.shape_cast %349 : vector<1x16x256xf32> to vector<16x256xf32>
    %351 = vector.shape_cast %348 : vector<16x256xf32> to vector<1x16x256xf32>
    tpu.vector_store %arg12[%c3_289, %c0_290, %c0_291], %351 {strides = array<i32>} : memref<4x16x256xf32, #tpu.memory_space<vmem>>, vector<1x16x256xf32>,
    return
  }
  func.func @transform_0(%arg0: i32) -> (i32, i32, i32) {
    %c0_i32 = arith.constant 0 : i32
    %c0_i32_0 = arith.constant 0 : i32
    %c0_i32_1 = arith.constant 0 : i32
    return %arg0, %c0_i32, %c0_i32_0 : i32, i32, i32
  }
  func.func @transform_1(%arg0: i32) -> (i32, i32) {
    %c0_i32 = arith.constant 0 : i32
    %c0_i32_0 = arith.constant 0 : i32
    %c0_i32_1 = arith.constant 0 : i32
    return %c0_i32, %c0_i32_0 : i32, i32
  }
  func.func @transform_2(%arg0: i32) -> (i32, i32) {
    %c0_i32 = arith.constant 0 : i32
    %c0_i32_0 = arith.constant 0 : i32
    %c0_i32_1 = arith.constant 0 : i32
    return %c0_i32, %c0_i32_0 : i32, i32
  }
  func.func @transform_3(%arg0: i32) -> (i32, i32) {
    %c0_i32 = arith.constant 0 : i32
    %c0_i32_0 = arith.constant 0 : i32
    %c0_i32_1 = arith.constant 0 : i32
    return %c0_i32, %c0_i32_0 : i32, i32
  }
  func.func @transform_4(%arg0: i32) -> (i32, i32) {
    %c0_i32 = arith.constant 0 : i32
    %c0_i32_0 = arith.constant 0 : i32
    %c0_i32_1 = arith.constant 0 : i32
    return %c0_i32, %c0_i32_0 : i32, i32
  }
  func.func @transform_5(%arg0: i32) -> (i32, i32) {
    %c0_i32 = arith.constant 0 : i32
    %c0_i32_0 = arith.constant 0 : i32
    %c0_i32_1 = arith.constant 0 : i32
    return %c0_i32, %c0_i32_0 : i32, i32
  }
  func.func @transform_6(%arg0: i32) -> (i32, i32) {
    %c0_i32 = arith.constant 0 : i32
    %c0_i32_0 = arith.constant 0 : i32
    %c0_i32_1 = arith.constant 0 : i32
    return %c0_i32, %c0_i32_0 : i32, i32
  }
  func.func @transform_7(%arg0: i32) -> (i32, i32) {
    %c0_i32 = arith.constant 0 : i32
    %c0_i32_0 = arith.constant 0 : i32
    %c0_i32_1 = arith.constant 0 : i32
    return %c0_i32, %c0_i32_0 : i32, i32
  }
  func.func @transform_8(%arg0: i32) -> (i32, i32) {
    %c0_i32 = arith.constant 0 : i32
    %c0_i32_0 = arith.constant 0 : i32
    %c0_i32_1 = arith.constant 0 : i32
    return %c0_i32, %c0_i32_0 : i32, i32
  }
  func.func @transform_9(%arg0: i32) -> (i32, i32) {
    %c0_i32 = arith.constant 0 : i32
    %c0_i32_0 = arith.constant 0 : i32
    %c0_i32_1 = arith.constant 0 : i32
    return %c0_i32, %c0_i32_0 : i32, i32
  }
  func.func @transform_10(%arg0: i32) -> (i32, i32) {
    %c0_i32 = arith.constant 0 : i32
    %c0_i32_0 = arith.constant 0 : i32
    %c0_i32_1 = arith.constant 0 : i32
    return %c0_i32, %c0_i32_0 : i32, i32
  }
  func.func @transform_11(%arg0: i32) -> (i32, i32, i32) {
    %c0_i32 = arith.constant 0 : i32
    %c0_i32_0 = arith.constant 0 : i32
    %c0_i32_1 = arith.constant 0 : i32
    return %arg0, %c0_i32, %c0_i32_0 : i32, i32, i32
  }
}

</mosaic_0001>

<llo_original>
// kernel: tpu_custom_call.1
$region0: #{tpu_custom_call.1}
  #allocation0 [shape = 'u32[]', space=smem, size = 0x4, offset = 0x4, fixed_abs, tag = 'smem constant byte address 0x4 - core index']
  #allocation1 [shape = 'u32[144,128]{1,0:T(1,128)}', space=vmem, size = 0x12000, scoped, tag = 'internal scratch']
  #allocation2 [shape = 'f32[4,8,256]{2,1,0:T(8,128)}', space=vmem, size = 0x8000, scoped, tag = 'scratch operand']
  #allocation3 [shape = 'bf16[72,1024]{1,0:T(8,128)(2,1)}', space=vmem, size = 0x24000, scoped, tag = 'scratch operand']
  #allocation4 [shape = 'f32[16,1024]{1,0:T(8,128)}', space=vmem, size = 0x10000, scoped, tag = 'scratch operand']
  #allocation5 [shape = 'f32[16,1024]{1,0:T(8,128)}', space=vmem, size = 0x10000, scoped, tag = 'scratch operand']
  #allocation6 [shape = 'bf16[144,1024]{1,0:T(8,128)(2,1)}', space=vmem, size = 0x48000, scoped, tag = 'scratch operand']
  %s0 = inlined_call_operand.hbm [shape: f32[8,8,256], index: 0, kind: input, shape index: {}]
  %s1 = inlined_call_operand.vmem [shape: f32[8,1], index: 1, kind: input, shape index: {}]
  %s2 = inlined_call_operand.vmem [shape: f32[8,1], index: 2, kind: input, shape index: {}]
  %s3 = inlined_call_operand.vmem [shape: bf16[16,72], index: 3, kind: input, shape index: {}]
  %s4 = inlined_call_operand.vmem [shape: f32[16,1], index: 4, kind: input, shape index: {}]
  %s5 = inlined_call_operand.vmem [shape: f32[16,1], index: 5, kind: input, shape index: {}]
  %s6 = inlined_call_operand.vmem [shape: bf16[16,144], index: 6, kind: input, shape index: {}]
  %s7 = inlined_call_operand.vmem [shape: bf16[16,8], index: 7, kind: input, shape index: {}]
  %s8 = inlined_call_operand.vmem [shape: f32[9,256], index: 8, kind: input, shape index: {}]
  %s9 = inlined_call_operand.hbm [shape: f32[9,1024], index: 9, kind: input, shape index: {}]
  %s10 = inlined_call_operand.vmem [shape: f32[8,128], index: 10, kind: input, shape index: {}]
  %s11 = inlined_call_operand.hbm [shape: f32[8,16,256], index: 11, kind: output, shape index: {}]
  %s12 = sld [smem:[#allocation0]]
  $region85: #{tpu_custom_call.1} parent=0
    _
  %s14 = ssub.s32 1, %s12
  %s15 = scalar_select 0, %s14, %s12
  $region1: #{tpu_custom_call.1} parent=0
    #allocation7 [shape = 'u8[65536]{0}', space=vmem, size = 0x10000, scoped, tag = 'input window, operand 0']
    #allocation8 [shape = 's32[2]{0}', space=sflag, size = 0x8, scoped, tag = 'scoped memory for tpu_custom_call.1']
    #allocation9 [shape = 's32[2]{0}', space=sflag, size = 0x8, scoped, tag = 'scoped memory for tpu_custom_call.1']
    #allocation10 [shape = 'u8[65536]{0}', space=vmem, size = 0x10000, scoped, tag = 'input window, operand 9, single buffered']
    #allocation11 [shape = 's32[1]{0}', space=sflag, size = 0x4, scoped, tag = 'scoped memory for tpu_custom_call.1']
    #allocation12 [shape = 'u8[131072]{0}', space=vmem, size = 0x20000, scoped, tag = 'output window, operand 0']
    %16 = vsyncpa [#allocation8], 0
    %s17 = scalar_lea.sflag [#allocation8], 1
    %18 = vsyncpa %s17, 0
    %19 = vsyncpa [#allocation11], 0
    %20 = vsyncpa [#allocation9], 0
    %s21 = scalar_lea.sflag [#allocation9], 1
    %22 = vsyncpa %s21, 0
    loop: start=0, step=1, limit=4
    $region2: #{tpu_custom_call.1} parent=1 // loop_pre_header
      _
    $region3: #{tpu_custom_call.1} parent=1 // loop_header
      %s24 = sphi 0, %s28
      %p25 = scmp.ge.s32.totalorder %s24, 4
      %s34 = sphi 0, %s36
      %s37 = sphi 0, %s34
      %s38 = sphi 0, %s37
      %s54 = sphi 0, %s38
      %s58 = sphi 0, %s58
      %s60 = sphi 0, %s58
      %s61 = sphi 0, %s60
      %s75 = sphi 0, %s61
      %s79 = sphi 0, %s79
      %s81 = sphi 0, %s79
      %s82 = sphi 0, %s81
      %s96 = sphi 0, %s82
      %s100 = sphi 0, %s100
      %s102 = sphi 0, %s100
      %s103 = sphi 0, %s102
      %s117 = sphi 0, %s103
      %s121 = sphi 0, %s121
      %s123 = sphi 0, %s121
      %s124 = sphi 0, %s123
      %s138 = sphi 0, %s124
      %s142 = sphi 0, %s142
      %s144 = sphi 0, %s142
      %s145 = sphi 0, %s144
      %s159 = sphi 0, %s145
      %s163 = sphi 0, %s163
      %s165 = sphi 0, %s163
      %s166 = sphi 0, %s165
      %s180 = sphi 0, %s166
      %s184 = sphi 0, %s184
      %s186 = sphi 0, %s184
      %s187 = sphi 0, %s186
      %s201 = sphi 0, %s187
      %s205 = sphi 0, %s205
      %s207 = sphi 0, %s205
      %s208 = sphi 0, %s207
      %s222 = sphi 0, %s208
      %s226 = sphi 0, %s226
      %s228 = sphi 0, %s226
      %s229 = sphi 0, %s228
      %s243 = sphi 0, %s229
      %s247 = sphi 0, %s247
      %s249 = sphi 0, %s247
      %s250 = sphi 0, %s249
      %s264 = sphi 0, %s250
      %s270 = sphi 0, %s272
      %s273 = sphi 0, %s270
      %s274 = sphi 0, %s273
      %s290 = sphi 0, %s274
    $region4: #{tpu_custom_call.1} parent=1 // loop_header_branch
      %27 = sbr.rel (%p25) target = $region8
    $region5: #{tpu_custom_call.1} parent=1 // loop_body
      %s29 = ssub.s32 %s24, 1
      %s30 = ssub.s32 %s24, 2
      %s31 = sadd.s32 %s24, 1
      %s32 = ssub.s32 %s24, %s31
      %p33 = scmp.eq.s32.totalorder %s32, 0
      %s35 = sadd.s32 %s34, 1
      %s36 = scalar_select %p33, %s34, %s35
      %p39 = pneg %p33
      %p40 = scmp.eq.s32.totalorder %s24, 1
      %p41 = por %p39, %p40
      %p42 = scmp.ne.s32.totalorder %s34, %s37
      %p43 = scmp.eq.s32.totalorder %s24, 0
      %p44 = por %p42, %p43
      %p45 = scmp.ne.s32.totalorder %s34, %s37
      %p46 = scmp.eq.s32.totalorder %s29, 1
      %p47 = por %p45, %p46
      %p48 = scmp.ne.s32.totalorder %s37, %s38
      %p49 = scmp.eq.s32.totalorder %s29, 0
      %p50 = por %p48, %p49
      %p51 = scmp.ne.s32.totalorder %s37, %s38
      %p52 = scmp.eq.s32.totalorder %s30, 1
      %p53 = por %p51, %p52
      %p55 = scmp.ne.s32.totalorder %s38, %s54
      %p56 = scmp.eq.s32.totalorder %s30, 0
      %p57 = por %p55, %p56
      %s59 = sadd.s32 %s58, 1
      %p62 = scmp.eq.s32.totalorder %s24, 1
      %p63 = scmp.ne.s32.totalorder %s58, %s60
      %p64 = scmp.eq.s32.totalorder %s24, 0
      %p65 = por %p63, %p64
      %p66 = scmp.ne.s32.totalorder %s58, %s60
      %p67 = scmp.eq.s32.totalorder %s29, 1
      %p68 = por %p66, %p67
      %p69 = scmp.ne.s32.totalorder %s60, %s61
      %p70 = scmp.eq.s32.totalorder %s29, 0
      %p71 = por %p69, %p70
      %p72 = scmp.ne.s32.totalorder %s60, %s61
      %p73 = scmp.eq.s32.totalorder %s30, 1
      %p74 = por %p72, %p73
      %p76 = scmp.ne.s32.totalorder %s61, %s75
      %p77 = scmp.eq.s32.totalorder %s30, 0
      %p78 = por %p76, %p77
      %s80 = sadd.s32 %s79, 1
      %p83 = scmp.eq.s32.totalorder %s24, 1
      %p84 = scmp.ne.s32.totalorder %s79, %s81
      %p85 = scmp.eq.s32.totalorder %s24, 0
      %p86 = por %p84, %p85
      %p87 = scmp.ne.s32.totalorder %s79, %s81
      %p88 = scmp.eq.s32.totalorder %s29, 1
      %p89 = por %p87, %p88
      %p90 = scmp.ne.s32.totalorder %s81, %s82
      %p91 = scmp.eq.s32.totalorder %s29, 0
      %p92 = por %p90, %p91
      %p93 = scmp.ne.s32.totalorder %s81, %s82
      %p94 = scmp.eq.s32.totalorder %s30, 1
      %p95 = por %p93, %p94
      %p97 = scmp.ne.s32.totalorder %s82, %s96
      %p98 = scmp.eq.s32.totalorder %s30, 0
      %p99 = por %p97, %p98
      %s101 = sadd.s32 %s100, 1
      %p104 = scmp.eq.s32.totalorder %s24, 1
      %p105 = scmp.ne.s32.totalorder %s100, %s102
      %p106 = scmp.eq.s32.totalorder %s24, 0
      %p107 = por %p105, %p106
      %p108 = scmp.ne.s32.totalorder %s100, %s102
      %p109 = scmp.eq.s32.totalorder %s29, 1
      %p110 = por %p108, %p109
      %p111 = scmp.ne.s32.totalorder %s102, %s103
      %p112 = scmp.eq.s32.totalorder %s29, 0
      %p113 = por %p111, %p112
      %p114 = scmp.ne.s32.totalorder %s102, %s103
      %p115 = scmp.eq.s32.totalorder %s30, 1
      %p116 = por %p114, %p115
      %p118 = scmp.ne.s32.totalorder %s103, %s117
      %p119 = scmp.eq.s32.totalorder %s30, 0
      %p120 = por %p118, %p119
      %s122 = sadd.s32 %s121, 1
      %p125 = scmp.eq.s32.totalorder %s24, 1
      %p126 = scmp.ne.s32.totalorder %s121, %s123
      %p127 = scmp.eq.s32.totalorder %s24, 0
      %p128 = por %p126, %p127
      %p129 = scmp.ne.s32.totalorder %s121, %s123
      %p130 = scmp.eq.s32.totalorder %s29, 1
      %p131 = por %p129, %p130
      %p132 = scmp.ne.s32.totalorder %s123, %s124
      %p133 = scmp.eq.s32.totalorder %s29, 0
      %p134 = por %p132, %p133
      %p135 = scmp.ne.s32.totalorder %s123, %s124
      %p136 = scmp.eq.s32.totalorder %s30, 1
      %p137 = por %p135, %p136
      %p139 = scmp.ne.s32.totalorder %s124, %s138
      %p140 = scmp.eq.s32.totalorder %s30, 0
      %p141 = por %p139, %p140
      %s143 = sadd.s32 %s142, 1
      %p146 = scmp.eq.s32.totalorder %s24, 1
      %p147 = scmp.ne.s32.totalorder %s142, %s144
      %p148 = scmp.eq.s32.totalorder %s24, 0
      %p149 = por %p147, %p148
      %p150 = scmp.ne.s32.totalorder %s142, %s144
      %p151 = scmp.eq.s32.totalorder %s29, 1
      %p152 = por %p150, %p151
      %p153 = scmp.ne.s32.totalorder %s144, %s145
      %p154 = scmp.eq.s32.totalorder %s29, 0
      %p155 = por %p153, %p154
      %p156 = scmp.ne.s32.totalorder %s144, %s145
      %p157 = scmp.eq.s32.totalorder %s30, 1
      %p158 = por %p156, %p157
      %p160 = scmp.ne.s32.totalorder %s145, %s159
      %p161 = scmp.eq.s32.totalorder %s30, 0
      %p162 = por %p160, %p161
      %s164 = sadd.s32 %s163, 1
      %p167 = scmp.eq.s32.totalorder %s24, 1
      %p168 = scmp.ne.s32.totalorder %s163, %s165
      %p169 = scmp.eq.s32.totalorder %s24, 0
      %p170 = por %p168, %p169
      %p171 = scmp.ne.s32.totalorder %s163, %s165
      %p172 = scmp.eq.s32.totalorder %s29, 1
      %p173 = por %p171, %p172
      %p174 = scmp.ne.s32.totalorder %s165, %s166
      %p175 = scmp.eq.s32.totalorder %s29, 0
      %p176 = por %p174, %p175
      %p177 = scmp.ne.s32.totalorder %s165, %s166
      %p178 = scmp.eq.s32.totalorder %s30, 1
      %p179 = por %p177, %p178
      %p181 = scmp.ne.s32.totalorder %s166, %s180
      %p182 = scmp.eq.s32.totalorder %s30, 0
      %p183 = por %p181, %p182
      %s185 = sadd.s32 %s184, 1
      %p188 = scmp.eq.s32.totalorder %s24, 1
      %p189 = scmp.ne.s32.totalorder %s184, %s186
      %p190 = scmp.eq.s32.totalorder %s24, 0
      %p191 = por %p189, %p190
      %p192 = scmp.ne.s32.totalorder %s184, %s186
      %p193 = scmp.eq.s32.totalorder %s29, 1
      %p194 = por %p192, %p193
      %p195 = scmp.ne.s32.totalorder %s186, %s187
      %p196 = scmp.eq.s32.totalorder %s29, 0
      %p197 = por %p195, %p196
      %p198 = scmp.ne.s32.totalorder %s186, %s187
      %p199 = scmp.eq.s32.totalorder %s30, 1
      %p200 = por %p198, %p199
      %p202 = scmp.ne.s32.totalorder %s187, %s201
      %p203 = scmp.eq.s32.totalorder %s30, 0
      %p204 = por %p202, %p203
      %s206 = sadd.s32 %s205, 1
      %p209 = scmp.eq.s32.totalorder %s24, 1
      %p210 = scmp.ne.s32.totalorder %s205, %s207
      %p211 = scmp.eq.s32.totalorder %s24, 0
      %p212 = por %p210, %p211
      %p213 = scmp.ne.s32.totalorder %s205, %s207
      %p214 = scmp.eq.s32.totalorder %s29, 1
      %p215 = por %p213, %p214
      %p216 = scmp.ne.s32.totalorder %s207, %s208
      %p217 = scmp.eq.s32.totalorder %s29, 0
      %p218 = por %p216, %p217
      %p219 = scmp.ne.s32.totalorder %s207, %s208
      %p220 = scmp.eq.s32.totalorder %s30, 1
      %p221 = por %p219, %p220
      %p223 = scmp.ne.s32.totalorder %s208, %s222
      %p224 = scmp.eq.s32.totalorder %s30, 0
      %p225 = por %p223, %p224
      %s227 = sadd.s32 %s226, 1
      %p230 = scmp.eq.s32.totalorder %s24, 1
      %p231 = scmp.ne.s32.totalorder %s226, %s228
      %p232 = scmp.eq.s32.totalorder %s24, 0
      %p233 = por %p231, %p232
      %p234 = scmp.ne.s32.totalorder %s226, %s228
      %p235 = scmp.eq.s32.totalorder %s29, 1
      %p236 = por %p234, %p235
      %p237 = scmp.ne.s32.totalorder %s228, %s229
      %p238 = scmp.eq.s32.totalorder %s29, 0
      %p239 = por %p237, %p238
      %p240 = scmp.ne.s32.totalorder %s228, %s229
      %p241 = scmp.eq.s32.totalorder %s30, 1
      %p242 = por %p240, %p241
      %p244 = scmp.ne.s32.totalorder %s229, %s243
      %p245 = scmp.eq.s32.totalorder %s30, 0
      %p246 = por %p244, %p245
      %s248 = sadd.s32 %s247, 1
      %p251 = scmp.eq.s32.totalorder %s24, 1
      %p252 = scmp.ne.s32.totalorder %s247, %s249
      %p253 = scmp.eq.s32.totalorder %s24, 0
      %p254 = por %p252, %p253
      %p255 = scmp.ne.s32.totalorder %s247, %s249
      %p256 = scmp.eq.s32.totalorder %s29, 1
      %p257 = por %p255, %p256
      %p258 = scmp.ne.s32.totalorder %s249, %s250
      %p259 = scmp.eq.s32.totalorder %s29, 0
      %p260 = por %p258, %p259
      %p261 = scmp.ne.s32.totalorder %s249, %s250
      %p262 = scmp.eq.s32.totalorder %s30, 1
      %p263 = por %p261, %p262
      %p265 = scmp.ne.s32.totalorder %s250, %s264
      %p266 = scmp.eq.s32.totalorder %s30, 0
      %p267 = por %p265, %p266
      %s268 = ssub.s32 %s24, %s31
      %p269 = scmp.eq.s32.totalorder %s268, 0
      %s271 = sadd.s32 %s270, 1
      %s272 = scalar_select %p269, %s270, %s271
      %p275 = pneg %p269
      %p276 = scmp.eq.s32.totalorder %s24, 1
      %p277 = por %p275, %p276
      %p278 = scmp.ne.s32.totalorder %s270, %s273
      %p279 = scmp.eq.s32.totalorder %s24, 0
      %p280 = por %p278, %p279
      %p281 = scmp.ne.s32.totalorder %s270, %s273
      %p282 = scmp.eq.s32.totalorder %s29, 1
      %p283 = por %p281, %p282
      %p284 = scmp.ne.s32.totalorder %s273, %s274
      %p285 = scmp.eq.s32.totalorder %s29, 0
      %p286 = por %p284, %p285
      %p287 = scmp.ne.s32.totalorder %s273, %s274
      %p288 = scmp.eq.s32.totalorder %s30, 1
      %p289 = por %p287, %p288
      %p291 = scmp.ne.s32.totalorder %s274, %s290
      %p292 = scmp.eq.s32.totalorder %s30, 0
      %p293 = por %p291, %p292
      %p294 = scmp.le.s32.totalorder 1, %s24
      %p295 = scmp.lt.s32.totalorder %s24, 3
      %p296 = pnand %p294, %p295
      %p297 = pneg %p296
      // Predicated region
      $region9: #{tpu_custom_call.1} parent=5 // pred_check
        _
      $region10: #{tpu_custom_call.1} parent=5 // pred_check_branch
        %299 = sbr.rel (%p296) target = $region12
      $region11: #{tpu_custom_call.1} parent=5 // pred_region
        %s300 = ssub.s32 %s24, 1
        // Predicated region
        $region13: #{tpu_custom_call.1} parent=11 // pred_check
          %p301 = pneg %p71
        $region14: #{tpu_custom_call.1} parent=11 // pred_check_branch
          %303 = sbr.rel (%p301) target = $region16
        $region15: #{tpu_custom_call.1} parent=11 // pred_region
          _
        $region16: #{tpu_custom_call.1} parent=11 // pred_fallthru
          _
        // Predicated region
        $region17: #{tpu_custom_call.1} parent=11 // pred_check
          %p304 = pneg %p92
        $region18: #{tpu_custom_call.1} parent=11 // pred_check_branch
          %306 = sbr.rel (%p304) target = $region20
        $region19: #{tpu_custom_call.1} parent=11 // pred_region
          _
        $region20: #{tpu_custom_call.1} parent=11 // pred_fallthru
          _
        // Predicated region
        $region21: #{tpu_custom_call.1} parent=11 // pred_check
          %p307 = pneg %p113
        $region22: #{tpu_custom_call.1} parent=11 // pred_check_branch
          %309 = sbr.rel (%p307) target = $region24
        $region23: #{tpu_custom_call.1} parent=11 // pred_region
          _
        $region24: #{tpu_custom_call.1} parent=11 // pred_fallthru
          _
        // Predicated region
        $region25: #{tpu_custom_call.1} parent=11 // pred_check
          %p310 = pneg %p134
        $region26: #{tpu_custom_call.1} parent=11 // pred_check_branch
          %312 = sbr.rel (%p310) target = $region28
        $region27: #{tpu_custom_call.1} parent=11 // pred_region
          _
        $region28: #{tpu_custom_call.1} parent=11 // pred_fallthru
          _
        // Predicated region
        $region29: #{tpu_custom_call.1} parent=11 // pred_check
          %p313 = pneg %p155
        $region30: #{tpu_custom_call.1} parent=11 // pred_check_branch
          %315 = sbr.rel (%p313) target = $region32
        $region31: #{tpu_custom_call.1} parent=11 // pred_region
          _
        $region32: #{tpu_custom_call.1} parent=11 // pred_fallthru
          _
        // Predicated region
        $region33: #{tpu_custom_call.1} parent=11 // pred_check
          %p316 = pneg %p176
        $region34: #{tpu_custom_call.1} parent=11 // pred_check_branch
          %318 = sbr.rel (%p316) target = $region36
        $region35: #{tpu_custom_call.1} parent=11 // pred_region
          _
        $region36: #{tpu_custom_call.1} parent=11 // pred_fallthru
          _
        // Predicated region
        $region37: #{tpu_custom_call.1} parent=11 // pred_check
          %p319 = pneg %p197
        $region38: #{tpu_custom_call.1} parent=11 // pred_check_branch
          %321 = sbr.rel (%p319) target = $region40
        $region39: #{tpu_custom_call.1} parent=11 // pred_region
          _
        $region40: #{tpu_custom_call.1} parent=11 // pred_fallthru
          _
        // Predicated region
        $region41: #{tpu_custom_call.1} parent=11 // pred_check
          %p322 = pneg %p218
        $region42: #{tpu_custom_call.1} parent=11 // pred_check_branch
          %324 = sbr.rel (%p322) target = $region44
        $region43: #{tpu_custom_call.1} parent=11 // pred_region
          _
        $region44: #{tpu_custom_call.1} parent=11 // pred_fallthru
          _
        // Predicated region
        $region45: #{tpu_custom_call.1} parent=11 // pred_check
          %p325 = pneg %p239
        $region46: #{tpu_custom_call.1} parent=11 // pred_check_branch
          %327 = sbr.rel (%p325) target = $region48
        $region47: #{tpu_custom_call.1} parent=11 // pred_region
          %s329 = ssub.s32 2048, 2048
          %330 = vsyncadd [#allocation11], %s329
          %s331 = sshll.u32 [#allocation10], 4
          %s332 = int_to_ptr.vmem [resolvable:$true] %s331
          %337 = dma.hbm_to_vmem [thread:$0]  %s9, 2048, %s332, [#allocation11], 1024, 1024, 64
        $region48: #{tpu_custom_call.1} parent=11 // pred_fallthru
          _
        // Predicated region
        $region49: #{tpu_custom_call.1} parent=11 // pred_check
          %p338 = pneg %p260
        $region50: #{tpu_custom_call.1} parent=11 // pred_check_branch
          %340 = sbr.rel (%p338) target = $region52
        $region51: #{tpu_custom_call.1} parent=11 // pred_region
          _
        $region52: #{tpu_custom_call.1} parent=11 // pred_fallthru
          _
      $region12: #{tpu_custom_call.1} parent=5 // pred_fallthru
        _
      %p341 = scmp.lt.s32.totalorder %s24, 2
      // Predicated region
      $region53: #{tpu_custom_call.1} parent=5 // pred_check
        %p342 = pneg %p341
      $region54: #{tpu_custom_call.1} parent=5 // pred_check_branch
        %344 = sbr.rel (%p342) target = $region56
      $region55: #{tpu_custom_call.1} parent=5 // pred_region
        // Predicated region
        $region57: #{tpu_custom_call.1} parent=55 // pred_check
          %p345 = pneg %p44
        $region58: #{tpu_custom_call.1} parent=55 // pred_check_branch
          %347 = sbr.rel (%p345) target = $region60
        $region59: #{tpu_custom_call.1} parent=55 // pred_region
          %s348 = sand.u32 %s34, 1
          %s349 = scalar_lea.sflag [#allocation8], %s348
          %s350 = sand.u32 %s34, 1
          %s351 = smul.addr %s350, 64
          %s352 = scalar_lea.vmem [#allocation7], %s351
          %s353 = smul.u32 4, %s24
          %s355 = ssub.s32 1024, 1024
          %356 = vsyncadd %s349, %s355
          %s357 = smul.addr %s353, 2
          %s358 = smul.addr %s357, 128
          %s359 = scalar_lea.hbm %s0, %s358
          %s360 = sshll.u32 %s352, 4
          %s361 = int_to_ptr.vmem [resolvable:$true] %s360
          %366 = dma.hbm_to_vmem [thread:$0]  %s359, 1024, %s361, %s349, 256, 256, 16
        $region60: #{tpu_custom_call.1} parent=55 // pred_fallthru
          _
      $region56: #{tpu_custom_call.1} parent=5 // pred_fallthru
        _
      %p367 = scmp.le.s32.totalorder 1, %s24
      %p368 = scmp.lt.s32.totalorder %s24, 3
      %p369 = pnand %p367, %p368
      %p370 = pneg %p369
      // Predicated region
      $region61: #{tpu_custom_call.1} parent=5 // pred_check
        _
      $region62: #{tpu_custom_call.1} parent=5 // pred_check_branch
        %372 = sbr.rel (%p369) target = $region64
      $region63: #{tpu_custom_call.1} parent=5 // pred_region
        %s373 = ssub.s32 %s24, 1
        %s374 = sand.u32 %s37, 1
        %s375 = scalar_lea.sflag [#allocation8], %s374
        %s376 = sand.u32 %s37, 1
        %s377 = smul.addr %s376, 64
        %s378 = scalar_lea.vmem [#allocation7], %s377
        // Predicated region
        $region65: #{tpu_custom_call.1} parent=63 // pred_check
          %p379 = pneg %p50
        $region66: #{tpu_custom_call.1} parent=63 // pred_check_branch
          %381 = sbr.rel (%p379) target = $region68
        $region67: #{tpu_custom_call.1} parent=63 // pred_region
          %382 = dma.done %s375, 1024
        $region68: #{tpu_custom_call.1} parent=63 // pred_fallthru
          _
        // Predicated region
        $region69: #{tpu_custom_call.1} parent=63 // pred_check
          %p383 = pneg %p239
        $region70: #{tpu_custom_call.1} parent=63 // pred_check_branch
          %385 = sbr.rel (%p383) target = $region72
        $region71: #{tpu_custom_call.1} parent=63 // pred_region
          %386 = dma.done [#allocation11], 2048
        $region72: #{tpu_custom_call.1} parent=63 // pred_fallthru
          _
        %s387 = sand.u32 %s37, 1
        %s388 = scalar_lea.sflag [#allocation8], %s387
        %s389 = sand.u32 %s37, 1
        %s390 = smul.addr %s389, 64
        %s391 = scalar_lea.vmem [#allocation7], %s390
        %p392 = pneg %p50
        %p393 = pneg %p47
        %p394 = pneg %p71
        %p395 = pneg %p68
        %p396 = pneg %p92
        %p397 = pneg %p89
        %p398 = pneg %p113
        %p399 = pneg %p110
        %p400 = pneg %p134
        %p401 = pneg %p131
        %p402 = pneg %p155
        %p403 = pneg %p152
        %p404 = pneg %p176
        %p405 = pneg %p173
        %p406 = pneg %p197
        %p407 = pneg %p194
        %p408 = pneg %p218
        %p409 = pneg %p215
        %p410 = pneg %p239
        %p411 = pneg %p236
        %p412 = pneg %p260
        %p413 = pneg %p257
        %p414 = pneg %p286
        %p415 = pneg %p283
        %s416 = sand.u32 %s273, 1
        %s417 = scalar_lea.sflag [#allocation9], %s416
        %s418 = sand.u32 %s273, 1
        %s419 = smul.addr %s418, 128
        %s420 = scalar_lea.vmem [#allocation12], %s419
        %s421 = smul.u32 4, %s29
        %s422 = smul.u32 4, %s29
        %v424 = vld [vmem:[%s378] sm:$0xff]
        %v425 = vld [vmem:[%s378 + $0x8] sm:$0xff]
        %v426 = vld [vmem:[%s378 + $0x10] sm:$0xff]
        %v427 = vld [vmem:[%s378 + $0x18] sm:$0xff]
        %v428 = vld [vmem:[%s378 + $0x20] sm:$0xff]
        %v429 = vld [vmem:[%s378 + $0x28] sm:$0xff]
        %v430 = vld [vmem:[%s378 + $0x30] sm:$0xff]
        %v431 = vld [vmem:[%s378 + $0x38] sm:$0xff]
        %v432 = vld [vmem:[%s1] sm:$0xff]
        %434 = vset.pattern.permute.xlu0 0
        %435 = vperm.xlu0 %434, %v432
        %v436 = vpop.permute.xlu0 %435
        %v438 = vmul.f32 %v424, %v436
        %v439 = vmul.f32 %v425, %v436
        %v440 = vmul.f32 %v426, %v436
        %v441 = vmul.f32 %v427, %v436
        %v442 = vmul.f32 %v428, %v436
        %v443 = vmul.f32 %v429, %v436
        %v444 = vmul.f32 %v430, %v436
        %v445 = vmul.f32 %v431, %v436
        %v446 = vld [vmem:[%s2] sm:$0xff]
        %448 = vset.pattern.permute.xlu0 0
        %449 = vperm.xlu0 %448, %v446
        %v450 = vpop.permute.xlu0 %449
        %v452 = vadd.f32 %v438, %v450
        %v453 = vadd.f32 %v439, %v450
        %v454 = vadd.f32 %v440, %v450
        %v455 = vadd.f32 %v441, %v450
        %v456 = vadd.f32 %v442, %v450
        %v457 = vadd.f32 %v443, %v450
        %v458 = vadd.f32 %v444, %v450
        %v459 = vadd.f32 %v445, %v450
        %v460 = vmax.f32 %v452, 0.0
        %v461 = vmax.f32 %v453, 0.0
        %v462 = vmax.f32 %v454, 0.0
        %v463 = vmax.f32 %v455, 0.0
        %v464 = vmax.f32 %v456, 0.0
        %v465 = vmax.f32 %v457, 0.0
        %v466 = vmax.f32 %v458, 0.0
        %v467 = vmax.f32 %v459, 0.0
        %468 = vst [vmem:[#allocation2] sm:$0xff] %v460
        %469 = vst [vmem:[#allocation2 + $0x8] sm:$0xff] %v461
        %470 = vst [vmem:[#allocation2 + $0x10] sm:$0xff] %v462
        %471 = vst [vmem:[#allocation2 + $0x18] sm:$0xff] %v463
        %472 = vst [vmem:[#allocation2 + $0x20] sm:$0xff] %v464
        %473 = vst [vmem:[#allocation2 + $0x28] sm:$0xff] %v465
        %474 = vst [vmem:[#allocation2 + $0x30] sm:$0xff] %v466
        %475 = vst [vmem:[#allocation2 + $0x38] sm:$0xff] %v467
        %v476 = vld [vmem:[#allocation2] sm:$0xff]
        %v477 = vld [vmem:[#allocation2 + $0x8] sm:$0xff]
        %478 = vrot.lane.b32.xlu0 %v476, 17
        %v479 = vpop.permute.xlu0 %478
        %480 = vrot.lane.b32.xlu0 %v477, 17
        %v481 = vpop.permute.xlu0 %480
        %v482 = vlaneseq
        %v483 = vand.u32 %v482, 127
        %vm484 = vcmp.lt.s32.totalorder %v483, 17
        %v485 = vsel %vm484, %v479, %v481
        %v486 = vsel %vm484, %v481, %v479
        %v487 = vld [vmem:[%s8] ss:$8 sm:$0x3]
        %v489 = vlaneseq
        %v490 = vshrl.u32 %v489, 7
        %v491 = vsub.s32 0, %v490
        %v492 = vrot.slane %v487, %v491
        %v493 = vlaneseq
        %v494 = vshrl.u32 %v493, 7
        %v495 = vsub.s32 1, %v494
        %v496 = vrot.slane %v487, %v495
        %v499 = vmul.f32 %v486, %v492
        %v500 = vmul.f32 %v485, %v496
        %v501 = vpack.c.bf16 %v499, %v499
        %v502 = vpack.c.bf16 %v500, %v500
        %v505 = vunpack.c.l.b16 %v501
        %v506 = vunpack.c.l.b16 %v502
        %v507 = vpack.c.b16 %v506, %v505
        %509 = vst [vmem:[#allocation3] sm:$0xff] %v507
        %510 = vrot.lane.b32.xlu0 %v476, 16
        %v511 = vpop.permute.xlu0 %510
        %512 = vrot.lane.b32.xlu0 %v477, 16
        %v513 = vpop.permute.xlu0 %512
        %vm514 = vcmp.lt.s32.totalorder %v483, 16
        %v515 = vsel %vm514, %v511, %v513
        %v516 = vsel %vm514, %v513, %v511
        %s517 = scalar_lea.vmem %s8, 1
        %v518 = vld [vmem:[%s517] ss:$8 sm:$0x3]
        %v520 = vlaneseq
        %v521 = vshrl.u32 %v520, 7
        %v522 = vsub.s32 0, %v521
        %v523 = vrot.slane %v518, %v522
        %v524 = vlaneseq
        %v525 = vshrl.u32 %v524, 7
        %v526 = vsub.s32 1, %v525
        %v527 = vrot.slane %v518, %v526
        %v530 = vmul.f32 %v516, %v523
        %v531 = vmul.f32 %v515, %v527
        %v532 = vpack.c.bf16 %v530, %v530
        %v533 = vpack.c.bf16 %v531, %v531
        %v536 = vunpack.c.l.b16 %v532
        %v537 = vunpack.c.l.b16 %v533
        %v538 = vpack.c.b16 %v537, %v536
        %540 = vst [vmem:[#allocation3 + $0x20] sm:$0xff] %v538
        %541 = vrot.lane.b32.xlu0 %v476, 15
        %v542 = vpop.permute.xlu0 %541
        %543 = vrot.lane.b32.xlu0 %v477, 15
        %v544 = vpop.permute.xlu0 %543
        %vm545 = vcmp.lt.s32.totalorder %v483, 15
        %v546 = vsel %vm545, %v542, %v544
        %v547 = vsel %vm545, %v544, %v542
        %s548 = scalar_lea.vmem %s8, 2
        %v549 = vld [vmem:[%s548] ss:$8 sm:$0x3]
        %v551 = vlaneseq
        %v552 = vshrl.u32 %v551, 7
        %v553 = vsub.s32 0, %v552
        %v554 = vrot.slane %v549, %v553
        %v555 = vlaneseq
        %v556 = vshrl.u32 %v555, 7
        %v557 = vsub.s32 1, %v556
        %v558 = vrot.slane %v549, %v557
        %v561 = vmul.f32 %v547, %v554
        %v562 = vmul.f32 %v546, %v558
        %v563 = vpack.c.bf16 %v561, %v561
        %v564 = vpack.c.bf16 %v562, %v562
        %v567 = vunpack.c.l.b16 %v563
        %v568 = vunpack.c.l.b16 %v564
        %v569 = vpack.c.b16 %v568, %v567
        %571 = vst [vmem:[#allocation3 + $0x40] sm:$0xff] %v569
        %572 = vrot.lane.b32.xlu0 %v476, 1
        %v573 = vpop.permute.xlu0 %572
        %574 = vrot.lane.b32.xlu0 %v477, 1
        %v575 = vpop.permute.xlu0 %574
        %vm576 = vcmp.lt.s32.totalorder %v483, 1
        %v577 = vsel %vm576, %v573, %v575
        %v578 = vsel %vm576, %v575, %v573
        %s579 = scalar_lea.vmem %s8, 3
        %v580 = vld [vmem:[%s579] ss:$8 sm:$0x3]
        %v582 = vlaneseq
        %v583 = vshrl.u32 %v582, 7
        %v584 = vsub.s32 0, %v583
        %v585 = vrot.slane %v580, %v584
        %v586 = vlaneseq
        %v587 = vshrl.u32 %v586, 7
        %v588 = vsub.s32 1, %v587
        %v589 = vrot.slane %v580, %v588
        %v592 = vmul.f32 %v578, %v585
        %v593 = vmul.f32 %v577, %v589
        %v594 = vpack.c.bf16 %v592, %v592
        %v595 = vpack.c.bf16 %v593, %v593
        %v598 = vunpack.c.l.b16 %v594
        %v599 = vunpack.c.l.b16 %v595
        %v600 = vpack.c.b16 %v599, %v598
        %602 = vst [vmem:[#allocation3 + $0x60] sm:$0xff] %v600
        %s603 = scalar_lea.vmem %s8, 4
        %v604 = vld [vmem:[%s603] ss:$8 sm:$0x3]
        %v606 = vlaneseq
        %v607 = vshrl.u32 %v606, 7
        %v608 = vsub.s32 0, %v607
        %v609 = vrot.slane %v604, %v608
        %v610 = vlaneseq
        %v611 = vshrl.u32 %v610, 7
        %v612 = vsub.s32 1, %v611
        %v613 = vrot.slane %v604, %v612
        %v616 = vmul.f32 %v476, %v609
        %v617 = vmul.f32 %v477, %v613
        %v618 = vpack.c.bf16 %v616, %v616
        %v619 = vpack.c.bf16 %v617, %v617
        %v622 = vunpack.c.l.b16 %v618
        %v623 = vunpack.c.l.b16 %v619
        %v624 = vpack.c.b16 %v623, %v622
        %626 = vst [vmem:[#allocation3 + $0x80] sm:$0xff] %v624
        %627 = vrot.lane.b32.xlu0 %v476, 127
        %v628 = vpop.permute.xlu0 %627
        %629 = vrot.lane.b32.xlu0 %v477, 127
        %v630 = vpop.permute.xlu0 %629
        %vm631 = vcmp.lt.s32.totalorder %v483, 127
        %v632 = vsel %vm631, %v628, %v630
        %v633 = vsel %vm631, %v630, %v628
        %s634 = scalar_lea.vmem %s8, 5
        %v635 = vld [vmem:[%s634] ss:$8 sm:$0x3]
        %v637 = vlaneseq
        %v638 = vshrl.u32 %v637, 7
        %v639 = vsub.s32 0, %v638
        %v640 = vrot.slane %v635, %v639
        %v641 = vlaneseq
        %v642 = vshrl.u32 %v641, 7
        %v643 = vsub.s32 1, %v642
        %v644 = vrot.slane %v635, %v643
        %v647 = vmul.f32 %v632, %v640
        %v648 = vmul.f32 %v633, %v644
        %v649 = vpack.c.bf16 %v647, %v647
        %v650 = vpack.c.bf16 %v648, %v648
        %v653 = vunpack.c.l.b16 %v649
        %v654 = vunpack.c.l.b16 %v650
        %v655 = vpack.c.b16 %v654, %v653
        %657 = vst [vmem:[#allocation3 + $0xa0] sm:$0xff] %v655
        %658 = vrot.lane.b32.xlu0 %v476, 113
        %v659 = vpop.permute.xlu0 %658
        %660 = vrot.lane.b32.xlu0 %v477, 113
        %v661 = vpop.permute.xlu0 %660
        %vm662 = vcmp.lt.s32.totalorder %v483, 113
        %v663 = vsel %vm662, %v659, %v661
        %v664 = vsel %vm662, %v661, %v659
        %s665 = scalar_lea.vmem %s8, 6
        %v666 = vld [vmem:[%s665] ss:$8 sm:$0x3]
        %v668 = vlaneseq
        %v669 = vshrl.u32 %v668, 7
        %v670 = vsub.s32 0, %v669
        %v671 = vrot.slane %v666, %v670
        %v672 = vlaneseq
        %v673 = vshrl.u32 %v672, 7
        %v674 = vsub.s32 1, %v673
        %v675 = vrot.slane %v666, %v674
        %v678 = vmul.f32 %v663, %v671
        %v679 = vmul.f32 %v664, %v675
        %v680 = vpack.c.bf16 %v678, %v678
        %v681 = vpack.c.bf16 %v679, %v679
        %v684 = vunpack.c.l.b16 %v680
        %v685 = vunpack.c.l.b16 %v681
        %v686 = vpack.c.b16 %v685, %v684
        %688 = vst [vmem:[#allocation3 + $0xc0] sm:$0xff] %v686
        %689 = vrot.lane.b32.xlu0 %v476, 112
        %v690 = vpop.permute.xlu0 %689
        %691 = vrot.lane.b32.xlu0 %v477, 112
        %v692 = vpop.permute.xlu0 %691
        %vm693 = vcmp.lt.s32.totalorder %v483, 112
        %v694 = vsel %vm693, %v690, %v692
        %v695 = vsel %vm693, %v692, %v690
        %s696 = scalar_lea.vmem %s8, 7
        %v697 = vld [vmem:[%s696] ss:$8 sm:$0x3]
        %v699 = vlaneseq
        %v700 = vshrl.u32 %v699, 7
        %v701 = vsub.s32 0, %v700
        %v702 = vrot.slane %v697, %v701
        %v703 = vlaneseq
        %v704 = vshrl.u32 %v703, 7
        %v705 = vsub.s32 1, %v704
        %v706 = vrot.slane %v697, %v705
        %v709 = vmul.f32 %v694, %v702
        %v710 = vmul.f32 %v695, %v706
        %v711 = vpack.c.bf16 %v709, %v709
        %v712 = vpack.c.bf16 %v710, %v710
        %v715 = vunpack.c.l.b16 %v711
        %v716 = vunpack.c.l.b16 %v712
        %v717 = vpack.c.b16 %v716, %v715
        %719 = vst [vmem:[#allocation3 + $0xe0] sm:$0xff] %v717
        %720 = vrot.lane.b32.xlu0 %v476, 111
        %v721 = vpop.permute.xlu0 %720
        %722 = vrot.lane.b32.xlu0 %v477, 111
        %v723 = vpop.permute.xlu0 %722
        %vm724 = vcmp.lt.s32.totalorder %v483, 111
        %v725 = vsel %vm724, %v721, %v723
        %v726 = vsel %vm724, %v723, %v721
        %s727 = scalar_lea.vmem %s8, 16
        %v728 = vld [vmem:[%s727] ss:$8 sm:$0x3]
        %v730 = vlaneseq
        %v731 = vshrl.u32 %v730, 7
        %v732 = vsub.s32 0, %v731
        %v733 = vrot.slane %v728, %v732
        %v734 = vlaneseq
        %v735 = vshrl.u32 %v734, 7
        %v736 = vsub.s32 1, %v735
        %v737 = vrot.slane %v728, %v736
        %v740 = vmul.f32 %v725, %v733
        %v741 = vmul.f32 %v726, %v737
        %v742 = vpack.c.bf16 %v740, %v740
        %v743 = vpack.c.bf16 %v741, %v741
        %v746 = vunpack.c.l.b16 %v742
        %v747 = vunpack.c.l.b16 %v743
        %v748 = vpack.c.b16 %v747, %v746
        %750 = vst [vmem:[#allocation3 + $0x100] sm:$0xff] %v748
        %s751 = scalar_lea.vmem [#allocation2], 16
        %v752 = vld [vmem:[%s751] sm:$0xff]
        %v753 = vld [vmem:[%s751 + $0x8] sm:$0xff]
        %754 = vrot.lane.b32.xlu0 %v752, 17
        %v755 = vpop.permute.xlu0 %754
        %756 = vrot.lane.b32.xlu0 %v753, 17
        %v757 = vpop.permute.xlu0 %756
        %v758 = vsel %vm484, %v755, %v757
        %v759 = vsel %vm484, %v757, %v755
        %v760 = vld [vmem:[%s8] ss:$8 sm:$0x3]
        %v762 = vlaneseq
        %v763 = vshrl.u32 %v762, 7
        %v764 = vsub.s32 0, %v763
        %v765 = vrot.slane %v760, %v764
        %v766 = vlaneseq
        %v767 = vshrl.u32 %v766, 7
        %v768 = vsub.s32 1, %v767
        %v769 = vrot.slane %v760, %v768
        %v772 = vmul.f32 %v759, %v765
        %v773 = vmul.f32 %v758, %v769
        %v774 = vpack.c.bf16 %v772, %v772
        %v775 = vpack.c.bf16 %v773, %v773
        %v778 = vunpack.c.l.b16 %v774
        %v779 = vunpack.c.l.b16 %v775
        %v780 = vpack.c.b16 %v779, %v778
        %782 = vst [vmem:[#allocation3 + $0x8] sm:$0xff] %v780
        %783 = vrot.lane.b32.xlu0 %v752, 16
        %v784 = vpop.permute.xlu0 %783
        %785 = vrot.lane.b32.xlu0 %v753, 16
        %v786 = vpop.permute.xlu0 %785
        %v787 = vsel %vm514, %v784, %v786
        %v788 = vsel %vm514, %v786, %v784
        %v789 = vld [vmem:[%s517] ss:$8 sm:$0x3]
        %v791 = vlaneseq
        %v792 = vshrl.u32 %v791, 7
        %v793 = vsub.s32 0, %v792
        %v794 = vrot.slane %v789, %v793
        %v795 = vlaneseq
        %v796 = vshrl.u32 %v795, 7
        %v797 = vsub.s32 1, %v796
        %v798 = vrot.slane %v789, %v797
        %v801 = vmul.f32 %v788, %v794
        %v802 = vmul.f32 %v787, %v798
        %v803 = vpack.c.bf16 %v801, %v801
        %v804 = vpack.c.bf16 %v802, %v802
        %v807 = vunpack.c.l.b16 %v803
        %v808 = vunpack.c.l.b16 %v804
        %v809 = vpack.c.b16 %v808, %v807
        %811 = vst [vmem:[#allocation3 + $0x28] sm:$0xff] %v809
        %812 = vrot.lane.b32.xlu0 %v752, 15
        %v813 = vpop.permute.xlu0 %812
        %814 = vrot.lane.b32.xlu0 %v753, 15
        %v815 = vpop.permute.xlu0 %814
        %v816 = vsel %vm545, %v813, %v815
        %v817 = vsel %vm545, %v815, %v813
        %v818 = vld [vmem:[%s548] ss:$8 sm:$0x3]
        %v820 = vlaneseq
        %v821 = vshrl.u32 %v820, 7
        %v822 = vsub.s32 0, %v821
        %v823 = vrot.slane %v818, %v822
        %v824 = vlaneseq
        %v825 = vshrl.u32 %v824, 7
        %v826 = vsub.s32 1, %v825
        %v827 = vrot.slane %v818, %v826
        %v830 = vmul.f32 %v817, %v823
        %v831 = vmul.f32 %v816, %v827
        %v832 = vpack.c.bf16 %v830, %v830
        %v833 = vpack.c.bf16 %v831, %v831
        %v836 = vunpack.c.l.b16 %v832
        %v837 = vunpack.c.l.b16 %v833
        %v838 = vpack.c.b16 %v837, %v836
        %840 = vst [vmem:[#allocation3 + $0x48] sm:$0xff] %v838
        %841 = vrot.lane.b32.xlu0 %v752, 1
        %v842 = vpop.permute.xlu0 %841
        %843 = vrot.lane.b32.xlu0 %v753, 1
        %v844 = vpop.permute.xlu0 %843
        %v845 = vsel %vm576, %v842, %v844
        %v846 = vsel %vm576, %v844, %v842
        %v847 = vld [vmem:[%s579] ss:$8 sm:$0x3]
        %v849 = vlaneseq
        %v850 = vshrl.u32 %v849, 7
        %v851 = vsub.s32 0, %v850
        %v852 = vrot.slane %v847, %v851
        %v853 = vlaneseq
        %v854 = vshrl.u32 %v853, 7
        %v855 = vsub.s32 1, %v854
        %v856 = vrot.slane %v847, %v855
        %v859 = vmul.f32 %v846, %v852
        %v860 = vmul.f32 %v845, %v856
        %v861 = vpack.c.bf16 %v859, %v859
        %v862 = vpack.c.bf16 %v860, %v860
        %v865 = vunpack.c.l.b16 %v861
        %v866 = vunpack.c.l.b16 %v862
        %v867 = vpack.c.b16 %v866, %v865
        %869 = vst [vmem:[#allocation3 + $0x68] sm:$0xff] %v867
        %v870 = vld [vmem:[%s603] ss:$8 sm:$0x3]
        %v872 = vlaneseq
        %v873 = vshrl.u32 %v872, 7
        %v874 = vsub.s32 0, %v873
        %v875 = vrot.slane %v870, %v874
        %v876 = vlaneseq
        %v877 = vshrl.u32 %v876, 7
        %v878 = vsub.s32 1, %v877
        %v879 = vrot.slane %v870, %v878
        %v882 = vmul.f32 %v752, %v875
        %v883 = vmul.f32 %v753, %v879
        %v884 = vpack.c.bf16 %v882, %v882
        %v885 = vpack.c.bf16 %v883, %v883
        %v888 = vunpack.c.l.b16 %v884
        %v889 = vunpack.c.l.b16 %v885
        %v890 = vpack.c.b16 %v889, %v888
        %892 = vst [vmem:[#allocation3 + $0x88] sm:$0xff] %v890
        %893 = vrot.lane.b32.xlu0 %v752, 127
        %v894 = vpop.permute.xlu0 %893
        %895 = vrot.lane.b32.xlu0 %v753, 127
        %v896 = vpop.permute.xlu0 %895
        %v897 = vsel %vm631, %v894, %v896
        %v898 = vsel %vm631, %v896, %v894
        %v899 = vld [vmem:[%s634] ss:$8 sm:$0x3]
        %v901 = vlaneseq
        %v902 = vshrl.u32 %v901, 7
        %v903 = vsub.s32 0, %v902
        %v904 = vrot.slane %v899, %v903
        %v905 = vlaneseq
        %v906 = vshrl.u32 %v905, 7
        %v907 = vsub.s32 1, %v906
        %v908 = vrot.slane %v899, %v907
        %v911 = vmul.f32 %v897, %v904
        %v912 = vmul.f32 %v898, %v908
        %v913 = vpack.c.bf16 %v911, %v911
        %v914 = vpack.c.bf16 %v912, %v912
        %v917 = vunpack.c.l.b16 %v913
        %v918 = vunpack.c.l.b16 %v914
        %v919 = vpack.c.b16 %v918, %v917
        %921 = vst [vmem:[#allocation3 + $0xa8] sm:$0xff] %v919
        %922 = vrot.lane.b32.xlu0 %v752, 113
        %v923 = vpop.permute.xlu0 %922
        %924 = vrot.lane.b32.xlu0 %v753, 113
        %v925 = vpop.permute.xlu0 %924
        %v926 = vsel %vm662, %v923, %v925
        %v927 = vsel %vm662, %v925, %v923
        %v928 = vld [vmem:[%s665] ss:$8 sm:$0x3]
        %v930 = vlaneseq
        %v931 = vshrl.u32 %v930, 7
        %v932 = vsub.s32 0, %v931
        %v933 = vrot.slane %v928, %v932
        %v934 = vlaneseq
        %v935 = vshrl.u32 %v934, 7
        %v936 = vsub.s32 1, %v935
        %v937 = vrot.slane %v928, %v936
        %v940 = vmul.f32 %v926, %v933
        %v941 = vmul.f32 %v927, %v937
        %v942 = vpack.c.bf16 %v940, %v940
        %v943 = vpack.c.bf16 %v941, %v941
        %v946 = vunpack.c.l.b16 %v942
        %v947 = vunpack.c.l.b16 %v943
        %v948 = vpack.c.b16 %v947, %v946
        %950 = vst [vmem:[#allocation3 + $0xc8] sm:$0xff] %v948
        %951 = vrot.lane.b32.xlu0 %v752, 112
        %v952 = vpop.permute.xlu0 %951
        %953 = vrot.lane.b32.xlu0 %v753, 112
        %v954 = vpop.permute.xlu0 %953
        %v955 = vsel %vm693, %v952, %v954
        %v956 = vsel %vm693, %v954, %v952
        %v957 = vld [vmem:[%s696] ss:$8 sm:$0x3]
        %v959 = vlaneseq
        %v960 = vshrl.u32 %v959, 7
        %v961 = vsub.s32 0, %v960
        %v962 = vrot.slane %v957, %v961
        %v963 = vlaneseq
        %v964 = vshrl.u32 %v963, 7
        %v965 = vsub.s32 1, %v964
        %v966 = vrot.slane %v957, %v965
        %v969 = vmul.f32 %v955, %v962
        %v970 = vmul.f32 %v956, %v966
        %v971 = vpack.c.bf16 %v969, %v969
        %v972 = vpack.c.bf16 %v970, %v970
        %v975 = vunpack.c.l.b16 %v971
        %v976 = vunpack.c.l.b16 %v972
        %v977 = vpack.c.b16 %v976, %v975
        %979 = vst [vmem:[#allocation3 + $0xe8] sm:$0xff] %v977
        %980 = vrot.lane.b32.xlu0 %v752, 111
        %v981 = vpop.permute.xlu0 %980
        %982 = vrot.lane.b32.xlu0 %v753, 111
        %v983 = vpop.permute.xlu0 %982
        %v984 = vsel %vm724, %v981, %v983
        %v985 = vsel %vm724, %v983, %v981
        %v986 = vld [vmem:[%s727] ss:$8 sm:$0x3]
        %v988 = vlaneseq
        %v989 = vshrl.u32 %v988, 7
        %v990 = vsub.s32 0, %v989
        %v991 = vrot.slane %v986, %v990
        %v992 = vlaneseq
        %v993 = vshrl.u32 %v992, 7
        %v994 = vsub.s32 1, %v993
        %v995 = vrot.slane %v986, %v994
        %v998 = vmul.f32 %v984, %v991
        %v999 = vmul.f32 %v985, %v995
        %v1000 = vpack.c.bf16 %v998, %v998
        %v1001 = vpack.c.bf16 %v999, %v999
        %v1004 = vunpack.c.l.b16 %v1000
        %v1005 = vunpack.c.l.b16 %v1001
        %v1006 = vpack.c.b16 %v1005, %v1004
        %1008 = vst [vmem:[#allocation3 + $0x108] sm:$0xff] %v1006
        %s1009 = scalar_lea.vmem [#allocation2], 32
        %v1010 = vld [vmem:[%s1009] sm:$0xff]
        %v1011 = vld [vmem:[%s1009 + $0x8] sm:$0xff]
        %1012 = vrot.lane.b32.xlu0 %v1010, 17
        %v1013 = vpop.permute.xlu0 %1012
        %1014 = vrot.lane.b32.xlu0 %v1011, 17
        %v1015 = vpop.permute.xlu0 %1014
        %v1016 = vsel %vm484, %v1013, %v1015
        %v1017 = vsel %vm484, %v1015, %v1013
        %v1018 = vld [vmem:[%s8] ss:$8 sm:$0x3]
        %v1020 = vlaneseq
        %v1021 = vshrl.u32 %v1020, 7
        %v1022 = vsub.s32 0, %v1021
        %v1023 = vrot.slane %v1018, %v1022
        %v1024 = vlaneseq
        %v1025 = vshrl.u32 %v1024, 7
        %v1026 = vsub.s32 1, %v1025
        %v1027 = vrot.slane %v1018, %v1026
        %v1030 = vmul.f32 %v1017, %v1023
        %v1031 = vmul.f32 %v1016, %v1027
        %v1032 = vpack.c.bf16 %v1030, %v1030
        %v1033 = vpack.c.bf16 %v1031, %v1031
        %v1036 = vunpack.c.l.b16 %v1032
        %v1037 = vunpack.c.l.b16 %v1033
        %v1038 = vpack.c.b16 %v1037, %v1036
        %1040 = vst [vmem:[#allocation3 + $0x10] sm:$0xff] %v1038
        %1041 = vrot.lane.b32.xlu0 %v1010, 16
        %v1042 = vpop.permute.xlu0 %1041
        %1043 = vrot.lane.b32.xlu0 %v1011, 16
        %v1044 = vpop.permute.xlu0 %1043
        %v1045 = vsel %vm514, %v1042, %v1044
        %v1046 = vsel %vm514, %v1044, %v1042
        %v1047 = vld [vmem:[%s517] ss:$8 sm:$0x3]
        %v1049 = vlaneseq
        %v1050 = vshrl.u32 %v1049, 7
        %v1051 = vsub.s32 0, %v1050
        %v1052 = vrot.slane %v1047, %v1051
        %v1053 = vlaneseq
        %v1054 = vshrl.u32 %v1053, 7
        %v1055 = vsub.s32 1, %v1054
        %v1056 = vrot.slane %v1047, %v1055
        %v1059 = vmul.f32 %v1046, %v1052
        %v1060 = vmul.f32 %v1045, %v1056
        %v1061 = vpack.c.bf16 %v1059, %v1059
        %v1062 = vpack.c.bf16 %v1060, %v1060
        %v1065 = vunpack.c.l.b16 %v1061
        %v1066 = vunpack.c.l.b16 %v1062
        %v1067 = vpack.c.b16 %v1066, %v1065
        %1069 = vst [vmem:[#allocation3 + $0x30] sm:$0xff] %v1067
        %1070 = vrot.lane.b32.xlu0 %v1010, 15
        %v1071 = vpop.permute.xlu0 %1070
        %1072 = vrot.lane.b32.xlu0 %v1011, 15
        %v1073 = vpop.permute.xlu0 %1072
        %v1074 = vsel %vm545, %v1071, %v1073
        %v1075 = vsel %vm545, %v1073, %v1071
        %v1076 = vld [vmem:[%s548] ss:$8 sm:$0x3]
        %v1078 = vlaneseq
        %v1079 = vshrl.u32 %v1078, 7
        %v1080 = vsub.s32 0, %v1079
        %v1081 = vrot.slane %v1076, %v1080
        %v1082 = vlaneseq
        %v1083 = vshrl.u32 %v1082, 7
        %v1084 = vsub.s32 1, %v1083
        %v1085 = vrot.slane %v1076, %v1084
        %v1088 = vmul.f32 %v1075, %v1081
        %v1089 = vmul.f32 %v1074, %v1085
        %v1090 = vpack.c.bf16 %v1088, %v1088
        %v1091 = vpack.c.bf16 %v1089, %v1089
        %v1094 = vunpack.c.l.b16 %v1090
        %v1095 = vunpack.c.l.b16 %v1091
        %v1096 = vpack.c.b16 %v1095, %v1094
        %1098 = vst [vmem:[#allocation3 + $0x50] sm:$0xff] %v1096
        %1099 = vrot.lane.b32.xlu0 %v1010, 1
        %v1100 = vpop.permute.xlu0 %1099
        %1101 = vrot.lane.b32.xlu0 %v1011, 1
        %v1102 = vpop.permute.xlu0 %1101
        %v1103 = vsel %vm576, %v1100, %v1102
        %v1104 = vsel %vm576, %v1102, %v1100
        %v1105 = vld [vmem:[%s579] ss:$8 sm:$0x3]
        %v1107 = vlaneseq
        %v1108 = vshrl.u32 %v1107, 7
        %v1109 = vsub.s32 0, %v1108
        %v1110 = vrot.slane %v1105, %v1109
        %v1111 = vlaneseq
        %v1112 = vshrl.u32 %v1111, 7
        %v1113 = vsub.s32 1, %v1112
        %v1114 = vrot.slane %v1105, %v1113
        %v1117 = vmul.f32 %v1104, %v1110
        %v1118 = vmul.f32 %v1103, %v1114
        %v1119 = vpack.c.bf16 %v1117, %v1117
        %v1120 = vpack.c.bf16 %v1118, %v1118
        %v1123 = vunpack.c.l.b16 %v1119
        %v1124 = vunpack.c.l.b16 %v1120
        %v1125 = vpack.c.b16 %v1124, %v1123
        %1127 = vst [vmem:[#allocation3 + $0x70] sm:$0xff] %v1125
        %v1128 = vld [vmem:[%s603] ss:$8 sm:$0x3]
        %v1130 = vlaneseq
        %v1131 = vshrl.u32 %v1130, 7
        %v1132 = vsub.s32 0, %v1131
        %v1133 = vrot.slane %v1128, %v1132
        %v1134 = vlaneseq
        %v1135 = vshrl.u32 %v1134, 7
        %v1136 = vsub.s32 1, %v1135
        %v1137 = vrot.slane %v1128, %v1136
        %v1140 = vmul.f32 %v1010, %v1133
        %v1141 = vmul.f32 %v1011, %v1137
        %v1142 = vpack.c.bf16 %v1140, %v1140
        %v1143 = vpack.c.bf16 %v1141, %v1141
        %v1146 = vunpack.c.l.b16 %v1142
        %v1147 = vunpack.c.l.b16 %v1143
        %v1148 = vpack.c.b16 %v1147, %v1146
        %1150 = vst [vmem:[#allocation3 + $0x90] sm:$0xff] %v1148
        %1151 = vrot.lane.b32.xlu0 %v1010, 127
        %v1152 = vpop.permute.xlu0 %1151
        %1153 = vrot.lane.b32.xlu0 %v1011, 127
        %v1154 = vpop.permute.xlu0 %1153
        %v1155 = vsel %vm631, %v1152, %v1154
        %v1156 = vsel %vm631, %v1154, %v1152
        %v1157 = vld [vmem:[%s634] ss:$8 sm:$0x3]
        %v1159 = vlaneseq
        %v1160 = vshrl.u32 %v1159, 7
        %v1161 = vsub.s32 0, %v1160
        %v1162 = vrot.slane %v1157, %v1161
        %v1163 = vlaneseq
        %v1164 = vshrl.u32 %v1163, 7
        %v1165 = vsub.s32 1, %v1164
        %v1166 = vrot.slane %v1157, %v1165
        %v1169 = vmul.f32 %v1155, %v1162
        %v1170 = vmul.f32 %v1156, %v1166
        %v1171 = vpack.c.bf16 %v1169, %v1169
        %v1172 = vpack.c.bf16 %v1170, %v1170
        %v1175 = vunpack.c.l.b16 %v1171
        %v1176 = vunpack.c.l.b16 %v1172
        %v1177 = vpack.c.b16 %v1176, %v1175
        %1179 = vst [vmem:[#allocation3 + $0xb0] sm:$0xff] %v1177
        %1180 = vrot.lane.b32.xlu0 %v1010, 113
        %v1181 = vpop.permute.xlu0 %1180
        %1182 = vrot.lane.b32.xlu0 %v1011, 113
        %v1183 = vpop.permute.xlu0 %1182
        %v1184 = vsel %vm662, %v1181, %v1183
        %v1185 = vsel %vm662, %v1183, %v1181
        %v1186 = vld [vmem:[%s665] ss:$8 sm:$0x3]
        %v1188 = vlaneseq
        %v1189 = vshrl.u32 %v1188, 7
        %v1190 = vsub.s32 0, %v1189
        %v1191 = vrot.slane %v1186, %v1190
        %v1192 = vlaneseq
        %v1193 = vshrl.u32 %v1192, 7
        %v1194 = vsub.s32 1, %v1193
        %v1195 = vrot.slane %v1186, %v1194
        %v1198 = vmul.f32 %v1184, %v1191
        %v1199 = vmul.f32 %v1185, %v1195
        %v1200 = vpack.c.bf16 %v1198, %v1198
        %v1201 = vpack.c.bf16 %v1199, %v1199
        %v1204 = vunpack.c.l.b16 %v1200
        %v1205 = vunpack.c.l.b16 %v1201
        %v1206 = vpack.c.b16 %v1205, %v1204
        %1208 = vst [vmem:[#allocation3 + $0xd0] sm:$0xff] %v1206
        %1209 = vrot.lane.b32.xlu0 %v1010, 112
        %v1210 = vpop.permute.xlu0 %1209
        %1211 = vrot.lane.b32.xlu0 %v1011, 112
        %v1212 = vpop.permute.xlu0 %1211
        %v1213 = vsel %vm693, %v1210, %v1212
        %v1214 = vsel %vm693, %v1212, %v1210
        %v1215 = vld [vmem:[%s696] ss:$8 sm:$0x3]
        %v1217 = vlaneseq
        %v1218 = vshrl.u32 %v1217, 7
        %v1219 = vsub.s32 0, %v1218
        %v1220 = vrot.slane %v1215, %v1219
        %v1221 = vlaneseq
        %v1222 = vshrl.u32 %v1221, 7
        %v1223 = vsub.s32 1, %v1222
        %v1224 = vrot.slane %v1215, %v1223
        %v1227 = vmul.f32 %v1213, %v1220
        %v1228 = vmul.f32 %v1214, %v1224
        %v1229 = vpack.c.bf16 %v1227, %v1227
        %v1230 = vpack.c.bf16 %v1228, %v1228
        %v1233 = vunpack.c.l.b16 %v1229
        %v1234 = vunpack.c.l.b16 %v1230
        %v1235 = vpack.c.b16 %v1234, %v1233
        %1237 = vst [vmem:[#allocation3 + $0xf0] sm:$0xff] %v1235
        %1238 = vrot.lane.b32.xlu0 %v1010, 111
        %v1239 = vpop.permute.xlu0 %1238
        %1240 = vrot.lane.b32.xlu0 %v1011, 111
        %v1241 = vpop.permute.xlu0 %1240
        %v1242 = vsel %vm724, %v1239, %v1241
        %v1243 = vsel %vm724, %v1241, %v1239
        %v1244 = vld [vmem:[%s727] ss:$8 sm:$0x3]
        %v1246 = vlaneseq
        %v1247 = vshrl.u32 %v1246, 7
        %v1248 = vsub.s32 0, %v1247
        %v1249 = vrot.slane %v1244, %v1248
        %v1250 = vlaneseq
        %v1251 = vshrl.u32 %v1250, 7
        %v1252 = vsub.s32 1, %v1251
        %v1253 = vrot.slane %v1244, %v1252
        %v1256 = vmul.f32 %v1242, %v1249
        %v1257 = vmul.f32 %v1243, %v1253
        %v1258 = vpack.c.bf16 %v1256, %v1256
        %v1259 = vpack.c.bf16 %v1257, %v1257
        %v1262 = vunpack.c.l.b16 %v1258
        %v1263 = vunpack.c.l.b16 %v1259
        %v1264 = vpack.c.b16 %v1263, %v1262
        %1266 = vst [vmem:[#allocation3 + $0x110] sm:$0xff] %v1264
        %s1267 = scalar_lea.vmem [#allocation2], 48
        %v1268 = vld [vmem:[%s1267] sm:$0xff]
        %v1269 = vld [vmem:[%s1267 + $0x8] sm:$0xff]
        %1270 = vrot.lane.b32.xlu0 %v1268, 17
        %v1271 = vpop.permute.xlu0 %1270
        %1272 = vrot.lane.b32.xlu0 %v1269, 17
        %v1273 = vpop.permute.xlu0 %1272
        %v1274 = vsel %vm484, %v1271, %v1273
        %v1275 = vsel %vm484, %v1273, %v1271
        %v1276 = vld [vmem:[%s8] ss:$8 sm:$0x3]
        %v1278 = vlaneseq
        %v1279 = vshrl.u32 %v1278, 7
        %v1280 = vsub.s32 0, %v1279
        %v1281 = vrot.slane %v1276, %v1280
        %v1282 = vlaneseq
        %v1283 = vshrl.u32 %v1282, 7
        %v1284 = vsub.s32 1, %v1283
        %v1285 = vrot.slane %v1276, %v1284
        %v1288 = vmul.f32 %v1275, %v1281
        %v1289 = vmul.f32 %v1274, %v1285
        %v1290 = vpack.c.bf16 %v1288, %v1288
        %v1291 = vpack.c.bf16 %v1289, %v1289
        %v1294 = vunpack.c.l.b16 %v1290
        %v1295 = vunpack.c.l.b16 %v1291
        %v1296 = vpack.c.b16 %v1295, %v1294
        %1298 = vst [vmem:[#allocation3 + $0x18] sm:$0xff] %v1296
        %1299 = vrot.lane.b32.xlu0 %v1268, 16
        %v1300 = vpop.permute.xlu0 %1299
        %1301 = vrot.lane.b32.xlu0 %v1269, 16
        %v1302 = vpop.permute.xlu0 %1301
        %v1303 = vsel %vm514, %v1300, %v1302
        %v1304 = vsel %vm514, %v1302, %v1300
        %v1305 = vld [vmem:[%s517] ss:$8 sm:$0x3]
        %v1307 = vlaneseq
        %v1308 = vshrl.u32 %v1307, 7
        %v1309 = vsub.s32 0, %v1308
        %v1310 = vrot.slane %v1305, %v1309
        %v1311 = vlaneseq
        %v1312 = vshrl.u32 %v1311, 7
        %v1313 = vsub.s32 1, %v1312
        %v1314 = vrot.slane %v1305, %v1313
        %v1317 = vmul.f32 %v1304, %v1310
        %v1318 = vmul.f32 %v1303, %v1314
        %v1319 = vpack.c.bf16 %v1317, %v1317
        %v1320 = vpack.c.bf16 %v1318, %v1318
        %v1323 = vunpack.c.l.b16 %v1319
        %v1324 = vunpack.c.l.b16 %v1320
        %v1325 = vpack.c.b16 %v1324, %v1323
        %1327 = vst [vmem:[#allocation3 + $0x38] sm:$0xff] %v1325
        %1328 = vrot.lane.b32.xlu0 %v1268, 15
        %v1329 = vpop.permute.xlu0 %1328
        %1330 = vrot.lane.b32.xlu0 %v1269, 15
        %v1331 = vpop.permute.xlu0 %1330
        %v1332 = vsel %vm545, %v1329, %v1331
        %v1333 = vsel %vm545, %v1331, %v1329
        %v1334 = vld [vmem:[%s548] ss:$8 sm:$0x3]
        %v1336 = vlaneseq
        %v1337 = vshrl.u32 %v1336, 7
        %v1338 = vsub.s32 0, %v1337
        %v1339 = vrot.slane %v1334, %v1338
        %v1340 = vlaneseq
        %v1341 = vshrl.u32 %v1340, 7
        %v1342 = vsub.s32 1, %v1341
        %v1343 = vrot.slane %v1334, %v1342
        %v1346 = vmul.f32 %v1333, %v1339
        %v1347 = vmul.f32 %v1332, %v1343
        %v1348 = vpack.c.bf16 %v1346, %v1346
        %v1349 = vpack.c.bf16 %v1347, %v1347
        %v1352 = vunpack.c.l.b16 %v1348
        %v1353 = vunpack.c.l.b16 %v1349
        %v1354 = vpack.c.b16 %v1353, %v1352
        %1356 = vst [vmem:[#allocation3 + $0x58] sm:$0xff] %v1354
        %1357 = vrot.lane.b32.xlu0 %v1268, 1
        %v1358 = vpop.permute.xlu0 %1357
        %1359 = vrot.lane.b32.xlu0 %v1269, 1
        %v1360 = vpop.permute.xlu0 %1359
        %v1361 = vsel %vm576, %v1358, %v1360
        %v1362 = vsel %vm576, %v1360, %v1358
        %v1363 = vld [vmem:[%s579] ss:$8 sm:$0x3]
        %v1365 = vlaneseq
        %v1366 = vshrl.u32 %v1365, 7
        %v1367 = vsub.s32 0, %v1366
        %v1368 = vrot.slane %v1363, %v1367
        %v1369 = vlaneseq
        %v1370 = vshrl.u32 %v1369, 7
        %v1371 = vsub.s32 1, %v1370
        %v1372 = vrot.slane %v1363, %v1371
        %v1375 = vmul.f32 %v1362, %v1368
        %v1376 = vmul.f32 %v1361, %v1372
        %v1377 = vpack.c.bf16 %v1375, %v1375
        %v1378 = vpack.c.bf16 %v1376, %v1376
        %v1381 = vunpack.c.l.b16 %v1377
        %v1382 = vunpack.c.l.b16 %v1378
        %v1383 = vpack.c.b16 %v1382, %v1381
        %1385 = vst [vmem:[#allocation3 + $0x78] sm:$0xff] %v1383
        %v1386 = vld [vmem:[%s603] ss:$8 sm:$0x3]
        %v1388 = vlaneseq
        %v1389 = vshrl.u32 %v1388, 7
        %v1390 = vsub.s32 0, %v1389
        %v1391 = vrot.slane %v1386, %v1390
        %v1392 = vlaneseq
        %v1393 = vshrl.u32 %v1392, 7
        %v1394 = vsub.s32 1, %v1393
        %v1395 = vrot.slane %v1386, %v1394
        %v1398 = vmul.f32 %v1268, %v1391
        %v1399 = vmul.f32 %v1269, %v1395
        %v1400 = vpack.c.bf16 %v1398, %v1398
        %v1401 = vpack.c.bf16 %v1399, %v1399
        %v1404 = vunpack.c.l.b16 %v1400
        %v1405 = vunpack.c.l.b16 %v1401
        %v1406 = vpack.c.b16 %v1405, %v1404
        %1408 = vst [vmem:[#allocation3 + $0x98] sm:$0xff] %v1406
        %1409 = vrot.lane.b32.xlu0 %v1268, 127
        %v1410 = vpop.permute.xlu0 %1409
        %1411 = vrot.lane.b32.xlu0 %v1269, 127
        %v1412 = vpop.permute.xlu0 %1411
        %v1413 = vsel %vm631, %v1410, %v1412
        %v1414 = vsel %vm631, %v1412, %v1410
        %v1415 = vld [vmem:[%s634] ss:$8 sm:$0x3]
        %v1417 = vlaneseq
        %v1418 = vshrl.u32 %v1417, 7
        %v1419 = vsub.s32 0, %v1418
        %v1420 = vrot.slane %v1415, %v1419
        %v1421 = vlaneseq
        %v1422 = vshrl.u32 %v1421, 7
        %v1423 = vsub.s32 1, %v1422
        %v1424 = vrot.slane %v1415, %v1423
        %v1427 = vmul.f32 %v1413, %v1420
        %v1428 = vmul.f32 %v1414, %v1424
        %v1429 = vpack.c.bf16 %v1427, %v1427
        %v1430 = vpack.c.bf16 %v1428, %v1428
        %v1433 = vunpack.c.l.b16 %v1429
        %v1434 = vunpack.c.l.b16 %v1430
        %v1435 = vpack.c.b16 %v1434, %v1433
        %1437 = vst [vmem:[#allocation3 + $0xb8] sm:$0xff] %v1435
        %1438 = vrot.lane.b32.xlu0 %v1268, 113
        %v1439 = vpop.permute.xlu0 %1438
        %1440 = vrot.lane.b32.xlu0 %v1269, 113
        %v1441 = vpop.permute.xlu0 %1440
        %v1442 = vsel %vm662, %v1439, %v1441
        %v1443 = vsel %vm662, %v1441, %v1439
        %v1444 = vld [vmem:[%s665] ss:$8 sm:$0x3]
        %v1446 = vlaneseq
        %v1447 = vshrl.u32 %v1446, 7
        %v1448 = vsub.s32 0, %v1447
        %v1449 = vrot.slane %v1444, %v1448
        %v1450 = vlaneseq
        %v1451 = vshrl.u32 %v1450, 7
        %v1452 = vsub.s32 1, %v1451
        %v1453 = vrot.slane %v1444, %v1452
        %v1456 = vmul.f32 %v1442, %v1449
        %v1457 = vmul.f32 %v1443, %v1453
        %v1458 = vpack.c.bf16 %v1456, %v1456
        %v1459 = vpack.c.bf16 %v1457, %v1457
        %v1462 = vunpack.c.l.b16 %v1458
        %v1463 = vunpack.c.l.b16 %v1459
        %v1464 = vpack.c.b16 %v1463, %v1462
        %1466 = vst [vmem:[#allocation3 + $0xd8] sm:$0xff] %v1464
        %1467 = vrot.lane.b32.xlu0 %v1268, 112
        %v1468 = vpop.permute.xlu0 %1467
        %1469 = vrot.lane.b32.xlu0 %v1269, 112
        %v1470 = vpop.permute.xlu0 %1469
        %v1471 = vsel %vm693, %v1468, %v1470
        %v1472 = vsel %vm693, %v1470, %v1468
        %v1473 = vld [vmem:[%s696] ss:$8 sm:$0x3]
        %v1475 = vlaneseq
        %v1476 = vshrl.u32 %v1475, 7
        %v1477 = vsub.s32 0, %v1476
        %v1478 = vrot.slane %v1473, %v1477
        %v1479 = vlaneseq
        %v1480 = vshrl.u32 %v1479, 7
        %v1481 = vsub.s32 1, %v1480
        %v1482 = vrot.slane %v1473, %v1481
        %v1485 = vmul.f32 %v1471, %v1478
        %v1486 = vmul.f32 %v1472, %v1482
        %v1487 = vpack.c.bf16 %v1485, %v1485
        %v1488 = vpack.c.bf16 %v1486, %v1486
        %v1491 = vunpack.c.l.b16 %v1487
        %v1492 = vunpack.c.l.b16 %v1488
        %v1493 = vpack.c.b16 %v1492, %v1491
        %1495 = vst [vmem:[#allocation3 + $0xf8] sm:$0xff] %v1493
        %1496 = vrot.lane.b32.xlu0 %v1268, 111
        %v1497 = vpop.permute.xlu0 %1496
        %1498 = vrot.lane.b32.xlu0 %v1269, 111
        %v1499 = vpop.permute.xlu0 %1498
        %v1500 = vsel %vm724, %v1497, %v1499
        %v1501 = vsel %vm724, %v1499, %v1497
        %v1502 = vld [vmem:[%s727] ss:$8 sm:$0x3]
        %v1504 = vlaneseq
        %v1505 = vshrl.u32 %v1504, 7
        %v1506 = vsub.s32 0, %v1505
        %v1507 = vrot.slane %v1502, %v1506
        %v1508 = vlaneseq
        %v1509 = vshrl.u32 %v1508, 7
        %v1510 = vsub.s32 1, %v1509
        %v1511 = vrot.slane %v1502, %v1510
        %v1514 = vmul.f32 %v1500, %v1507
        %v1515 = vmul.f32 %v1501, %v1511
        %v1516 = vpack.c.bf16 %v1514, %v1514
        %v1517 = vpack.c.bf16 %v1515, %v1515
        %v1520 = vunpack.c.l.b16 %v1516
        %v1521 = vunpack.c.l.b16 %v1517
        %v1522 = vpack.c.b16 %v1521, %v1520
        %1524 = vst [vmem:[#allocation3 + $0x118] sm:$0xff] %v1522
        %v1525 = vld [vmem:[%s3] sm:$0xf]
        %v1526 = vld [vmem:[%s3 + $0x4] sm:$0xf]
        %v1527 = vld [vmem:[#allocation3] sm:$0xff]
        %v1528 = vld [vmem:[#allocation3 + $0x8] sm:$0xff]
        %v1529 = vld [vmem:[#allocation3 + $0x10] sm:$0xff]
        %v1530 = vld [vmem:[#allocation3 + $0x18] sm:$0xff]
        %v1531 = vld [vmem:[#allocation3 + $0x20] sm:$0xff]
        %v1532 = vld [vmem:[#allocation3 + $0x28] sm:$0xff]
        %v1533 = vld [vmem:[#allocation3 + $0x30] sm:$0xff]
        %v1534 = vld [vmem:[#allocation3 + $0x38] sm:$0xff]
        %v1535 = vld [vmem:[#allocation3 + $0x40] sm:$0xff]
        %v1536 = vld [vmem:[#allocation3 + $0x48] sm:$0xff]
        %v1537 = vld [vmem:[#allocation3 + $0x50] sm:$0xff]
        %v1538 = vld [vmem:[#allocation3 + $0x58] sm:$0xff]
        %v1539 = vld [vmem:[#allocation3 + $0x60] sm:$0xff]
        %v1540 = vld [vmem:[#allocation3 + $0x68] sm:$0xff]
        %v1541 = vld [vmem:[#allocation3 + $0x70] sm:$0xff]
        %v1542 = vld [vmem:[#allocation3 + $0x78] sm:$0xff]
        %v1543 = vld [vmem:[#allocation3 + $0x80] sm:$0xff]
        %v1544 = vld [vmem:[#allocation3 + $0x88] sm:$0xff]
        %v1545 = vld [vmem:[#allocation3 + $0x90] sm:$0xff]
        %v1546 = vld [vmem:[#allocation3 + $0x98] sm:$0xff]
        %v1547 = vld [vmem:[#allocation3 + $0xa0] sm:$0xff]
        %v1548 = vld [vmem:[#allocation3 + $0xa8] sm:$0xff]
        %v1549 = vld [vmem:[#allocation3 + $0xb0] sm:$0xff]
        %v1550 = vld [vmem:[#allocation3 + $0xb8] sm:$0xff]
        %v1551 = vld [vmem:[#allocation3 + $0xc0] sm:$0xff]
        %v1552 = vld [vmem:[#allocation3 + $0xc8] sm:$0xff]
        %v1553 = vld [vmem:[#allocation3 + $0xd0] sm:$0xff]
        %v1554 = vld [vmem:[#allocation3 + $0xd8] sm:$0xff]
        %v1555 = vld [vmem:[#allocation3 + $0xe0] sm:$0xff]
        %v1556 = vld [vmem:[#allocation3 + $0xe8] sm:$0xff]
        %v1557 = vld [vmem:[#allocation3 + $0xf0] sm:$0xff]
        %v1558 = vld [vmem:[#allocation3 + $0xf8] sm:$0xff]
        %v1559 = vld [vmem:[#allocation3 + $0x100] sm:$0xff]
        %v1560 = vld [vmem:[#allocation3 + $0x108] sm:$0xff]
        %v1561 = vld [vmem:[#allocation3 + $0x110] sm:$0xff]
        %v1562 = vld [vmem:[#allocation3 + $0x118] sm:$0xff]
        %v1565 = vunpack.c.l.b16 %v1525
        %v1566 = vunpack.c.l.b16 %v1526
        %v1567 = vpack.c.b16 %v1566, %v1565
        %v1604 = vunpack.c.l.b16 %v1527
        %v1605 = vunpack.c.h.b16 %v1527
        %v1606 = vunpack.c.l.b16 %v1528
        %v1607 = vunpack.c.h.b16 %v1528
        %v1608 = vunpack.c.l.b16 %v1529
        %v1609 = vunpack.c.h.b16 %v1529
        %v1610 = vunpack.c.l.b16 %v1530
        %v1611 = vunpack.c.h.b16 %v1530
        %v1612 = vunpack.c.l.b16 %v1531
        %v1613 = vunpack.c.h.b16 %v1531
        %v1614 = vunpack.c.l.b16 %v1532
        %v1615 = vunpack.c.h.b16 %v1532
        %v1616 = vunpack.c.l.b16 %v1533
        %v1617 = vunpack.c.h.b16 %v1533
        %v1618 = vunpack.c.l.b16 %v1534
        %v1619 = vunpack.c.h.b16 %v1534
        %v1620 = vunpack.c.l.b16 %v1535
        %v1621 = vunpack.c.h.b16 %v1535
        %v1622 = vunpack.c.l.b16 %v1536
        %v1623 = vunpack.c.h.b16 %v1536
        %v1624 = vunpack.c.l.b16 %v1537
        %v1625 = vunpack.c.h.b16 %v1537
        %v1626 = vunpack.c.l.b16 %v1538
        %v1627 = vunpack.c.h.b16 %v1538
        %v1628 = vunpack.c.l.b16 %v1539
        %v1629 = vunpack.c.h.b16 %v1539
        %v1630 = vunpack.c.l.b16 %v1540
        %v1631 = vunpack.c.h.b16 %v1540
        %v1632 = vunpack.c.l.b16 %v1541
        %v1633 = vunpack.c.h.b16 %v1541
        %v1634 = vunpack.c.l.b16 %v1542
        %v1635 = vunpack.c.h.b16 %v1542
        %v1636 = vunpack.c.l.b16 %v1543
        %v1637 = vunpack.c.h.b16 %v1543
        %v1638 = vunpack.c.l.b16 %v1544
        %v1639 = vunpack.c.h.b16 %v1544
        %v1640 = vunpack.c.l.b16 %v1545
        %v1641 = vunpack.c.h.b16 %v1545
        %v1642 = vunpack.c.l.b16 %v1546
        %v1643 = vunpack.c.h.b16 %v1546
        %v1644 = vunpack.c.l.b16 %v1547
        %v1645 = vunpack.c.h.b16 %v1547
        %v1646 = vunpack.c.l.b16 %v1548
        %v1647 = vunpack.c.h.b16 %v1548
        %v1648 = vunpack.c.l.b16 %v1549
        %v1649 = vunpack.c.h.b16 %v1549
        %v1650 = vunpack.c.l.b16 %v1550
        %v1651 = vunpack.c.h.b16 %v1550
        %v1652 = vunpack.c.l.b16 %v1551
        %v1653 = vunpack.c.h.b16 %v1551
        %v1654 = vunpack.c.l.b16 %v1552
        %v1655 = vunpack.c.h.b16 %v1552
        %v1656 = vunpack.c.l.b16 %v1553
        %v1657 = vunpack.c.h.b16 %v1553
        %v1658 = vunpack.c.l.b16 %v1554
        %v1659 = vunpack.c.h.b16 %v1554
        %v1660 = vunpack.c.l.b16 %v1555
        %v1661 = vunpack.c.h.b16 %v1555
        %v1662 = vunpack.c.l.b16 %v1556
        %v1663 = vunpack.c.h.b16 %v1556
        %v1664 = vunpack.c.l.b16 %v1557
        %v1665 = vunpack.c.h.b16 %v1557
        %v1666 = vunpack.c.l.b16 %v1558
        %v1667 = vunpack.c.h.b16 %v1558
        %v1668 = vunpack.c.l.b16 %v1559
        %v1669 = vunpack.c.h.b16 %v1559
        %v1670 = vunpack.c.l.b16 %v1560
        %v1671 = vunpack.c.h.b16 %v1560
        %v1672 = vunpack.c.l.b16 %v1561
        %v1673 = vunpack.c.h.b16 %v1561
        %v1674 = vunpack.c.l.b16 %v1562
        %v1675 = vunpack.c.h.b16 %v1562
        %v1676 = vpack.c.b16 %v1612, %v1604
        %v1677 = vpack.c.b16 %v1613, %v1605
        %v1678 = vpack.c.b16 %v1614, %v1606
        %v1679 = vpack.c.b16 %v1615, %v1607
        %v1680 = vpack.c.b16 %v1616, %v1608
        %v1681 = vpack.c.b16 %v1617, %v1609
        %v1682 = vpack.c.b16 %v1618, %v1610
        %v1683 = vpack.c.b16 %v1619, %v1611
        %v1684 = vpack.c.b16 %v1628, %v1620
        %v1685 = vpack.c.b16 %v1629, %v1621
        %v1686 = vpack.c.b16 %v1630, %v1622
        %v1687 = vpack.c.b16 %v1631, %v1623
        %v1688 = vpack.c.b16 %v1632, %v1624
        %v1689 = vpack.c.b16 %v1633, %v1625
        %v1690 = vpack.c.b16 %v1634, %v1626
        %v1691 = vpack.c.b16 %v1635, %v1627
        %v1692 = vpack.c.b16 %v1644, %v1636
        %v1693 = vpack.c.b16 %v1645, %v1637
        %v1694 = vpack.c.b16 %v1646, %v1638
        %v1695 = vpack.c.b16 %v1647, %v1639
        %v1696 = vpack.c.b16 %v1648, %v1640
        %v1697 = vpack.c.b16 %v1649, %v1641
        %v1698 = vpack.c.b16 %v1650, %v1642
        %v1699 = vpack.c.b16 %v1651, %v1643
        %v1700 = vpack.c.b16 %v1660, %v1652
        %v1701 = vpack.c.b16 %v1661, %v1653
        %v1702 = vpack.c.b16 %v1662, %v1654
        %v1703 = vpack.c.b16 %v1663, %v1655
        %v1704 = vpack.c.b16 %v1664, %v1656
        %v1705 = vpack.c.b16 %v1665, %v1657
        %v1706 = vpack.c.b16 %v1666, %v1658
        %v1707 = vpack.c.b16 %v1667, %v1659
        %v1708 = vpack.c.b16 %v1668, %v1668
        %v1709 = vpack.c.b16 %v1669, %v1669
        %v1710 = vpack.c.b16 %v1670, %v1670
        %v1711 = vpack.c.b16 %v1671, %v1671
        %v1712 = vpack.c.b16 %v1672, %v1672
        %v1713 = vpack.c.b16 %v1673, %v1673
        %v1714 = vpack.c.b16 %v1674, %v1674
        %v1715 = vpack.c.b16 %v1675, %v1675
        %vm1748 = vcmask 588800
        %v1750 = vsel %vm1748, %v1567, 0
        %vm1752 = vcmask 1043456
        %v1754 = vsel %vm1752, %v1708, 0
        %v1757 = vsel %vm1752, %v1709, 0
        %v1760 = vsel %vm1752, %v1710, 0
        %v1763 = vsel %vm1752, %v1711, 0
        %v1766 = vsel %vm1752, %v1712, 0
        %v1769 = vsel %vm1752, %v1713, 0
        %v1772 = vsel %vm1752, %v1714, 0
        %v1775 = vsel %vm1752, %v1715, 0
        %1777 = vmatprep.subr.bf16.mxu0 0
        %1778 = vmatpush1.bf16.msra.mxu0 0
        %1779 = vmatprep.subr.bf16.mxu0 0
        %1780 = vmatpush1.bf16.msra.mxu0 0
        %1781 = vmatprep.subr.bf16.mxu0 0
        %1782 = vmatpush1.bf16.msra.mxu0 0
        %1783 = vmatprep.subr.bf16.mxu0 %v1757
        %1784 = vmatpush1.bf16.msra.mxu0 %v1754
        %1785 = vmatprep.subr.bf16.mxu0 %v1701
        %1786 = vmatpush1.bf16.msra.mxu0 %v1700
        %1787 = vmatprep.subr.bf16.mxu0 %v1693
        %1788 = vmatpush1.bf16.msra.mxu0 %v1692
        %1789 = vmatprep.subr.bf16.mxu0 %v1685
        %1790 = vmatpush1.bf16.msra.mxu0 %v1684
        %1791 = vmatprep.subr.bf16.mxu0 %v1677
        %1792 = vmatpush1.bf16.msra.mxu0 %v1676
        %1793 = vmatprep.subr.bf16.mxu0 0
        %1794 = vmatpush2.bf16.msra.mxu0 0
        %1795 = vmatprep.subr.bf16.mxu0 0
        %1796 = vmatpush2.bf16.msra.mxu0 0
        %1797 = vmatprep.subr.bf16.mxu0 0
        %1798 = vmatpush2.bf16.msra.mxu0 0
        %1799 = vmatprep.subr.bf16.mxu0 0
        %1800 = vmatpush2.bf16.msra.mxu0 0
        %1801 = vmatprep.subr.bf16.mxu0 0
        %1802 = vmatpush2.bf16.msra.mxu0 0
        %1803 = vmatprep.subr.bf16.mxu0 0
        %1804 = vmatpush2.bf16.msra.mxu0 0
        %1805 = vmatprep.subr.bf16.mxu0 0
        %1806 = vmatpush2.bf16.msra.mxu0 0
        %1807 = vmatprep.subr.bf16.mxu0 0
        %1808 = vmatpush2.bf16.msra.mxu0 0
        %1809 = vmatprep.mubr.bf16.mxu0 0
        %1810 = vmatmul.mubr.bf16.gmra.mxu0 %v1750
        %v1811 = vpop.f32.mrf.mxu0
        %v1812 = vadd.f32 0.0, %v1811
        %v1813 = vpop.f32.mrf.mxu0
        %v1814 = vadd.f32 0.0, %v1813
        %v1815 = vpop.f32.mrf.mxu0
        %v1816 = vadd.f32 0.0, %v1815
        %v1817 = vpop.f32.mrf.mxu0
        %v1818 = vadd.f32 0.0, %v1817
        %1819 = vdwg.mxu0
        %1820 = vmatprep.subr.bf16.mxu0 0
        %1821 = vmatpush1.bf16.msra.mxu0 0
        %1822 = vmatprep.subr.bf16.mxu0 0
        %1823 = vmatpush1.bf16.msra.mxu0 0
        %1824 = vmatprep.subr.bf16.mxu0 0
        %1825 = vmatpush1.bf16.msra.mxu0 0
        %1826 = vmatprep.subr.bf16.mxu0 %v1763
        %1827 = vmatpush1.bf16.msra.mxu0 %v1760
        %1828 = vmatprep.subr.bf16.mxu0 %v1703
        %1829 = vmatpush1.bf16.msra.mxu0 %v1702
        %1830 = vmatprep.subr.bf16.mxu0 %v1695
        %1831 = vmatpush1.bf16.msra.mxu0 %v1694
        %1832 = vmatprep.subr.bf16.mxu0 %v1687
        %1833 = vmatpush1.bf16.msra.mxu0 %v1686
        %1834 = vmatprep.subr.bf16.mxu0 %v1679
        %1835 = vmatpush1.bf16.msra.mxu0 %v1678
        %1836 = vmatprep.subr.bf16.mxu0 0
        %1837 = vmatpush2.bf16.msra.mxu0 0
        %1838 = vmatprep.subr.bf16.mxu0 0
        %1839 = vmatpush2.bf16.msra.mxu0 0
        %1840 = vmatprep.subr.bf16.mxu0 0
        %1841 = vmatpush2.bf16.msra.mxu0 0
        %1842 = vmatprep.subr.bf16.mxu0 0
        %1843 = vmatpush2.bf16.msra.mxu0 0
        %1844 = vmatprep.subr.bf16.mxu0 0
        %1845 = vmatpush2.bf16.msra.mxu0 0
        %1846 = vmatprep.subr.bf16.mxu0 0
        %1847 = vmatpush2.bf16.msra.mxu0 0
        %1848 = vmatprep.subr.bf16.mxu0 0
        %1849 = vmatpush2.bf16.msra.mxu0 0
        %1850 = vmatprep.subr.bf16.mxu0 0
        %1851 = vmatpush2.bf16.msra.mxu0 0
        %1852 = vmatprep.mubr.bf16.mxu0 0
        %1853 = vmatmul.mubr.bf16.gmra.mxu0 %v1750
        %v1854 = vpop.f32.mrf.mxu0
        %v1855 = vadd.f32 0.0, %v1854
        %v1856 = vpop.f32.mrf.mxu0
        %v1857 = vadd.f32 0.0, %v1856
        %v1858 = vpop.f32.mrf.mxu0
        %v1859 = vadd.f32 0.0, %v1858
        %v1860 = vpop.f32.mrf.mxu0
        %v1861 = vadd.f32 0.0, %v1860
        %1862 = vdwg.mxu0
        %1863 = vmatprep.subr.bf16.mxu0 0
        %1864 = vmatpush1.bf16.msra.mxu0 0
        %1865 = vmatprep.subr.bf16.mxu0 0
        %1866 = vmatpush1.bf16.msra.mxu0 0
        %1867 = vmatprep.subr.bf16.mxu0 0
        %1868 = vmatpush1.bf16.msra.mxu0 0
        %1869 = vmatprep.subr.bf16.mxu0 %v1769
        %1870 = vmatpush1.bf16.msra.mxu0 %v1766
        %1871 = vmatprep.subr.bf16.mxu0 %v1705
        %1872 = vmatpush1.bf16.msra.mxu0 %v1704
        %1873 = vmatprep.subr.bf16.mxu0 %v1697
        %1874 = vmatpush1.bf16.msra.mxu0 %v1696
        %1875 = vmatprep.subr.bf16.mxu0 %v1689
        %1876 = vmatpush1.bf16.msra.mxu0 %v1688
        %1877 = vmatprep.subr.bf16.mxu0 %v1681
        %1878 = vmatpush1.bf16.msra.mxu0 %v1680
        %1879 = vmatprep.subr.bf16.mxu0 0
        %1880 = vmatpush2.bf16.msra.mxu0 0
        %1881 = vmatprep.subr.bf16.mxu0 0
        %1882 = vmatpush2.bf16.msra.mxu0 0
        %1883 = vmatprep.subr.bf16.mxu0 0
        %1884 = vmatpush2.bf16.msra.mxu0 0
        %1885 = vmatprep.subr.bf16.mxu0 0
        %1886 = vmatpush2.bf16.msra.mxu0 0
        %1887 = vmatprep.subr.bf16.mxu0 0
        %1888 = vmatpush2.bf16.msra.mxu0 0
        %1889 = vmatprep.subr.bf16.mxu0 0
        %1890 = vmatpush2.bf16.msra.mxu0 0
        %1891 = vmatprep.subr.bf16.mxu0 0
        %1892 = vmatpush2.bf16.msra.mxu0 0
        %1893 = vmatprep.subr.bf16.mxu0 0
        %1894 = vmatpush2.bf16.msra.mxu0 0
        %1895 = vmatprep.mubr.bf16.mxu0 0
        %1896 = vmatmul.mubr.bf16.gmra.mxu0 %v1750
        %v1897 = vpop.f32.mrf.mxu0
        %v1898 = vadd.f32 0.0, %v1897
        %v1899 = vpop.f32.mrf.mxu0
        %v1900 = vadd.f32 0.0, %v1899
        %v1901 = vpop.f32.mrf.mxu0
        %v1902 = vadd.f32 0.0, %v1901
        %v1903 = vpop.f32.mrf.mxu0
        %v1904 = vadd.f32 0.0, %v1903
        %1905 = vdwg.mxu0
        %1906 = vmatprep.subr.bf16.mxu0 0
        %1907 = vmatpush1.bf16.msra.mxu0 0
        %1908 = vmatprep.subr.bf16.mxu0 0
        %1909 = vmatpush1.bf16.msra.mxu0 0
        %1910 = vmatprep.subr.bf16.mxu0 0
        %1911 = vmatpush1.bf16.msra.mxu0 0
        %1912 = vmatprep.subr.bf16.mxu0 %v1775
        %1913 = vmatpush1.bf16.msra.mxu0 %v1772
        %1914 = vmatprep.subr.bf16.mxu0 %v1707
        %1915 = vmatpush1.bf16.msra.mxu0 %v1706
        %1916 = vmatprep.subr.bf16.mxu0 %v1699
        %1917 = vmatpush1.bf16.msra.mxu0 %v1698
        %1918 = vmatprep.subr.bf16.mxu0 %v1691
        %1919 = vmatpush1.bf16.msra.mxu0 %v1690
        %1920 = vmatprep.subr.bf16.mxu0 %v1683
        %1921 = vmatpush1.bf16.msra.mxu0 %v1682
        %1922 = vmatprep.subr.bf16.mxu0 0
        %1923 = vmatpush2.bf16.msra.mxu0 0
        %1924 = vmatprep.subr.bf16.mxu0 0
        %1925 = vmatpush2.bf16.msra.mxu0 0
        %1926 = vmatprep.subr.bf16.mxu0 0
        %1927 = vmatpush2.bf16.msra.mxu0 0
        %1928 = vmatprep.subr.bf16.mxu0 0
        %1929 = vmatpush2.bf16.msra.mxu0 0
        %1930 = vmatprep.subr.bf16.mxu0 0
        %1931 = vmatpush2.bf16.msra.mxu0 0
        %1932 = vmatprep.subr.bf16.mxu0 0
        %1933 = vmatpush2.bf16.msra.mxu0 0
        %1934 = vmatprep.subr.bf16.mxu0 0
        %1935 = vmatpush2.bf16.msra.mxu0 0
        %1936 = vmatprep.subr.bf16.mxu0 0
        %1937 = vmatpush2.bf16.msra.mxu0 0
        %1938 = vmatprep.mubr.bf16.mxu0 0
        %1939 = vmatmul.mubr.bf16.gmra.mxu0 %v1750
        %v1940 = vpop.f32.mrf.mxu0
        %v1941 = vadd.f32 0.0, %v1940
        %v1942 = vpop.f32.mrf.mxu0
        %v1943 = vadd.f32 0.0, %v1942
        %v1944 = vpop.f32.mrf.mxu0
        %v1945 = vadd.f32 0.0, %v1944
        %v1946 = vpop.f32.mrf.mxu0
        %v1947 = vadd.f32 0.0, %v1946
        %1948 = vdwg.mxu0
        %1949 = vst [vmem:[#allocation4] sm:$0xff] %v1812
        %1950 = vst [vmem:[#allocation4 + $0x8] sm:$0xff] %v1814
        %1951 = vst [vmem:[#allocation4 + $0x10] sm:$0xff] %v1855
        %1952 = vst [vmem:[#allocation4 + $0x18] sm:$0xff] %v1857
        %1953 = vst [vmem:[#allocation4 + $0x20] sm:$0xff] %v1898
        %1954 = vst [vmem:[#allocation4 + $0x28] sm:$0xff] %v1900
        %1955 = vst [vmem:[#allocation4 + $0x30] sm:$0xff] %v1941
        %1956 = vst [vmem:[#allocation4 + $0x38] sm:$0xff] %v1943
        %1957 = vst [vmem:[#allocation4 + $0x40] sm:$0xff] %v1816
        %1958 = vst [vmem:[#allocation4 + $0x48] sm:$0xff] %v1818
        %1959 = vst [vmem:[#allocation4 + $0x50] sm:$0xff] %v1859
        %1960 = vst [vmem:[#allocation4 + $0x58] sm:$0xff] %v1861
        %1961 = vst [vmem:[#allocation4 + $0x60] sm:$0xff] %v1902
        %1962 = vst [vmem:[#allocation4 + $0x68] sm:$0xff] %v1904
        %1963 = vst [vmem:[#allocation4 + $0x70] sm:$0xff] %v1945
        %1964 = vst [vmem:[#allocation4 + $0x78] sm:$0xff] %v1947
        %v1965 = vld [vmem:[#allocation4] sm:$0xff]
        %v1966 = vld [vmem:[#allocation4 + $0x8] sm:$0xff]
        %v1967 = vld [vmem:[#allocation4 + $0x10] sm:$0xff]
        %v1968 = vld [vmem:[#allocation4 + $0x18] sm:$0xff]
        %v1969 = vld [vmem:[#allocation4 + $0x20] sm:$0xff]
        %v1970 = vld [vmem:[#allocation4 + $0x28] sm:$0xff]
        %v1971 = vld [vmem:[#allocation4 + $0x30] sm:$0xff]
        %v1972 = vld [vmem:[#allocation4 + $0x38] sm:$0xff]
        %v1973 = vld [vmem:[#allocation4 + $0x40] sm:$0xff]
        %v1974 = vld [vmem:[#allocation4 + $0x48] sm:$0xff]
        %v1975 = vld [vmem:[#allocation4 + $0x50] sm:$0xff]
        %v1976 = vld [vmem:[#allocation4 + $0x58] sm:$0xff]
        %v1977 = vld [vmem:[#allocation4 + $0x60] sm:$0xff]
        %v1978 = vld [vmem:[#allocation4 + $0x68] sm:$0xff]
        %v1979 = vld [vmem:[#allocation4 + $0x70] sm:$0xff]
        %v1980 = vld [vmem:[#allocation4 + $0x78] sm:$0xff]
        %v1981 = vld [vmem:[%s4] sm:$0xff]
        %v1982 = vld [vmem:[%s4 + $0x8] sm:$0xff]
        %1984 = vset.pattern.permute.xlu0 0
        %1985 = vperm.xlu0 %1984, %v1981
        %v1986 = vpop.permute.xlu0 %1985
        %1989 = vset.pattern.permute.xlu0 0
        %1990 = vperm.xlu0 %1989, %v1982
        %v1991 = vpop.permute.xlu0 %1990
        %v1993 = vmul.f32 %v1965, %v1986
        %v1994 = vmul.f32 %v1966, %v1986
        %v1995 = vmul.f32 %v1967, %v1986
        %v1996 = vmul.f32 %v1968, %v1986
        %v1997 = vmul.f32 %v1969, %v1986
        %v1998 = vmul.f32 %v1970, %v1986
        %v1999 = vmul.f32 %v1971, %v1986
        %v2000 = vmul.f32 %v1972, %v1986
        %v2001 = vmul.f32 %v1973, %v1991
        %v2002 = vmul.f32 %v1974, %v1991
        %v2003 = vmul.f32 %v1975, %v1991
        %v2004 = vmul.f32 %v1976, %v1991
        %v2005 = vmul.f32 %v1977, %v1991
        %v2006 = vmul.f32 %v1978, %v1991
        %v2007 = vmul.f32 %v1979, %v1991
        %v2008 = vmul.f32 %v1980, %v1991
        %v2009 = vld [vmem:[%s5] sm:$0xff]
        %v2010 = vld [vmem:[%s5 + $0x8] sm:$0xff]
        %2012 = vset.pattern.permute.xlu0 0
        %2013 = vperm.xlu0 %2012, %v2009
        %v2014 = vpop.permute.xlu0 %2013
        %2017 = vset.pattern.permute.xlu0 0
        %2018 = vperm.xlu0 %2017, %v2010
        %v2019 = vpop.permute.xlu0 %2018
        %v2021 = vadd.f32 %v1993, %v2014
        %v2022 = vadd.f32 %v1994, %v2014
        %v2023 = vadd.f32 %v1995, %v2014
        %v2024 = vadd.f32 %v1996, %v2014
        %v2025 = vadd.f32 %v1997, %v2014
        %v2026 = vadd.f32 %v1998, %v2014
        %v2027 = vadd.f32 %v1999, %v2014
        %v2028 = vadd.f32 %v2000, %v2014
        %v2029 = vadd.f32 %v2001, %v2019
        %v2030 = vadd.f32 %v2002, %v2019
        %v2031 = vadd.f32 %v2003, %v2019
        %v2032 = vadd.f32 %v2004, %v2019
        %v2033 = vadd.f32 %v2005, %v2019
        %v2034 = vadd.f32 %v2006, %v2019
        %v2035 = vadd.f32 %v2007, %v2019
        %v2036 = vadd.f32 %v2008, %v2019
        %v2037 = vmax.f32 %v2021, 0.0
        %v2038 = vmax.f32 %v2022, 0.0
        %v2039 = vmax.f32 %v2023, 0.0
        %v2040 = vmax.f32 %v2024, 0.0
        %v2041 = vmax.f32 %v2025, 0.0
        %v2042 = vmax.f32 %v2026, 0.0
        %v2043 = vmax.f32 %v2027, 0.0
        %v2044 = vmax.f32 %v2028, 0.0
        %v2045 = vmax.f32 %v2029, 0.0
        %v2046 = vmax.f32 %v2030, 0.0
        %v2047 = vmax.f32 %v2031, 0.0
        %v2048 = vmax.f32 %v2032, 0.0
        %v2049 = vmax.f32 %v2033, 0.0
        %v2050 = vmax.f32 %v2034, 0.0
        %v2051 = vmax.f32 %v2035, 0.0
        %v2052 = vmax.f32 %v2036, 0.0
        %2053 = vst [vmem:[#allocation5] sm:$0xff] %v2037
        %2054 = vst [vmem:[#allocation5 + $0x8] sm:$0xff] %v2038
        %2055 = vst [vmem:[#allocation5 + $0x10] sm:$0xff] %v2039
        %2056 = vst [vmem:[#allocation5 + $0x18] sm:$0xff] %v2040
        %2057 = vst [vmem:[#allocation5 + $0x20] sm:$0xff] %v2041
        %2058 = vst [vmem:[#allocation5 + $0x28] sm:$0xff] %v2042
        %2059 = vst [vmem:[#allocation5 + $0x30] sm:$0xff] %v2043
        %2060 = vst [vmem:[#allocation5 + $0x38] sm:$0xff] %v2044
        %2061 = vst [vmem:[#allocation5 + $0x40] sm:$0xff] %v2045
        %2062 = vst [vmem:[#allocation5 + $0x48] sm:$0xff] %v2046
        %2063 = vst [vmem:[#allocation5 + $0x50] sm:$0xff] %v2047
        %2064 = vst [vmem:[#allocation5 + $0x58] sm:$0xff] %v2048
        %2065 = vst [vmem:[#allocation5 + $0x60] sm:$0xff] %v2049
        %2066 = vst [vmem:[#allocation5 + $0x68] sm:$0xff] %v2050
        %2067 = vst [vmem:[#allocation5 + $0x70] sm:$0xff] %v2051
        %2068 = vst [vmem:[#allocation5 + $0x78] sm:$0xff] %v2052
        %v2069 = vld [vmem:[#allocation5] sm:$0xff]
        %v2070 = vld [vmem:[#allocation5 + $0x8] sm:$0xff]
        %v2071 = vld [vmem:[#allocation5 + $0x10] sm:$0xff]
        %v2072 = vld [vmem:[#allocation5 + $0x18] sm:$0xff]
        %v2073 = vld [vmem:[#allocation5 + $0x20] sm:$0xff]
        %v2074 = vld [vmem:[#allocation5 + $0x28] sm:$0xff]
        %v2075 = vld [vmem:[#allocation5 + $0x30] sm:$0xff]
        %v2076 = vld [vmem:[#allocation5 + $0x38] sm:$0xff]
        %v2077 = vld [vmem:[#allocation5 + $0x40] sm:$0xff]
        %v2078 = vld [vmem:[#allocation5 + $0x48] sm:$0xff]
        %v2079 = vld [vmem:[#allocation5 + $0x50] sm:$0xff]
        %v2080 = vld [vmem:[#allocation5 + $0x58] sm:$0xff]
        %v2081 = vld [vmem:[#allocation5 + $0x60] sm:$0xff]
        %v2082 = vld [vmem:[#allocation5 + $0x68] sm:$0xff]
        %v2083 = vld [vmem:[#allocation5 + $0x70] sm:$0xff]
        %v2084 = vld [vmem:[#allocation5 + $0x78] sm:$0xff]
        %2085 = vrot.lane.b32.xlu0 %v2069, 17
        %v2086 = vpop.permute.xlu0 %2085
        %2087 = vrot.lane.b32.xlu0 %v2077, 17
        %v2088 = vpop.permute.xlu0 %2087
        %2089 = vrot.lane.b32.xlu0 %v2070, 17
        %v2090 = vpop.permute.xlu0 %2089
        %2091 = vrot.lane.b32.xlu0 %v2078, 17
        %v2092 = vpop.permute.xlu0 %2091
        %2093 = vrot.lane.b32.xlu0 %v2071, 17
        %v2094 = vpop.permute.xlu0 %2093
        %2095 = vrot.lane.b32.xlu0 %v2079, 17
        %v2096 = vpop.permute.xlu0 %2095
        %2097 = vrot.lane.b32.xlu0 %v2072, 17
        %v2098 = vpop.permute.xlu0 %2097
        %2099 = vrot.lane.b32.xlu0 %v2080, 17
        %v2100 = vpop.permute.xlu0 %2099
        %2101 = vrot.lane.b32.xlu0 %v2073, 17
        %v2102 = vpop.permute.xlu0 %2101
        %2103 = vrot.lane.b32.xlu0 %v2081, 17
        %v2104 = vpop.permute.xlu0 %2103
        %2105 = vrot.lane.b32.xlu0 %v2074, 17
        %v2106 = vpop.permute.xlu0 %2105
        %2107 = vrot.lane.b32.xlu0 %v2082, 17
        %v2108 = vpop.permute.xlu0 %2107
        %2109 = vrot.lane.b32.xlu0 %v2075, 17
        %v2110 = vpop.permute.xlu0 %2109
        %2111 = vrot.lane.b32.xlu0 %v2083, 17
        %v2112 = vpop.permute.xlu0 %2111
        %2113 = vrot.lane.b32.xlu0 %v2076, 17
        %v2114 = vpop.permute.xlu0 %2113
        %2115 = vrot.lane.b32.xlu0 %v2084, 17
        %v2116 = vpop.permute.xlu0 %2115
        %v2117 = vsel %vm484, %v2110, %v2114
        %v2118 = vsel %vm484, %v2112, %v2116
        %v2119 = vsel %vm484, %v2106, %v2110
        %v2120 = vsel %vm484, %v2108, %v2112
        %v2121 = vsel %vm484, %v2102, %v2106
        %v2122 = vsel %vm484, %v2104, %v2108
        %v2123 = vsel %vm484, %v2098, %v2102
        %v2124 = vsel %vm484, %v2100, %v2104
        %v2125 = vsel %vm484, %v2094, %v2098
        %v2126 = vsel %vm484, %v2096, %v2100
        %v2127 = vsel %vm484, %v2090, %v2094
        %v2128 = vsel %vm484, %v2092, %v2096
        %v2129 = vsel %vm484, %v2086, %v2090
        %v2130 = vsel %vm484, %v2088, %v2092
        %v2131 = vsel %vm484, %v2114, %v2086
        %v2132 = vsel %vm484, %v2116, %v2088
        %v2133 = vld [vmem:[#allocation10] ss:$8 sm:$0xf]
        %v2134 = vld [vmem:[#allocation10] ss:$8 sm:$0xf0]
        %v2135 = vor.u32 %v2133, %v2134
        %v2137 = vlaneseq
        %v2138 = vshrl.u32 %v2137, 7
        %v2139 = vsub.s32 0, %v2138
        %v2140 = vrot.slane %v2135, %v2139
        %v2141 = vlaneseq
        %v2142 = vshrl.u32 %v2141, 7
        %v2143 = vsub.s32 1, %v2142
        %v2144 = vrot.slane %v2135, %v2143
        %v2145 = vlaneseq
        %v2146 = vshrl.u32 %v2145, 7
        %v2147 = vsub.s32 2, %v2146
        %v2148 = vrot.slane %v2135, %v2147
        %v2149 = vlaneseq
        %v2150 = vshrl.u32 %v2149, 7
        %v2151 = vsub.s32 3, %v2150
        %v2152 = vrot.slane %v2135, %v2151
        %v2153 = vlaneseq
        %v2154 = vshrl.u32 %v2153, 7
        %v2155 = vsub.s32 4, %v2154
        %v2156 = vrot.slane %v2135, %v2155
        %v2157 = vlaneseq
        %v2158 = vshrl.u32 %v2157, 7
        %v2159 = vsub.s32 5, %v2158
        %v2160 = vrot.slane %v2135, %v2159
        %v2161 = vlaneseq
        %v2162 = vshrl.u32 %v2161, 7
        %v2163 = vsub.s32 6, %v2162
        %v2164 = vrot.slane %v2135, %v2163
        %v2165 = vlaneseq
        %v2166 = vshrl.u32 %v2165, 7
        %v2167 = vsub.s32 7, %v2166
        %v2168 = vrot.slane %v2135, %v2167
        %v2177 = vmul.f32 %v2131, %v2140
        %v2178 = vmul.f32 %v2129, %v2144
        %v2179 = vmul.f32 %v2127, %v2148
        %v2180 = vmul.f32 %v2125, %v2152
        %v2181 = vmul.f32 %v2123, %v2156
        %v2182 = vmul.f32 %v2121, %v2160
        %v2183 = vmul.f32 %v2119, %v2164
        %v2184 = vmul.f32 %v2117, %v2168
        %v2185 = vmul.f32 %v2132, %v2140
        %v2186 = vmul.f32 %v2130, %v2144
        %v2187 = vmul.f32 %v2128, %v2148
        %v2188 = vmul.f32 %v2126, %v2152
        %v2189 = vmul.f32 %v2124, %v2156
        %v2190 = vmul.f32 %v2122, %v2160
        %v2191 = vmul.f32 %v2120, %v2164
        %v2192 = vmul.f32 %v2118, %v2168
        %v2193 = vpack.c.bf16 %v2185, %v2177
        %v2194 = vpack.c.bf16 %v2186, %v2178
        %v2195 = vpack.c.bf16 %v2187, %v2179
        %v2196 = vpack.c.bf16 %v2188, %v2180
        %v2197 = vpack.c.bf16 %v2189, %v2181
        %v2198 = vpack.c.bf16 %v2190, %v2182
        %v2199 = vpack.c.bf16 %v2191, %v2183
        %v2200 = vpack.c.bf16 %v2192, %v2184
        %v2209 = vunpack.c.l.b16 %v2193
        %v2210 = vunpack.c.l.b16 %v2194
        %v2211 = vunpack.c.l.b16 %v2195
        %v2212 = vunpack.c.l.b16 %v2196
        %v2213 = vunpack.c.l.b16 %v2197
        %v2214 = vunpack.c.l.b16 %v2198
        %v2215 = vunpack.c.l.b16 %v2199
        %v2216 = vunpack.c.l.b16 %v2200
        %v2217 = vunpack.c.h.b16 %v2193
        %v2218 = vunpack.c.h.b16 %v2194
        %v2219 = vunpack.c.h.b16 %v2195
        %v2220 = vunpack.c.h.b16 %v2196
        %v2221 = vunpack.c.h.b16 %v2197
        %v2222 = vunpack.c.h.b16 %v2198
        %v2223 = vunpack.c.h.b16 %v2199
        %v2224 = vunpack.c.h.b16 %v2200
        %v2225 = vpack.c.b16 %v2210, %v2209
        %v2226 = vpack.c.b16 %v2212, %v2211
        %v2227 = vpack.c.b16 %v2214, %v2213
        %v2228 = vpack.c.b16 %v2216, %v2215
        %v2229 = vpack.c.b16 %v2218, %v2217
        %v2230 = vpack.c.b16 %v2220, %v2219
        %v2231 = vpack.c.b16 %v2222, %v2221
        %v2232 = vpack.c.b16 %v2224, %v2223
        %2241 = vst [vmem:[#allocation6] sm:$0xff] %v2225
        %2242 = vst [vmem:[#allocation6 + $0x8] sm:$0xff] %v2226
        %2243 = vst [vmem:[#allocation6 + $0x10] sm:$0xff] %v2227
        %2244 = vst [vmem:[#allocation6 + $0x18] sm:$0xff] %v2228
        %2245 = vst [vmem:[#allocation6 + $0x20] sm:$0xff] %v2229
        %2246 = vst [vmem:[#allocation6 + $0x28] sm:$0xff] %v2230
        %2247 = vst [vmem:[#allocation6 + $0x30] sm:$0xff] %v2231
        %2248 = vst [vmem:[#allocation6 + $0x38] sm:$0xff] %v2232
        %v2249 = vld [vmem:[#allocation5] sm:$0xff]
        %v2250 = vld [vmem:[#allocation5 + $0x8] sm:$0xff]
        %v2251 = vld [vmem:[#allocation5 + $0x10] sm:$0xff]
        %v2252 = vld [vmem:[#allocation5 + $0x18] sm:$0xff]
        %v2253 = vld [vmem:[#allocation5 + $0x20] sm:$0xff]
        %v2254 = vld [vmem:[#allocation5 + $0x28] sm:$0xff]
        %v2255 = vld [vmem:[#allocation5 + $0x30] sm:$0xff]
        %v2256 = vld [vmem:[#allocation5 + $0x38] sm:$0xff]
        %v2257 = vld [vmem:[#allocation5 + $0x40] sm:$0xff]
        %v2258 = vld [vmem:[#allocation5 + $0x48] sm:$0xff]
        %v2259 = vld [vmem:[#allocation5 + $0x50] sm:$0xff]
        %v2260 = vld [vmem:[#allocation5 + $0x58] sm:$0xff]
        %v2261 = vld [vmem:[#allocation5 + $0x60] sm:$0xff]
        %v2262 = vld [vmem:[#allocation5 + $0x68] sm:$0xff]
        %v2263 = vld [vmem:[#allocation5 + $0x70] sm:$0xff]
        %v2264 = vld [vmem:[#allocation5 + $0x78] sm:$0xff]
        %2265 = vrot.lane.b32.xlu0 %v2249, 16
        %v2266 = vpop.permute.xlu0 %2265
        %2267 = vrot.lane.b32.xlu0 %v2257, 16
        %v2268 = vpop.permute.xlu0 %2267
        %2269 = vrot.lane.b32.xlu0 %v2250, 16
        %v2270 = vpop.permute.xlu0 %2269
        %2271 = vrot.lane.b32.xlu0 %v2258, 16
        %v2272 = vpop.permute.xlu0 %2271
        %2273 = vrot.lane.b32.xlu0 %v2251, 16
        %v2274 = vpop.permute.xlu0 %2273
        %2275 = vrot.lane.b32.xlu0 %v2259, 16
        %v2276 = vpop.permute.xlu0 %2275
        %2277 = vrot.lane.b32.xlu0 %v2252, 16
        %v2278 = vpop.permute.xlu0 %2277
        %2279 = vrot.lane.b32.xlu0 %v2260, 16
        %v2280 = vpop.permute.xlu0 %2279
        %2281 = vrot.lane.b32.xlu0 %v2253, 16
        %v2282 = vpop.permute.xlu0 %2281
        %2283 = vrot.lane.b32.xlu0 %v2261, 16
        %v2284 = vpop.permute.xlu0 %2283
        %2285 = vrot.lane.b32.xlu0 %v2254, 16
        %v2286 = vpop.permute.xlu0 %2285
        %2287 = vrot.lane.b32.xlu0 %v2262, 16
        %v2288 = vpop.permute.xlu0 %2287
        %2289 = vrot.lane.b32.xlu0 %v2255, 16
        %v2290 = vpop.permute.xlu0 %2289
        %2291 = vrot.lane.b32.xlu0 %v2263, 16
        %v2292 = vpop.permute.xlu0 %2291
        %2293 = vrot.lane.b32.xlu0 %v2256, 16
        %v2294 = vpop.permute.xlu0 %2293
        %2295 = vrot.lane.b32.xlu0 %v2264, 16
        %v2296 = vpop.permute.xlu0 %2295
        %v2297 = vsel %vm514, %v2290, %v2294
        %v2298 = vsel %vm514, %v2292, %v2296
        %v2299 = vsel %vm514, %v2286, %v2290
        %v2300 = vsel %vm514, %v2288, %v2292
        %v2301 = vsel %vm514, %v2282, %v2286
        %v2302 = vsel %vm514, %v2284, %v2288
        %v2303 = vsel %vm514, %v2278, %v2282
        %v2304 = vsel %vm514, %v2280, %v2284
        %v2305 = vsel %vm514, %v2274, %v2278
        %v2306 = vsel %vm514, %v2276, %v2280
        %v2307 = vsel %vm514, %v2270, %v2274
        %v2308 = vsel %vm514, %v2272, %v2276
        %v2309 = vsel %vm514, %v2266, %v2270
        %v2310 = vsel %vm514, %v2268, %v2272
        %v2311 = vsel %vm514, %v2294, %v2266
        %v2312 = vsel %vm514, %v2296, %v2268
        %s2313 = scalar_lea.vmem [#allocation10], 1
        %v2314 = vld [vmem:[%s2313] ss:$8 sm:$0xf]
        %v2315 = vld [vmem:[%s2313] ss:$8 sm:$0xf0]
        %v2316 = vor.u32 %v2314, %v2315
        %v2318 = vlaneseq
        %v2319 = vshrl.u32 %v2318, 7
        %v2320 = vsub.s32 0, %v2319
        %v2321 = vrot.slane %v2316, %v2320
        %v2322 = vlaneseq
        %v2323 = vshrl.u32 %v2322, 7
        %v2324 = vsub.s32 1, %v2323
        %v2325 = vrot.slane %v2316, %v2324
        %v2326 = vlaneseq
        %v2327 = vshrl.u32 %v2326, 7
        %v2328 = vsub.s32 2, %v2327
        %v2329 = vrot.slane %v2316, %v2328
        %v2330 = vlaneseq
        %v2331 = vshrl.u32 %v2330, 7
        %v2332 = vsub.s32 3, %v2331
        %v2333 = vrot.slane %v2316, %v2332
        %v2334 = vlaneseq
        %v2335 = vshrl.u32 %v2334, 7
        %v2336 = vsub.s32 4, %v2335
        %v2337 = vrot.slane %v2316, %v2336
        %v2338 = vlaneseq
        %v2339 = vshrl.u32 %v2338, 7
        %v2340 = vsub.s32 5, %v2339
        %v2341 = vrot.slane %v2316, %v2340
        %v2342 = vlaneseq
        %v2343 = vshrl.u32 %v2342, 7
        %v2344 = vsub.s32 6, %v2343
        %v2345 = vrot.slane %v2316, %v2344
        %v2346 = vlaneseq
        %v2347 = vshrl.u32 %v2346, 7
        %v2348 = vsub.s32 7, %v2347
        %v2349 = vrot.slane %v2316, %v2348
        %v2358 = vmul.f32 %v2311, %v2321
        %v2359 = vmul.f32 %v2309, %v2325
        %v2360 = vmul.f32 %v2307, %v2329
        %v2361 = vmul.f32 %v2305, %v2333
        %v2362 = vmul.f32 %v2303, %v2337
        %v2363 = vmul.f32 %v2301, %v2341
        %v2364 = vmul.f32 %v2299, %v2345
        %v2365 = vmul.f32 %v2297, %v2349
        %v2366 = vmul.f32 %v2312, %v2321
        %v2367 = vmul.f32 %v2310, %v2325
        %v2368 = vmul.f32 %v2308, %v2329
        %v2369 = vmul.f32 %v2306, %v2333
        %v2370 = vmul.f32 %v2304, %v2337
        %v2371 = vmul.f32 %v2302, %v2341
        %v2372 = vmul.f32 %v2300, %v2345
        %v2373 = vmul.f32 %v2298, %v2349
        %v2374 = vpack.c.bf16 %v2366, %v2358
        %v2375 = vpack.c.bf16 %v2367, %v2359
        %v2376 = vpack.c.bf16 %v2368, %v2360
        %v2377 = vpack.c.bf16 %v2369, %v2361
        %v2378 = vpack.c.bf16 %v2370, %v2362
        %v2379 = vpack.c.bf16 %v2371, %v2363
        %v2380 = vpack.c.bf16 %v2372, %v2364
        %v2381 = vpack.c.bf16 %v2373, %v2365
        %v2390 = vunpack.c.l.b16 %v2374
        %v2391 = vunpack.c.l.b16 %v2375
        %v2392 = vunpack.c.l.b16 %v2376
        %v2393 = vunpack.c.l.b16 %v2377
        %v2394 = vunpack.c.l.b16 %v2378
        %v2395 = vunpack.c.l.b16 %v2379
        %v2396 = vunpack.c.l.b16 %v2380
        %v2397 = vunpack.c.l.b16 %v2381
        %v2398 = vunpack.c.h.b16 %v2374
        %v2399 = vunpack.c.h.b16 %v2375
        %v2400 = vunpack.c.h.b16 %v2376
        %v2401 = vunpack.c.h.b16 %v2377
        %v2402 = vunpack.c.h.b16 %v2378
        %v2403 = vunpack.c.h.b16 %v2379
        %v2404 = vunpack.c.h.b16 %v2380
        %v2405 = vunpack.c.h.b16 %v2381
        %v2406 = vpack.c.b16 %v2391, %v2390
        %v2407 = vpack.c.b16 %v2393, %v2392
        %v2408 = vpack.c.b16 %v2395, %v2394
        %v2409 = vpack.c.b16 %v2397, %v2396
        %v2410 = vpack.c.b16 %v2399, %v2398
        %v2411 = vpack.c.b16 %v2401, %v2400
        %v2412 = vpack.c.b16 %v2403, %v2402
        %v2413 = vpack.c.b16 %v2405, %v2404
        %2422 = vst [vmem:[#allocation6 + $0x40] sm:$0xff] %v2406
        %2423 = vst [vmem:[#allocation6 + $0x48] sm:$0xff] %v2407
        %2424 = vst [vmem:[#allocation6 + $0x50] sm:$0xff] %v2408
        %2425 = vst [vmem:[#allocation6 + $0x58] sm:$0xff] %v2409
        %2426 = vst [vmem:[#allocation6 + $0x60] sm:$0xff] %v2410
        %2427 = vst [vmem:[#allocation6 + $0x68] sm:$0xff] %v2411
        %2428 = vst [vmem:[#allocation6 + $0x70] sm:$0xff] %v2412
        %2429 = vst [vmem:[#allocation6 + $0x78] sm:$0xff] %v2413
        %v2430 = vld [vmem:[#allocation5] sm:$0xff]
        %v2431 = vld [vmem:[#allocation5 + $0x8] sm:$0xff]
        %v2432 = vld [vmem:[#allocation5 + $0x10] sm:$0xff]
        %v2433 = vld [vmem:[#allocation5 + $0x18] sm:$0xff]
        %v2434 = vld [vmem:[#allocation5 + $0x20] sm:$0xff]
        %v2435 = vld [vmem:[#allocation5 + $0x28] sm:$0xff]
        %v2436 = vld [vmem:[#allocation5 + $0x30] sm:$0xff]
        %v2437 = vld [vmem:[#allocation5 + $0x38] sm:$0xff]
        %v2438 = vld [vmem:[#allocation5 + $0x40] sm:$0xff]
        %v2439 = vld [vmem:[#allocation5 + $0x48] sm:$0xff]
        %v2440 = vld [vmem:[#allocation5 + $0x50] sm:$0xff]
        %v2441 = vld [vmem:[#allocation5 + $0x58] sm:$0xff]
        %v2442 = vld [vmem:[#allocation5 + $0x60] sm:$0xff]
        %v2443 = vld [vmem:[#allocation5 + $0x68] sm:$0xff]
        %v2444 = vld [vmem:[#allocation5 + $0x70] sm:$0xff]
        %v2445 = vld [vmem:[#allocation5 + $0x78] sm:$0xff]
        %2446 = vrot.lane.b32.xlu0 %v2430, 15
        %v2447 = vpop.permute.xlu0 %2446
        %2448 = vrot.lane.b32.xlu0 %v2438, 15
        %v2449 = vpop.permute.xlu0 %2448
        %2450 = vrot.lane.b32.xlu0 %v2431, 15
        %v2451 = vpop.permute.xlu0 %2450
        %2452 = vrot.lane.b32.xlu0 %v2439, 15
        %v2453 = vpop.permute.xlu0 %2452
        %2454 = vrot.lane.b32.xlu0 %v2432, 15
        %v2455 = vpop.permute.xlu0 %2454
        %2456 = vrot.lane.b32.xlu0 %v2440, 15
        %v2457 = vpop.permute.xlu0 %2456
        %2458 = vrot.lane.b32.xlu0 %v2433, 15
        %v2459 = vpop.permute.xlu0 %2458
        %2460 = vrot.lane.b32.xlu0 %v2441, 15
        %v2461 = vpop.permute.xlu0 %2460
        %2462 = vrot.lane.b32.xlu0 %v2434, 15
        %v2463 = vpop.permute.xlu0 %2462
        %2464 = vrot.lane.b32.xlu0 %v2442, 15
        %v2465 = vpop.permute.xlu0 %2464
        %2466 = vrot.lane.b32.xlu0 %v2435, 15
        %v2467 = vpop.permute.xlu0 %2466
        %2468 = vrot.lane.b32.xlu0 %v2443, 15
        %v2469 = vpop.permute.xlu0 %2468
        %2470 = vrot.lane.b32.xlu0 %v2436, 15
        %v2471 = vpop.permute.xlu0 %2470
        %2472 = vrot.lane.b32.xlu0 %v2444, 15
        %v2473 = vpop.permute.xlu0 %2472
        %2474 = vrot.lane.b32.xlu0 %v2437, 15
        %v2475 = vpop.permute.xlu0 %2474
        %2476 = vrot.lane.b32.xlu0 %v2445, 15
        %v2477 = vpop.permute.xlu0 %2476
        %v2478 = vsel %vm545, %v2471, %v2475
        %v2479 = vsel %vm545, %v2473, %v2477
        %v2480 = vsel %vm545, %v2467, %v2471
        %v2481 = vsel %vm545, %v2469, %v2473
        %v2482 = vsel %vm545, %v2463, %v2467
        %v2483 = vsel %vm545, %v2465, %v2469
        %v2484 = vsel %vm545, %v2459, %v2463
        %v2485 = vsel %vm545, %v2461, %v2465
        %v2486 = vsel %vm545, %v2455, %v2459
        %v2487 = vsel %vm545, %v2457, %v2461
        %v2488 = vsel %vm545, %v2451, %v2455
        %v2489 = vsel %vm545, %v2453, %v2457
        %v2490 = vsel %vm545, %v2447, %v2451
        %v2491 = vsel %vm545, %v2449, %v2453
        %v2492 = vsel %vm545, %v2475, %v2447
        %v2493 = vsel %vm545, %v2477, %v2449
        %s2494 = scalar_lea.vmem [#allocation10], 2
        %v2495 = vld [vmem:[%s2494] ss:$8 sm:$0xf]
        %v2496 = vld [vmem:[%s2494] ss:$8 sm:$0xf0]
        %v2497 = vor.u32 %v2495, %v2496
        %v2499 = vlaneseq
        %v2500 = vshrl.u32 %v2499, 7
        %v2501 = vsub.s32 0, %v2500
        %v2502 = vrot.slane %v2497, %v2501
        %v2503 = vlaneseq
        %v2504 = vshrl.u32 %v2503, 7
        %v2505 = vsub.s32 1, %v2504
        %v2506 = vrot.slane %v2497, %v2505
        %v2507 = vlaneseq
        %v2508 = vshrl.u32 %v2507, 7
        %v2509 = vsub.s32 2, %v2508
        %v2510 = vrot.slane %v2497, %v2509
        %v2511 = vlaneseq
        %v2512 = vshrl.u32 %v2511, 7
        %v2513 = vsub.s32 3, %v2512
        %v2514 = vrot.slane %v2497, %v2513
        %v2515 = vlaneseq
        %v2516 = vshrl.u32 %v2515, 7
        %v2517 = vsub.s32 4, %v2516
        %v2518 = vrot.slane %v2497, %v2517
        %v2519 = vlaneseq
        %v2520 = vshrl.u32 %v2519, 7
        %v2521 = vsub.s32 5, %v2520
        %v2522 = vrot.slane %v2497, %v2521
        %v2523 = vlaneseq
        %v2524 = vshrl.u32 %v2523, 7
        %v2525 = vsub.s32 6, %v2524
        %v2526 = vrot.slane %v2497, %v2525
        %v2527 = vlaneseq
        %v2528 = vshrl.u32 %v2527, 7
        %v2529 = vsub.s32 7, %v2528
        %v2530 = vrot.slane %v2497, %v2529
        %v2539 = vmul.f32 %v2492, %v2502
        %v2540 = vmul.f32 %v2490, %v2506
        %v2541 = vmul.f32 %v2488, %v2510
        %v2542 = vmul.f32 %v2486, %v2514
        %v2543 = vmul.f32 %v2484, %v2518
        %v2544 = vmul.f32 %v2482, %v2522
        %v2545 = vmul.f32 %v2480, %v2526
        %v2546 = vmul.f32 %v2478, %v2530
        %v2547 = vmul.f32 %v2493, %v2502
        %v2548 = vmul.f32 %v2491, %v2506
        %v2549 = vmul.f32 %v2489, %v2510
        %v2550 = vmul.f32 %v2487, %v2514
        %v2551 = vmul.f32 %v2485, %v2518
        %v2552 = vmul.f32 %v2483, %v2522
        %v2553 = vmul.f32 %v2481, %v2526
        %v2554 = vmul.f32 %v2479, %v2530
        %v2555 = vpack.c.bf16 %v2547, %v2539
        %v2556 = vpack.c.bf16 %v2548, %v2540
        %v2557 = vpack.c.bf16 %v2549, %v2541
        %v2558 = vpack.c.bf16 %v2550, %v2542
        %v2559 = vpack.c.bf16 %v2551, %v2543
        %v2560 = vpack.c.bf16 %v2552, %v2544
        %v2561 = vpack.c.bf16 %v2553, %v2545
        %v2562 = vpack.c.bf16 %v2554, %v2546
        %v2571 = vunpack.c.l.b16 %v2555
        %v2572 = vunpack.c.l.b16 %v2556
        %v2573 = vunpack.c.l.b16 %v2557
        %v2574 = vunpack.c.l.b16 %v2558
        %v2575 = vunpack.c.l.b16 %v2559
        %v2576 = vunpack.c.l.b16 %v2560
        %v2577 = vunpack.c.l.b16 %v2561
        %v2578 = vunpack.c.l.b16 %v2562
        %v2579 = vunpack.c.h.b16 %v2555
        %v2580 = vunpack.c.h.b16 %v2556
        %v2581 = vunpack.c.h.b16 %v2557
        %v2582 = vunpack.c.h.b16 %v2558
        %v2583 = vunpack.c.h.b16 %v2559
        %v2584 = vunpack.c.h.b16 %v2560
        %v2585 = vunpack.c.h.b16 %v2561
        %v2586 = vunpack.c.h.b16 %v2562
        %v2587 = vpack.c.b16 %v2572, %v2571
        %v2588 = vpack.c.b16 %v2574, %v2573
        %v2589 = vpack.c.b16 %v2576, %v2575
        %v2590 = vpack.c.b16 %v2578, %v2577
        %v2591 = vpack.c.b16 %v2580, %v2579
        %v2592 = vpack.c.b16 %v2582, %v2581
        %v2593 = vpack.c.b16 %v2584, %v2583
        %v2594 = vpack.c.b16 %v2586, %v2585
        %2603 = vst [vmem:[#allocation6 + $0x80] sm:$0xff] %v2587
        %2604 = vst [vmem:[#allocation6 + $0x88] sm:$0xff] %v2588
        %2605 = vst [vmem:[#allocation6 + $0x90] sm:$0xff] %v2589
        %2606 = vst [vmem:[#allocation6 + $0x98] sm:$0xff] %v2590
        %2607 = vst [vmem:[#allocation6 + $0xa0] sm:$0xff] %v2591
        %2608 = vst [vmem:[#allocation6 + $0xa8] sm:$0xff] %v2592
        %2609 = vst [vmem:[#allocation6 + $0xb0] sm:$0xff] %v2593
        %2610 = vst [vmem:[#allocation6 + $0xb8] sm:$0xff] %v2594
        %v2611 = vld [vmem:[#allocation5] sm:$0xff]
        %v2612 = vld [vmem:[#allocation5 + $0x8] sm:$0xff]
        %v2613 = vld [vmem:[#allocation5 + $0x10] sm:$0xff]
        %v2614 = vld [vmem:[#allocation5 + $0x18] sm:$0xff]
        %v2615 = vld [vmem:[#allocation5 + $0x20] sm:$0xff]
        %v2616 = vld [vmem:[#allocation5 + $0x28] sm:$0xff]
        %v2617 = vld [vmem:[#allocation5 + $0x30] sm:$0xff]
        %v2618 = vld [vmem:[#allocation5 + $0x38] sm:$0xff]
        %v2619 = vld [vmem:[#allocation5 + $0x40] sm:$0xff]
        %v2620 = vld [vmem:[#allocation5 + $0x48] sm:$0xff]
        %v2621 = vld [vmem:[#allocation5 + $0x50] sm:$0xff]
        %v2622 = vld [vmem:[#allocation5 + $0x58] sm:$0xff]
        %v2623 = vld [vmem:[#allocation5 + $0x60] sm:$0xff]
        %v2624 = vld [vmem:[#allocation5 + $0x68] sm:$0xff]
        %v2625 = vld [vmem:[#allocation5 + $0x70] sm:$0xff]
        %v2626 = vld [vmem:[#allocation5 + $0x78] sm:$0xff]
        %2627 = vrot.lane.b32.xlu0 %v2611, 1
        %v2628 = vpop.permute.xlu0 %2627
        %2629 = vrot.lane.b32.xlu0 %v2619, 1
        %v2630 = vpop.permute.xlu0 %2629
        %2631 = vrot.lane.b32.xlu0 %v2612, 1
        %v2632 = vpop.permute.xlu0 %2631
        %2633 = vrot.lane.b32.xlu0 %v2620, 1
        %v2634 = vpop.permute.xlu0 %2633
        %2635 = vrot.lane.b32.xlu0 %v2613, 1
        %v2636 = vpop.permute.xlu0 %2635
        %2637 = vrot.lane.b32.xlu0 %v2621, 1
        %v2638 = vpop.permute.xlu0 %2637
        %2639 = vrot.lane.b32.xlu0 %v2614, 1
        %v2640 = vpop.permute.xlu0 %2639
        %2641 = vrot.lane.b32.xlu0 %v2622, 1
        %v2642 = vpop.permute.xlu0 %2641
        %2643 = vrot.lane.b32.xlu0 %v2615, 1
        %v2644 = vpop.permute.xlu0 %2643
        %2645 = vrot.lane.b32.xlu0 %v2623, 1
        %v2646 = vpop.permute.xlu0 %2645
        %2647 = vrot.lane.b32.xlu0 %v2616, 1
        %v2648 = vpop.permute.xlu0 %2647
        %2649 = vrot.lane.b32.xlu0 %v2624, 1
        %v2650 = vpop.permute.xlu0 %2649
        %2651 = vrot.lane.b32.xlu0 %v2617, 1
        %v2652 = vpop.permute.xlu0 %2651
        %2653 = vrot.lane.b32.xlu0 %v2625, 1
        %v2654 = vpop.permute.xlu0 %2653
        %2655 = vrot.lane.b32.xlu0 %v2618, 1
        %v2656 = vpop.permute.xlu0 %2655
        %2657 = vrot.lane.b32.xlu0 %v2626, 1
        %v2658 = vpop.permute.xlu0 %2657
        %v2659 = vsel %vm576, %v2652, %v2656
        %v2660 = vsel %vm576, %v2654, %v2658
        %v2661 = vsel %vm576, %v2648, %v2652
        %v2662 = vsel %vm576, %v2650, %v2654
        %v2663 = vsel %vm576, %v2644, %v2648
        %v2664 = vsel %vm576, %v2646, %v2650
        %v2665 = vsel %vm576, %v2640, %v2644
        %v2666 = vsel %vm576, %v2642, %v2646
        %v2667 = vsel %vm576, %v2636, %v2640
        %v2668 = vsel %vm576, %v2638, %v2642
        %v2669 = vsel %vm576, %v2632, %v2636
        %v2670 = vsel %vm576, %v2634, %v2638
        %v2671 = vsel %vm576, %v2628, %v2632
        %v2672 = vsel %vm576, %v2630, %v2634
        %v2673 = vsel %vm576, %v2656, %v2628
        %v2674 = vsel %vm576, %v2658, %v2630
        %s2675 = scalar_lea.vmem [#allocation10], 3
        %v2676 = vld [vmem:[%s2675] ss:$8 sm:$0xf]
        %v2677 = vld [vmem:[%s2675] ss:$8 sm:$0xf0]
        %v2678 = vor.u32 %v2676, %v2677
        %v2680 = vlaneseq
        %v2681 = vshrl.u32 %v2680, 7
        %v2682 = vsub.s32 0, %v2681
        %v2683 = vrot.slane %v2678, %v2682
        %v2684 = vlaneseq
        %v2685 = vshrl.u32 %v2684, 7
        %v2686 = vsub.s32 1, %v2685
        %v2687 = vrot.slane %v2678, %v2686
        %v2688 = vlaneseq
        %v2689 = vshrl.u32 %v2688, 7
        %v2690 = vsub.s32 2, %v2689
        %v2691 = vrot.slane %v2678, %v2690
        %v2692 = vlaneseq
        %v2693 = vshrl.u32 %v2692, 7
        %v2694 = vsub.s32 3, %v2693
        %v2695 = vrot.slane %v2678, %v2694
        %v2696 = vlaneseq
        %v2697 = vshrl.u32 %v2696, 7
        %v2698 = vsub.s32 4, %v2697
        %v2699 = vrot.slane %v2678, %v2698
        %v2700 = vlaneseq
        %v2701 = vshrl.u32 %v2700, 7
        %v2702 = vsub.s32 5, %v2701
        %v2703 = vrot.slane %v2678, %v2702
        %v2704 = vlaneseq
        %v2705 = vshrl.u32 %v2704, 7
        %v2706 = vsub.s32 6, %v2705
        %v2707 = vrot.slane %v2678, %v2706
        %v2708 = vlaneseq
        %v2709 = vshrl.u32 %v2708, 7
        %v2710 = vsub.s32 7, %v2709
        %v2711 = vrot.slane %v2678, %v2710
        %v2720 = vmul.f32 %v2673, %v2683
        %v2721 = vmul.f32 %v2671, %v2687
        %v2722 = vmul.f32 %v2669, %v2691
        %v2723 = vmul.f32 %v2667, %v2695
        %v2724 = vmul.f32 %v2665, %v2699
        %v2725 = vmul.f32 %v2663, %v2703
        %v2726 = vmul.f32 %v2661, %v2707
        %v2727 = vmul.f32 %v2659, %v2711
        %v2728 = vmul.f32 %v2674, %v2683
        %v2729 = vmul.f32 %v2672, %v2687
        %v2730 = vmul.f32 %v2670, %v2691
        %v2731 = vmul.f32 %v2668, %v2695
        %v2732 = vmul.f32 %v2666, %v2699
        %v2733 = vmul.f32 %v2664, %v2703
        %v2734 = vmul.f32 %v2662, %v2707
        %v2735 = vmul.f32 %v2660, %v2711
        %v2736 = vpack.c.bf16 %v2728, %v2720
        %v2737 = vpack.c.bf16 %v2729, %v2721
        %v2738 = vpack.c.bf16 %v2730, %v2722
        %v2739 = vpack.c.bf16 %v2731, %v2723
        %v2740 = vpack.c.bf16 %v2732, %v2724
        %v2741 = vpack.c.bf16 %v2733, %v2725
        %v2742 = vpack.c.bf16 %v2734, %v2726
        %v2743 = vpack.c.bf16 %v2735, %v2727
        %v2752 = vunpack.c.l.b16 %v2736
        %v2753 = vunpack.c.l.b16 %v2737
        %v2754 = vunpack.c.l.b16 %v2738
        %v2755 = vunpack.c.l.b16 %v2739
        %v2756 = vunpack.c.l.b16 %v2740
        %v2757 = vunpack.c.l.b16 %v2741
        %v2758 = vunpack.c.l.b16 %v2742
        %v2759 = vunpack.c.l.b16 %v2743
        %v2760 = vunpack.c.h.b16 %v2736
        %v2761 = vunpack.c.h.b16 %v2737
        %v2762 = vunpack.c.h.b16 %v2738
        %v2763 = vunpack.c.h.b16 %v2739
        %v2764 = vunpack.c.h.b16 %v2740
        %v2765 = vunpack.c.h.b16 %v2741
        %v2766 = vunpack.c.h.b16 %v2742
        %v2767 = vunpack.c.h.b16 %v2743
        %v2768 = vpack.c.b16 %v2753, %v2752
        %v2769 = vpack.c.b16 %v2755, %v2754
        %v2770 = vpack.c.b16 %v2757, %v2756
        %v2771 = vpack.c.b16 %v2759, %v2758
        %v2772 = vpack.c.b16 %v2761, %v2760
        %v2773 = vpack.c.b16 %v2763, %v2762
        %v2774 = vpack.c.b16 %v2765, %v2764
        %v2775 = vpack.c.b16 %v2767, %v2766
        %2784 = vst [vmem:[#allocation6 + $0xc0] sm:$0xff] %v2768
        %2785 = vst [vmem:[#allocation6 + $0xc8] sm:$0xff] %v2769
        %2786 = vst [vmem:[#allocation6 + $0xd0] sm:$0xff] %v2770
        %2787 = vst [vmem:[#allocation6 + $0xd8] sm:$0xff] %v2771
        %2788 = vst [vmem:[#allocation6 + $0xe0] sm:$0xff] %v2772
        %2789 = vst [vmem:[#allocation6 + $0xe8] sm:$0xff] %v2773
        %2790 = vst [vmem:[#allocation6 + $0xf0] sm:$0xff] %v2774
        %2791 = vst [vmem:[#allocation6 + $0xf8] sm:$0xff] %v2775
        %v2792 = vld [vmem:[#allocation5] sm:$0xff]
        %v2793 = vld [vmem:[#allocation5 + $0x8] sm:$0xff]
        %v2794 = vld [vmem:[#allocation5 + $0x10] sm:$0xff]
        %v2795 = vld [vmem:[#allocation5 + $0x18] sm:$0xff]
        %v2796 = vld [vmem:[#allocation5 + $0x20] sm:$0xff]
        %v2797 = vld [vmem:[#allocation5 + $0x28] sm:$0xff]
        %v2798 = vld [vmem:[#allocation5 + $0x30] sm:$0xff]
        %v2799 = vld [vmem:[#allocation5 + $0x38] sm:$0xff]
        %v2800 = vld [vmem:[#allocation5 + $0x40] sm:$0xff]
        %v2801 = vld [vmem:[#allocation5 + $0x48] sm:$0xff]
        %v2802 = vld [vmem:[#allocation5 + $0x50] sm:$0xff]
        %v2803 = vld [vmem:[#allocation5 + $0x58] sm:$0xff]
        %v2804 = vld [vmem:[#allocation5 + $0x60] sm:$0xff]
        %v2805 = vld [vmem:[#allocation5 + $0x68] sm:$0xff]
        %v2806 = vld [vmem:[#allocation5 + $0x70] sm:$0xff]
        %v2807 = vld [vmem:[#allocation5 + $0x78] sm:$0xff]
        %s2808 = scalar_lea.vmem [#allocation10], 4
        %v2809 = vld [vmem:[%s2808] ss:$8 sm:$0xf]
        %v2810 = vld [vmem:[%s2808] ss:$8 sm:$0xf0]
        %v2811 = vor.u32 %v2809, %v2810
        %v2813 = vlaneseq
        %v2814 = vshrl.u32 %v2813, 7
        %v2815 = vsub.s32 0, %v2814
        %v2816 = vrot.slane %v2811, %v2815
        %v2817 = vlaneseq
        %v2818 = vshrl.u32 %v2817, 7
        %v2819 = vsub.s32 1, %v2818
        %v2820 = vrot.slane %v2811, %v2819
        %v2821 = vlaneseq
        %v2822 = vshrl.u32 %v2821, 7
        %v2823 = vsub.s32 2, %v2822
        %v2824 = vrot.slane %v2811, %v2823
        %v2825 = vlaneseq
        %v2826 = vshrl.u32 %v2825, 7
        %v2827 = vsub.s32 3, %v2826
        %v2828 = vrot.slane %v2811, %v2827
        %v2829 = vlaneseq
        %v2830 = vshrl.u32 %v2829, 7
        %v2831 = vsub.s32 4, %v2830
        %v2832 = vrot.slane %v2811, %v2831
        %v2833 = vlaneseq
        %v2834 = vshrl.u32 %v2833, 7
        %v2835 = vsub.s32 5, %v2834
        %v2836 = vrot.slane %v2811, %v2835
        %v2837 = vlaneseq
        %v2838 = vshrl.u32 %v2837, 7
        %v2839 = vsub.s32 6, %v2838
        %v2840 = vrot.slane %v2811, %v2839
        %v2841 = vlaneseq
        %v2842 = vshrl.u32 %v2841, 7
        %v2843 = vsub.s32 7, %v2842
        %v2844 = vrot.slane %v2811, %v2843
        %v2853 = vmul.f32 %v2792, %v2816
        %v2854 = vmul.f32 %v2793, %v2820
        %v2855 = vmul.f32 %v2794, %v2824
        %v2856 = vmul.f32 %v2795, %v2828
        %v2857 = vmul.f32 %v2796, %v2832
        %v2858 = vmul.f32 %v2797, %v2836
        %v2859 = vmul.f32 %v2798, %v2840
        %v2860 = vmul.f32 %v2799, %v2844
        %v2861 = vmul.f32 %v2800, %v2816
        %v2862 = vmul.f32 %v2801, %v2820
        %v2863 = vmul.f32 %v2802, %v2824
        %v2864 = vmul.f32 %v2803, %v2828
        %v2865 = vmul.f32 %v2804, %v2832
        %v2866 = vmul.f32 %v2805, %v2836
        %v2867 = vmul.f32 %v2806, %v2840
        %v2868 = vmul.f32 %v2807, %v2844
        %v2869 = vpack.c.bf16 %v2861, %v2853
        %v2870 = vpack.c.bf16 %v2862, %v2854
        %v2871 = vpack.c.bf16 %v2863, %v2855
        %v2872 = vpack.c.bf16 %v2864, %v2856
        %v2873 = vpack.c.bf16 %v2865, %v2857
        %v2874 = vpack.c.bf16 %v2866, %v2858
        %v2875 = vpack.c.bf16 %v2867, %v2859
        %v2876 = vpack.c.bf16 %v2868, %v2860
        %v2885 = vunpack.c.l.b16 %v2869
        %v2886 = vunpack.c.l.b16 %v2870
        %v2887 = vunpack.c.l.b16 %v2871
        %v2888 = vunpack.c.l.b16 %v2872
        %v2889 = vunpack.c.l.b16 %v2873
        %v2890 = vunpack.c.l.b16 %v2874
        %v2891 = vunpack.c.l.b16 %v2875
        %v2892 = vunpack.c.l.b16 %v2876
        %v2893 = vunpack.c.h.b16 %v2869
        %v2894 = vunpack.c.h.b16 %v2870
        %v2895 = vunpack.c.h.b16 %v2871
        %v2896 = vunpack.c.h.b16 %v2872
        %v2897 = vunpack.c.h.b16 %v2873
        %v2898 = vunpack.c.h.b16 %v2874
        %v2899 = vunpack.c.h.b16 %v2875
        %v2900 = vunpack.c.h.b16 %v2876
        %v2901 = vpack.c.b16 %v2886, %v2885
        %v2902 = vpack.c.b16 %v2888, %v2887
        %v2903 = vpack.c.b16 %v2890, %v2889
        %v2904 = vpack.c.b16 %v2892, %v2891
        %v2905 = vpack.c.b16 %v2894, %v2893
        %v2906 = vpack.c.b16 %v2896, %v2895
        %v2907 = vpack.c.b16 %v2898, %v2897
        %v2908 = vpack.c.b16 %v2900, %v2899
        %2917 = vst [vmem:[#allocation6 + $0x100] sm:$0xff] %v2901
        %2918 = vst [vmem:[#allocation6 + $0x108] sm:$0xff] %v2902
        %2919 = vst [vmem:[#allocation6 + $0x110] sm:$0xff] %v2903
        %2920 = vst [vmem:[#allocation6 + $0x118] sm:$0xff] %v2904
        %2921 = vst [vmem:[#allocation6 + $0x120] sm:$0xff] %v2905
        %2922 = vst [vmem:[#allocation6 + $0x128] sm:$0xff] %v2906
        %2923 = vst [vmem:[#allocation6 + $0x130] sm:$0xff] %v2907
        %2924 = vst [vmem:[#allocation6 + $0x138] sm:$0xff] %v2908
        %v2925 = vld [vmem:[#allocation5] sm:$0xff]
        %v2926 = vld [vmem:[#allocation5 + $0x8] sm:$0xff]
        %v2927 = vld [vmem:[#allocation5 + $0x10] sm:$0xff]
        %v2928 = vld [vmem:[#allocation5 + $0x18] sm:$0xff]
        %v2929 = vld [vmem:[#allocation5 + $0x20] sm:$0xff]
        %v2930 = vld [vmem:[#allocation5 + $0x28] sm:$0xff]
        %v2931 = vld [vmem:[#allocation5 + $0x30] sm:$0xff]
        %v2932 = vld [vmem:[#allocation5 + $0x38] sm:$0xff]
        %v2933 = vld [vmem:[#allocation5 + $0x40] sm:$0xff]
        %v2934 = vld [vmem:[#allocation5 + $0x48] sm:$0xff]
        %v2935 = vld [vmem:[#allocation5 + $0x50] sm:$0xff]
        %v2936 = vld [vmem:[#allocation5 + $0x58] sm:$0xff]
        %v2937 = vld [vmem:[#allocation5 + $0x60] sm:$0xff]
        %v2938 = vld [vmem:[#allocation5 + $0x68] sm:$0xff]
        %v2939 = vld [vmem:[#allocation5 + $0x70] sm:$0xff]
        %v2940 = vld [vmem:[#allocation5 + $0x78] sm:$0xff]
        %2941 = vrot.lane.b32.xlu0 %v2925, 127
        %v2942 = vpop.permute.xlu0 %2941
        %2943 = vrot.lane.b32.xlu0 %v2933, 127
        %v2944 = vpop.permute.xlu0 %2943
        %2945 = vrot.lane.b32.xlu0 %v2926, 127
        %v2946 = vpop.permute.xlu0 %2945
        %2947 = vrot.lane.b32.xlu0 %v2934, 127
        %v2948 = vpop.permute.xlu0 %2947
        %2949 = vrot.lane.b32.xlu0 %v2927, 127
        %v2950 = vpop.permute.xlu0 %2949
        %2951 = vrot.lane.b32.xlu0 %v2935, 127
        %v2952 = vpop.permute.xlu0 %2951
        %2953 = vrot.lane.b32.xlu0 %v2928, 127
        %v2954 = vpop.permute.xlu0 %2953
        %2955 = vrot.lane.b32.xlu0 %v2936, 127
        %v2956 = vpop.permute.xlu0 %2955
        %2957 = vrot.lane.b32.xlu0 %v2929, 127
        %v2958 = vpop.permute.xlu0 %2957
        %2959 = vrot.lane.b32.xlu0 %v2937, 127
        %v2960 = vpop.permute.xlu0 %2959
        %2961 = vrot.lane.b32.xlu0 %v2930, 127
        %v2962 = vpop.permute.xlu0 %2961
        %2963 = vrot.lane.b32.xlu0 %v2938, 127
        %v2964 = vpop.permute.xlu0 %2963
        %2965 = vrot.lane.b32.xlu0 %v2931, 127
        %v2966 = vpop.permute.xlu0 %2965
        %2967 = vrot.lane.b32.xlu0 %v2939, 127
        %v2968 = vpop.permute.xlu0 %2967
        %2969 = vrot.lane.b32.xlu0 %v2932, 127
        %v2970 = vpop.permute.xlu0 %2969
        %2971 = vrot.lane.b32.xlu0 %v2940, 127
        %v2972 = vpop.permute.xlu0 %2971
        %v2973 = vsel %vm631, %v2966, %v2970
        %v2974 = vsel %vm631, %v2968, %v2972
        %v2975 = vsel %vm631, %v2962, %v2966
        %v2976 = vsel %vm631, %v2964, %v2968
        %v2977 = vsel %vm631, %v2958, %v2962
        %v2978 = vsel %vm631, %v2960, %v2964
        %v2979 = vsel %vm631, %v2954, %v2958
        %v2980 = vsel %vm631, %v2956, %v2960
        %v2981 = vsel %vm631, %v2950, %v2954
        %v2982 = vsel %vm631, %v2952, %v2956
        %v2983 = vsel %vm631, %v2946, %v2950
        %v2984 = vsel %vm631, %v2948, %v2952
        %v2985 = vsel %vm631, %v2942, %v2946
        %v2986 = vsel %vm631, %v2944, %v2948
        %v2987 = vsel %vm631, %v2970, %v2942
        %v2988 = vsel %vm631, %v2972, %v2944
        %s2989 = scalar_lea.vmem [#allocation10], 5
        %v2990 = vld [vmem:[%s2989] ss:$8 sm:$0xf]
        %v2991 = vld [vmem:[%s2989] ss:$8 sm:$0xf0]
        %v2992 = vor.u32 %v2990, %v2991
        %v2994 = vlaneseq
        %v2995 = vshrl.u32 %v2994, 7
        %v2996 = vsub.s32 0, %v2995
        %v2997 = vrot.slane %v2992, %v2996
        %v2998 = vlaneseq
        %v2999 = vshrl.u32 %v2998, 7
        %v3000 = vsub.s32 1, %v2999
        %v3001 = vrot.slane %v2992, %v3000
        %v3002 = vlaneseq
        %v3003 = vshrl.u32 %v3002, 7
        %v3004 = vsub.s32 2, %v3003
        %v3005 = vrot.slane %v2992, %v3004
        %v3006 = vlaneseq
        %v3007 = vshrl.u32 %v3006, 7
        %v3008 = vsub.s32 3, %v3007
        %v3009 = vrot.slane %v2992, %v3008
        %v3010 = vlaneseq
        %v3011 = vshrl.u32 %v3010, 7
        %v3012 = vsub.s32 4, %v3011
        %v3013 = vrot.slane %v2992, %v3012
        %v3014 = vlaneseq
        %v3015 = vshrl.u32 %v3014, 7
        %v3016 = vsub.s32 5, %v3015
        %v3017 = vrot.slane %v2992, %v3016
        %v3018 = vlaneseq
        %v3019 = vshrl.u32 %v3018, 7
        %v3020 = vsub.s32 6, %v3019
        %v3021 = vrot.slane %v2992, %v3020
        %v3022 = vlaneseq
        %v3023 = vshrl.u32 %v3022, 7
        %v3024 = vsub.s32 7, %v3023
        %v3025 = vrot.slane %v2992, %v3024
        %v3034 = vmul.f32 %v2985, %v2997
        %v3035 = vmul.f32 %v2983, %v3001
        %v3036 = vmul.f32 %v2981, %v3005
        %v3037 = vmul.f32 %v2979, %v3009
        %v3038 = vmul.f32 %v2977, %v3013
        %v3039 = vmul.f32 %v2975, %v3017
        %v3040 = vmul.f32 %v2973, %v3021
        %v3041 = vmul.f32 %v2987, %v3025
        %v3042 = vmul.f32 %v2986, %v2997
        %v3043 = vmul.f32 %v2984, %v3001
        %v3044 = vmul.f32 %v2982, %v3005
        %v3045 = vmul.f32 %v2980, %v3009
        %v3046 = vmul.f32 %v2978, %v3013
        %v3047 = vmul.f32 %v2976, %v3017
        %v3048 = vmul.f32 %v2974, %v3021
        %v3049 = vmul.f32 %v2988, %v3025
        %v3050 = vpack.c.bf16 %v3042, %v3034
        %v3051 = vpack.c.bf16 %v3043, %v3035
        %v3052 = vpack.c.bf16 %v3044, %v3036
        %v3053 = vpack.c.bf16 %v3045, %v3037
        %v3054 = vpack.c.bf16 %v3046, %v3038
        %v3055 = vpack.c.bf16 %v3047, %v3039
        %v3056 = vpack.c.bf16 %v3048, %v3040
        %v3057 = vpack.c.bf16 %v3049, %v3041
        %v3066 = vunpack.c.l.b16 %v3050
        %v3067 = vunpack.c.l.b16 %v3051
        %v3068 = vunpack.c.l.b16 %v3052
        %v3069 = vunpack.c.l.b16 %v3053
        %v3070 = vunpack.c.l.b16 %v3054
        %v3071 = vunpack.c.l.b16 %v3055
        %v3072 = vunpack.c.l.b16 %v3056
        %v3073 = vunpack.c.l.b16 %v3057
        %v3074 = vunpack.c.h.b16 %v3050
        %v3075 = vunpack.c.h.b16 %v3051
        %v3076 = vunpack.c.h.b16 %v3052
        %v3077 = vunpack.c.h.b16 %v3053
        %v3078 = vunpack.c.h.b16 %v3054
        %v3079 = vunpack.c.h.b16 %v3055
        %v3080 = vunpack.c.h.b16 %v3056
        %v3081 = vunpack.c.h.b16 %v3057
        %v3082 = vpack.c.b16 %v3067, %v3066
        %v3083 = vpack.c.b16 %v3069, %v3068
        %v3084 = vpack.c.b16 %v3071, %v3070
        %v3085 = vpack.c.b16 %v3073, %v3072
        %v3086 = vpack.c.b16 %v3075, %v3074
        %v3087 = vpack.c.b16 %v3077, %v3076
        %v3088 = vpack.c.b16 %v3079, %v3078
        %v3089 = vpack.c.b16 %v3081, %v3080
        %3098 = vst [vmem:[#allocation6 + $0x140] sm:$0xff] %v3082
        %3099 = vst [vmem:[#allocation6 + $0x148] sm:$0xff] %v3083
        %3100 = vst [vmem:[#allocation6 + $0x150] sm:$0xff] %v3084
        %3101 = vst [vmem:[#allocation6 + $0x158] sm:$0xff] %v3085
        %3102 = vst [vmem:[#allocation6 + $0x160] sm:$0xff] %v3086
        %3103 = vst [vmem:[#allocation6 + $0x168] sm:$0xff] %v3087
        %3104 = vst [vmem:[#allocation6 + $0x170] sm:$0xff] %v3088
        %3105 = vst [vmem:[#allocation6 + $0x178] sm:$0xff] %v3089
        %v3106 = vld [vmem:[#allocation5] sm:$0xff]
        %v3107 = vld [vmem:[#allocation5 + $0x8] sm:$0xff]
        %v3108 = vld [vmem:[#allocation5 + $0x10] sm:$0xff]
        %v3109 = vld [vmem:[#allocation5 + $0x18] sm:$0xff]
        %v3110 = vld [vmem:[#allocation5 + $0x20] sm:$0xff]
        %v3111 = vld [vmem:[#allocation5 + $0x28] sm:$0xff]
        %v3112 = vld [vmem:[#allocation5 + $0x30] sm:$0xff]
        %v3113 = vld [vmem:[#allocation5 + $0x38] sm:$0xff]
        %v3114 = vld [vmem:[#allocation5 + $0x40] sm:$0xff]
        %v3115 = vld [vmem:[#allocation5 + $0x48] sm:$0xff]
        %v3116 = vld [vmem:[#allocation5 + $0x50] sm:$0xff]
        %v3117 = vld [vmem:[#allocation5 + $0x58] sm:$0xff]
        %v3118 = vld [vmem:[#allocation5 + $0x60] sm:$0xff]
        %v3119 = vld [vmem:[#allocation5 + $0x68] sm:$0xff]
        %v3120 = vld [vmem:[#allocation5 + $0x70] sm:$0xff]
        %v3121 = vld [vmem:[#allocation5 + $0x78] sm:$0xff]
        %3122 = vrot.lane.b32.xlu0 %v3106, 113
        %v3123 = vpop.permute.xlu0 %3122
        %3124 = vrot.lane.b32.xlu0 %v3114, 113
        %v3125 = vpop.permute.xlu0 %3124
        %3126 = vrot.lane.b32.xlu0 %v3107, 113
        %v3127 = vpop.permute.xlu0 %3126
        %3128 = vrot.lane.b32.xlu0 %v3115, 113
        %v3129 = vpop.permute.xlu0 %3128
        %3130 = vrot.lane.b32.xlu0 %v3108, 113
        %v3131 = vpop.permute.xlu0 %3130
        %3132 = vrot.lane.b32.xlu0 %v3116, 113
        %v3133 = vpop.permute.xlu0 %3132
        %3134 = vrot.lane.b32.xlu0 %v3109, 113
        %v3135 = vpop.permute.xlu0 %3134
        %3136 = vrot.lane.b32.xlu0 %v3117, 113
        %v3137 = vpop.permute.xlu0 %3136
        %3138 = vrot.lane.b32.xlu0 %v3110, 113
        %v3139 = vpop.permute.xlu0 %3138
        %3140 = vrot.lane.b32.xlu0 %v3118, 113
        %v3141 = vpop.permute.xlu0 %3140
        %3142 = vrot.lane.b32.xlu0 %v3111, 113
        %v3143 = vpop.permute.xlu0 %3142
        %3144 = vrot.lane.b32.xlu0 %v3119, 113
        %v3145 = vpop.permute.xlu0 %3144
        %3146 = vrot.lane.b32.xlu0 %v3112, 113
        %v3147 = vpop.permute.xlu0 %3146
        %3148 = vrot.lane.b32.xlu0 %v3120, 113
        %v3149 = vpop.permute.xlu0 %3148
        %3150 = vrot.lane.b32.xlu0 %v3113, 113
        %v3151 = vpop.permute.xlu0 %3150
        %3152 = vrot.lane.b32.xlu0 %v3121, 113
        %v3153 = vpop.permute.xlu0 %3152
        %v3154 = vsel %vm662, %v3147, %v3151
        %v3155 = vsel %vm662, %v3149, %v3153
        %v3156 = vsel %vm662, %v3143, %v3147
        %v3157 = vsel %vm662, %v3145, %v3149
        %v3158 = vsel %vm662, %v3139, %v3143
        %v3159 = vsel %vm662, %v3141, %v3145
        %v3160 = vsel %vm662, %v3135, %v3139
        %v3161 = vsel %vm662, %v3137, %v3141
        %v3162 = vsel %vm662, %v3131, %v3135
        %v3163 = vsel %vm662, %v3133, %v3137
        %v3164 = vsel %vm662, %v3127, %v3131
        %v3165 = vsel %vm662, %v3129, %v3133
        %v3166 = vsel %vm662, %v3123, %v3127
        %v3167 = vsel %vm662, %v3125, %v3129
        %v3168 = vsel %vm662, %v3151, %v3123
        %v3169 = vsel %vm662, %v3153, %v3125
        %s3170 = scalar_lea.vmem [#allocation10], 6
        %v3171 = vld [vmem:[%s3170] ss:$8 sm:$0xf]
        %v3172 = vld [vmem:[%s3170] ss:$8 sm:$0xf0]
        %v3173 = vor.u32 %v3171, %v3172
        %v3175 = vlaneseq
        %v3176 = vshrl.u32 %v3175, 7
        %v3177 = vsub.s32 0, %v3176
        %v3178 = vrot.slane %v3173, %v3177
        %v3179 = vlaneseq
        %v3180 = vshrl.u32 %v3179, 7
        %v3181 = vsub.s32 1, %v3180
        %v3182 = vrot.slane %v3173, %v3181
        %v3183 = vlaneseq
        %v3184 = vshrl.u32 %v3183, 7
        %v3185 = vsub.s32 2, %v3184
        %v3186 = vrot.slane %v3173, %v3185
        %v3187 = vlaneseq
        %v3188 = vshrl.u32 %v3187, 7
        %v3189 = vsub.s32 3, %v3188
        %v3190 = vrot.slane %v3173, %v3189
        %v3191 = vlaneseq
        %v3192 = vshrl.u32 %v3191, 7
        %v3193 = vsub.s32 4, %v3192
        %v3194 = vrot.slane %v3173, %v3193
        %v3195 = vlaneseq
        %v3196 = vshrl.u32 %v3195, 7
        %v3197 = vsub.s32 5, %v3196
        %v3198 = vrot.slane %v3173, %v3197
        %v3199 = vlaneseq
        %v3200 = vshrl.u32 %v3199, 7
        %v3201 = vsub.s32 6, %v3200
        %v3202 = vrot.slane %v3173, %v3201
        %v3203 = vlaneseq
        %v3204 = vshrl.u32 %v3203, 7
        %v3205 = vsub.s32 7, %v3204
        %v3206 = vrot.slane %v3173, %v3205
        %v3215 = vmul.f32 %v3166, %v3178
        %v3216 = vmul.f32 %v3164, %v3182
        %v3217 = vmul.f32 %v3162, %v3186
        %v3218 = vmul.f32 %v3160, %v3190
        %v3219 = vmul.f32 %v3158, %v3194
        %v3220 = vmul.f32 %v3156, %v3198
        %v3221 = vmul.f32 %v3154, %v3202
        %v3222 = vmul.f32 %v3168, %v3206
        %v3223 = vmul.f32 %v3167, %v3178
        %v3224 = vmul.f32 %v3165, %v3182
        %v3225 = vmul.f32 %v3163, %v3186
        %v3226 = vmul.f32 %v3161, %v3190
        %v3227 = vmul.f32 %v3159, %v3194
        %v3228 = vmul.f32 %v3157, %v3198
        %v3229 = vmul.f32 %v3155, %v3202
        %v3230 = vmul.f32 %v3169, %v3206
        %v3231 = vpack.c.bf16 %v3223, %v3215
        %v3232 = vpack.c.bf16 %v3224, %v3216
        %v3233 = vpack.c.bf16 %v3225, %v3217
        %v3234 = vpack.c.bf16 %v3226, %v3218
        %v3235 = vpack.c.bf16 %v3227, %v3219
        %v3236 = vpack.c.bf16 %v3228, %v3220
        %v3237 = vpack.c.bf16 %v3229, %v3221
        %v3238 = vpack.c.bf16 %v3230, %v3222
        %v3247 = vunpack.c.l.b16 %v3231
        %v3248 = vunpack.c.l.b16 %v3232
        %v3249 = vunpack.c.l.b16 %v3233
        %v3250 = vunpack.c.l.b16 %v3234
        %v3251 = vunpack.c.l.b16 %v3235
        %v3252 = vunpack.c.l.b16 %v3236
        %v3253 = vunpack.c.l.b16 %v3237
        %v3254 = vunpack.c.l.b16 %v3238
        %v3255 = vunpack.c.h.b16 %v3231
        %v3256 = vunpack.c.h.b16 %v3232
        %v3257 = vunpack.c.h.b16 %v3233
        %v3258 = vunpack.c.h.b16 %v3234
        %v3259 = vunpack.c.h.b16 %v3235
        %v3260 = vunpack.c.h.b16 %v3236
        %v3261 = vunpack.c.h.b16 %v3237
        %v3262 = vunpack.c.h.b16 %v3238
        %v3263 = vpack.c.b16 %v3248, %v3247
        %v3264 = vpack.c.b16 %v3250, %v3249
        %v3265 = vpack.c.b16 %v3252, %v3251
        %v3266 = vpack.c.b16 %v3254, %v3253
        %v3267 = vpack.c.b16 %v3256, %v3255
        %v3268 = vpack.c.b16 %v3258, %v3257
        %v3269 = vpack.c.b16 %v3260, %v3259
        %v3270 = vpack.c.b16 %v3262, %v3261
        %3279 = vst [vmem:[#allocation6 + $0x180] sm:$0xff] %v3263
        %3280 = vst [vmem:[#allocation6 + $0x188] sm:$0xff] %v3264
        %3281 = vst [vmem:[#allocation6 + $0x190] sm:$0xff] %v3265
        %3282 = vst [vmem:[#allocation6 + $0x198] sm:$0xff] %v3266
        %3283 = vst [vmem:[#allocation6 + $0x1a0] sm:$0xff] %v3267
        %3284 = vst [vmem:[#allocation6 + $0x1a8] sm:$0xff] %v3268
        %3285 = vst [vmem:[#allocation6 + $0x1b0] sm:$0xff] %v3269
        %3286 = vst [vmem:[#allocation6 + $0x1b8] sm:$0xff] %v3270
        %v3287 = vld [vmem:[#allocation5] sm:$0xff]
        %v3288 = vld [vmem:[#allocation5 + $0x8] sm:$0xff]
        %v3289 = vld [vmem:[#allocation5 + $0x10] sm:$0xff]
        %v3290 = vld [vmem:[#allocation5 + $0x18] sm:$0xff]
        %v3291 = vld [vmem:[#allocation5 + $0x20] sm:$0xff]
        %v3292 = vld [vmem:[#allocation5 + $0x28] sm:$0xff]
        %v3293 = vld [vmem:[#allocation5 + $0x30] sm:$0xff]
        %v3294 = vld [vmem:[#allocation5 + $0x38] sm:$0xff]
        %v3295 = vld [vmem:[#allocation5 + $0x40] sm:$0xff]
        %v3296 = vld [vmem:[#allocation5 + $0x48] sm:$0xff]
        %v3297 = vld [vmem:[#allocation5 + $0x50] sm:$0xff]
        %v3298 = vld [vmem:[#allocation5 + $0x58] sm:$0xff]
        %v3299 = vld [vmem:[#allocation5 + $0x60] sm:$0xff]
        %v3300 = vld [vmem:[#allocation5 + $0x68] sm:$0xff]
        %v3301 = vld [vmem:[#allocation5 + $0x70] sm:$0xff]
        %v3302 = vld [vmem:[#allocation5 + $0x78] sm:$0xff]
        %3303 = vrot.lane.b32.xlu0 %v3287, 112
        %v3304 = vpop.permute.xlu0 %3303
        %3305 = vrot.lane.b32.xlu0 %v3295, 112
        %v3306 = vpop.permute.xlu0 %3305
        %3307 = vrot.lane.b32.xlu0 %v3288, 112
        %v3308 = vpop.permute.xlu0 %3307
        %3309 = vrot.lane.b32.xlu0 %v3296, 112
        %v3310 = vpop.permute.xlu0 %3309
        %3311 = vrot.lane.b32.xlu0 %v3289, 112
        %v3312 = vpop.permute.xlu0 %3311
        %3313 = vrot.lane.b32.xlu0 %v3297, 112
        %v3314 = vpop.permute.xlu0 %3313
        %3315 = vrot.lane.b32.xlu0 %v3290, 112
        %v3316 = vpop.permute.xlu0 %3315
        %3317 = vrot.lane.b32.xlu0 %v3298, 112
        %v3318 = vpop.permute.xlu0 %3317
        %3319 = vrot.lane.b32.xlu0 %v3291, 112
        %v3320 = vpop.permute.xlu0 %3319
        %3321 = vrot.lane.b32.xlu0 %v3299, 112
        %v3322 = vpop.permute.xlu0 %3321
        %3323 = vrot.lane.b32.xlu0 %v3292, 112
        %v3324 = vpop.permute.xlu0 %3323
        %3325 = vrot.lane.b32.xlu0 %v3300, 112
        %v3326 = vpop.permute.xlu0 %3325
        %3327 = vrot.lane.b32.xlu0 %v3293, 112
        %v3328 = vpop.permute.xlu0 %3327
        %3329 = vrot.lane.b32.xlu0 %v3301, 112
        %v3330 = vpop.permute.xlu0 %3329
        %3331 = vrot.lane.b32.xlu0 %v3294, 112
        %v3332 = vpop.permute.xlu0 %3331
        %3333 = vrot.lane.b32.xlu0 %v3302, 112
        %v3334 = vpop.permute.xlu0 %3333
        %v3335 = vsel %vm693, %v3328, %v3332
        %v3336 = vsel %vm693, %v3330, %v3334
        %v3337 = vsel %vm693, %v3324, %v3328
        %v3338 = vsel %vm693, %v3326, %v3330
        %v3339 = vsel %vm693, %v3320, %v3324
        %v3340 = vsel %vm693, %v3322, %v3326
        %v3341 = vsel %vm693, %v3316, %v3320
        %v3342 = vsel %vm693, %v3318, %v3322
        %v3343 = vsel %vm693, %v3312, %v3316
        %v3344 = vsel %vm693, %v3314, %v3318
        %v3345 = vsel %vm693, %v3308, %v3312
        %v3346 = vsel %vm693, %v3310, %v3314
        %v3347 = vsel %vm693, %v3304, %v3308
        %v3348 = vsel %vm693, %v3306, %v3310
        %v3349 = vsel %vm693, %v3332, %v3304
        %v3350 = vsel %vm693, %v3334, %v3306
        %s3351 = scalar_lea.vmem [#allocation10], 7
        %v3352 = vld [vmem:[%s3351] ss:$8 sm:$0xf]
        %v3353 = vld [vmem:[%s3351] ss:$8 sm:$0xf0]
        %v3354 = vor.u32 %v3352, %v3353
        %v3356 = vlaneseq
        %v3357 = vshrl.u32 %v3356, 7
        %v3358 = vsub.s32 0, %v3357
        %v3359 = vrot.slane %v3354, %v3358
        %v3360 = vlaneseq
        %v3361 = vshrl.u32 %v3360, 7
        %v3362 = vsub.s32 1, %v3361
        %v3363 = vrot.slane %v3354, %v3362
        %v3364 = vlaneseq
        %v3365 = vshrl.u32 %v3364, 7
        %v3366 = vsub.s32 2, %v3365
        %v3367 = vrot.slane %v3354, %v3366
        %v3368 = vlaneseq
        %v3369 = vshrl.u32 %v3368, 7
        %v3370 = vsub.s32 3, %v3369
        %v3371 = vrot.slane %v3354, %v3370
        %v3372 = vlaneseq
        %v3373 = vshrl.u32 %v3372, 7
        %v3374 = vsub.s32 4, %v3373
        %v3375 = vrot.slane %v3354, %v3374
        %v3376 = vlaneseq
        %v3377 = vshrl.u32 %v3376, 7
        %v3378 = vsub.s32 5, %v3377
        %v3379 = vrot.slane %v3354, %v3378
        %v3380 = vlaneseq
        %v3381 = vshrl.u32 %v3380, 7
        %v3382 = vsub.s32 6, %v3381
        %v3383 = vrot.slane %v3354, %v3382
        %v3384 = vlaneseq
        %v3385 = vshrl.u32 %v3384, 7
        %v3386 = vsub.s32 7, %v3385
        %v3387 = vrot.slane %v3354, %v3386
        %v3396 = vmul.f32 %v3347, %v3359
        %v3397 = vmul.f32 %v3345, %v3363
        %v3398 = vmul.f32 %v3343, %v3367
        %v3399 = vmul.f32 %v3341, %v3371
        %v3400 = vmul.f32 %v3339, %v3375
        %v3401 = vmul.f32 %v3337, %v3379
        %v3402 = vmul.f32 %v3335, %v3383
        %v3403 = vmul.f32 %v3349, %v3387
        %v3404 = vmul.f32 %v3348, %v3359
        %v3405 = vmul.f32 %v3346, %v3363
        %v3406 = vmul.f32 %v3344, %v3367
        %v3407 = vmul.f32 %v3342, %v3371
        %v3408 = vmul.f32 %v3340, %v3375
        %v3409 = vmul.f32 %v3338, %v3379
        %v3410 = vmul.f32 %v3336, %v3383
        %v3411 = vmul.f32 %v3350, %v3387
        %v3412 = vpack.c.bf16 %v3404, %v3396
        %v3413 = vpack.c.bf16 %v3405, %v3397
        %v3414 = vpack.c.bf16 %v3406, %v3398
        %v3415 = vpack.c.bf16 %v3407, %v3399
        %v3416 = vpack.c.bf16 %v3408, %v3400
        %v3417 = vpack.c.bf16 %v3409, %v3401
        %v3418 = vpack.c.bf16 %v3410, %v3402
        %v3419 = vpack.c.bf16 %v3411, %v3403
        %v3428 = vunpack.c.l.b16 %v3412
        %v3429 = vunpack.c.l.b16 %v3413
        %v3430 = vunpack.c.l.b16 %v3414
        %v3431 = vunpack.c.l.b16 %v3415
        %v3432 = vunpack.c.l.b16 %v3416
        %v3433 = vunpack.c.l.b16 %v3417
        %v3434 = vunpack.c.l.b16 %v3418
        %v3435 = vunpack.c.l.b16 %v3419
        %v3436 = vunpack.c.h.b16 %v3412
        %v3437 = vunpack.c.h.b16 %v3413
        %v3438 = vunpack.c.h.b16 %v3414
        %v3439 = vunpack.c.h.b16 %v3415
        %v3440 = vunpack.c.h.b16 %v3416
        %v3441 = vunpack.c.h.b16 %v3417
        %v3442 = vunpack.c.h.b16 %v3418
        %v3443 = vunpack.c.h.b16 %v3419
        %v3444 = vpack.c.b16 %v3429, %v3428
        %v3445 = vpack.c.b16 %v3431, %v3430
        %v3446 = vpack.c.b16 %v3433, %v3432
        %v3447 = vpack.c.b16 %v3435, %v3434
        %v3448 = vpack.c.b16 %v3437, %v3436
        %v3449 = vpack.c.b16 %v3439, %v3438
        %v3450 = vpack.c.b16 %v3441, %v3440
        %v3451 = vpack.c.b16 %v3443, %v3442
        %3460 = vst [vmem:[#allocation6 + $0x1c0] sm:$0xff] %v3444
        %3461 = vst [vmem:[#allocation6 + $0x1c8] sm:$0xff] %v3445
        %3462 = vst [vmem:[#allocation6 + $0x1d0] sm:$0xff] %v3446
        %3463 = vst [vmem:[#allocation6 + $0x1d8] sm:$0xff] %v3447
        %3464 = vst [vmem:[#allocation6 + $0x1e0] sm:$0xff] %v3448
        %3465 = vst [vmem:[#allocation6 + $0x1e8] sm:$0xff] %v3449
        %3466 = vst [vmem:[#allocation6 + $0x1f0] sm:$0xff] %v3450
        %3467 = vst [vmem:[#allocation6 + $0x1f8] sm:$0xff] %v3451
        %v3468 = vld [vmem:[#allocation5] sm:$0xff]
        %v3469 = vld [vmem:[#allocation5 + $0x8] sm:$0xff]
        %v3470 = vld [vmem:[#allocation5 + $0x10] sm:$0xff]
        %v3471 = vld [vmem:[#allocation5 + $0x18] sm:$0xff]
        %v3472 = vld [vmem:[#allocation5 + $0x20] sm:$0xff]
        %v3473 = vld [vmem:[#allocation5 + $0x28] sm:$0xff]
        %v3474 = vld [vmem:[#allocation5 + $0x30] sm:$0xff]
        %v3475 = vld [vmem:[#allocation5 + $0x38] sm:$0xff]
        %v3476 = vld [vmem:[#allocation5 + $0x40] sm:$0xff]
        %v3477 = vld [vmem:[#allocation5 + $0x48] sm:$0xff]
        %v3478 = vld [vmem:[#allocation5 + $0x50] sm:$0xff]
        %v3479 = vld [vmem:[#allocation5 + $0x58] sm:$0xff]
        %v3480 = vld [vmem:[#allocation5 + $0x60] sm:$0xff]
        %v3481 = vld [vmem:[#allocation5 + $0x68] sm:$0xff]
        %v3482 = vld [vmem:[#allocation5 + $0x70] sm:$0xff]
        %v3483 = vld [vmem:[#allocation5 + $0x78] sm:$0xff]
        %3484 = vrot.lane.b32.xlu0 %v3468, 111
        %v3485 = vpop.permute.xlu0 %3484
        %3486 = vrot.lane.b32.xlu0 %v3476, 111
        %v3487 = vpop.permute.xlu0 %3486
        %3488 = vrot.lane.b32.xlu0 %v3469, 111
        %v3489 = vpop.permute.xlu0 %3488
        %3490 = vrot.lane.b32.xlu0 %v3477, 111
        %v3491 = vpop.permute.xlu0 %3490
        %3492 = vrot.lane.b32.xlu0 %v3470, 111
        %v3493 = vpop.permute.xlu0 %3492
        %3494 = vrot.lane.b32.xlu0 %v3478, 111
        %v3495 = vpop.permute.xlu0 %3494
        %3496 = vrot.lane.b32.xlu0 %v3471, 111
        %v3497 = vpop.permute.xlu0 %3496
        %3498 = vrot.lane.b32.xlu0 %v3479, 111
        %v3499 = vpop.permute.xlu0 %3498
        %3500 = vrot.lane.b32.xlu0 %v3472, 111
        %v3501 = vpop.permute.xlu0 %3500
        %3502 = vrot.lane.b32.xlu0 %v3480, 111
        %v3503 = vpop.permute.xlu0 %3502
        %3504 = vrot.lane.b32.xlu0 %v3473, 111
        %v3505 = vpop.permute.xlu0 %3504
        %3506 = vrot.lane.b32.xlu0 %v3481, 111
        %v3507 = vpop.permute.xlu0 %3506
        %3508 = vrot.lane.b32.xlu0 %v3474, 111
        %v3509 = vpop.permute.xlu0 %3508
        %3510 = vrot.lane.b32.xlu0 %v3482, 111
        %v3511 = vpop.permute.xlu0 %3510
        %3512 = vrot.lane.b32.xlu0 %v3475, 111
        %v3513 = vpop.permute.xlu0 %3512
        %3514 = vrot.lane.b32.xlu0 %v3483, 111
        %v3515 = vpop.permute.xlu0 %3514
        %v3516 = vsel %vm724, %v3509, %v3513
        %v3517 = vsel %vm724, %v3511, %v3515
        %v3518 = vsel %vm724, %v3505, %v3509
        %v3519 = vsel %vm724, %v3507, %v3511
        %v3520 = vsel %vm724, %v3501, %v3505
        %v3521 = vsel %vm724, %v3503, %v3507
        %v3522 = vsel %vm724, %v3497, %v3501
        %v3523 = vsel %vm724, %v3499, %v3503
        %v3524 = vsel %vm724, %v3493, %v3497
        %v3525 = vsel %vm724, %v3495, %v3499
        %v3526 = vsel %vm724, %v3489, %v3493
        %v3527 = vsel %vm724, %v3491, %v3495
        %v3528 = vsel %vm724, %v3485, %v3489
        %v3529 = vsel %vm724, %v3487, %v3491
        %v3530 = vsel %vm724, %v3513, %v3485
        %v3531 = vsel %vm724, %v3515, %v3487
        %s3532 = scalar_lea.vmem [#allocation10], 64
        %v3533 = vld [vmem:[%s3532] ss:$8 sm:$0xf]
        %v3534 = vld [vmem:[%s3532] ss:$8 sm:$0xf0]
        %v3535 = vor.u32 %v3533, %v3534
        %v3537 = vlaneseq
        %v3538 = vshrl.u32 %v3537, 7
        %v3539 = vsub.s32 0, %v3538
        %v3540 = vrot.slane %v3535, %v3539
        %v3541 = vlaneseq
        %v3542 = vshrl.u32 %v3541, 7
        %v3543 = vsub.s32 1, %v3542
        %v3544 = vrot.slane %v3535, %v3543
        %v3545 = vlaneseq
        %v3546 = vshrl.u32 %v3545, 7
        %v3547 = vsub.s32 2, %v3546
        %v3548 = vrot.slane %v3535, %v3547
        %v3549 = vlaneseq
        %v3550 = vshrl.u32 %v3549, 7
        %v3551 = vsub.s32 3, %v3550
        %v3552 = vrot.slane %v3535, %v3551
        %v3553 = vlaneseq
        %v3554 = vshrl.u32 %v3553, 7
        %v3555 = vsub.s32 4, %v3554
        %v3556 = vrot.slane %v3535, %v3555
        %v3557 = vlaneseq
        %v3558 = vshrl.u32 %v3557, 7
        %v3559 = vsub.s32 5, %v3558
        %v3560 = vrot.slane %v3535, %v3559
        %v3561 = vlaneseq
        %v3562 = vshrl.u32 %v3561, 7
        %v3563 = vsub.s32 6, %v3562
        %v3564 = vrot.slane %v3535, %v3563
        %v3565 = vlaneseq
        %v3566 = vshrl.u32 %v3565, 7
        %v3567 = vsub.s32 7, %v3566
        %v3568 = vrot.slane %v3535, %v3567
        %v3577 = vmul.f32 %v3528, %v3540
        %v3578 = vmul.f32 %v3526, %v3544
        %v3579 = vmul.f32 %v3524, %v3548
        %v3580 = vmul.f32 %v3522, %v3552
        %v3581 = vmul.f32 %v3520, %v3556
        %v3582 = vmul.f32 %v3518, %v3560
        %v3583 = vmul.f32 %v3516, %v3564
        %v3584 = vmul.f32 %v3530, %v3568
        %v3585 = vmul.f32 %v3529, %v3540
        %v3586 = vmul.f32 %v3527, %v3544
        %v3587 = vmul.f32 %v3525, %v3548
        %v3588 = vmul.f32 %v3523, %v3552
        %v3589 = vmul.f32 %v3521, %v3556
        %v3590 = vmul.f32 %v3519, %v3560
        %v3591 = vmul.f32 %v3517, %v3564
        %v3592 = vmul.f32 %v3531, %v3568
        %v3593 = vpack.c.bf16 %v3585, %v3577
        %v3594 = vpack.c.bf16 %v3586, %v3578
        %v3595 = vpack.c.bf16 %v3587, %v3579
        %v3596 = vpack.c.bf16 %v3588, %v3580
        %v3597 = vpack.c.bf16 %v3589, %v3581
        %v3598 = vpack.c.bf16 %v3590, %v3582
        %v3599 = vpack.c.bf16 %v3591, %v3583
        %v3600 = vpack.c.bf16 %v3592, %v3584
        %v3609 = vunpack.c.l.b16 %v3593
        %v3610 = vunpack.c.l.b16 %v3594
        %v3611 = vunpack.c.l.b16 %v3595
        %v3612 = vunpack.c.l.b16 %v3596
        %v3613 = vunpack.c.l.b16 %v3597
        %v3614 = vunpack.c.l.b16 %v3598
        %v3615 = vunpack.c.l.b16 %v3599
        %v3616 = vunpack.c.l.b16 %v3600
        %v3617 = vunpack.c.h.b16 %v3593
        %v3618 = vunpack.c.h.b16 %v3594
        %v3619 = vunpack.c.h.b16 %v3595
        %v3620 = vunpack.c.h.b16 %v3596
        %v3621 = vunpack.c.h.b16 %v3597
        %v3622 = vunpack.c.h.b16 %v3598
        %v3623 = vunpack.c.h.b16 %v3599
        %v3624 = vunpack.c.h.b16 %v3600
        %v3625 = vpack.c.b16 %v3610, %v3609
        %v3626 = vpack.c.b16 %v3612, %v3611
        %v3627 = vpack.c.b16 %v3614, %v3613
        %v3628 = vpack.c.b16 %v3616, %v3615
        %v3629 = vpack.c.b16 %v3618, %v3617
        %v3630 = vpack.c.b16 %v3620, %v3619
        %v3631 = vpack.c.b16 %v3622, %v3621
        %v3632 = vpack.c.b16 %v3624, %v3623
        %3641 = vst [vmem:[#allocation6 + $0x200] sm:$0xff] %v3625
        %3642 = vst [vmem:[#allocation6 + $0x208] sm:$0xff] %v3626
        %3643 = vst [vmem:[#allocation6 + $0x210] sm:$0xff] %v3627
        %3644 = vst [vmem:[#allocation6 + $0x218] sm:$0xff] %v3628
        %3645 = vst [vmem:[#allocation6 + $0x220] sm:$0xff] %v3629
        %3646 = vst [vmem:[#allocation6 + $0x228] sm:$0xff] %v3630
        %3647 = vst [vmem:[#allocation6 + $0x230] sm:$0xff] %v3631
        %3648 = vst [vmem:[#allocation6 + $0x238] sm:$0xff] %v3632
        %v3649 = vld [vmem:[%s6] sm:$0xff]
        %v3650 = vld [vmem:[%s6 + $0x8] sm:$0xff]
        %v3651 = vld [vmem:[#allocation6] sm:$0xff]
        %v3652 = vld [vmem:[#allocation6 + $0x8] sm:$0xff]
        %v3653 = vld [vmem:[#allocation6 + $0x10] sm:$0xff]
        %v3654 = vld [vmem:[#allocation6 + $0x18] sm:$0xff]
        %v3655 = vld [vmem:[#allocation6 + $0x20] sm:$0xff]
        %v3656 = vld [vmem:[#allocation6 + $0x28] sm:$0xff]
        %v3657 = vld [vmem:[#allocation6 + $0x30] sm:$0xff]
        %v3658 = vld [vmem:[#allocation6 + $0x38] sm:$0xff]
        %v3659 = vld [vmem:[#allocation6 + $0x40] sm:$0xff]
        %v3660 = vld [vmem:[#allocation6 + $0x48] sm:$0xff]
        %v3661 = vld [vmem:[#allocation6 + $0x50] sm:$0xff]
        %v3662 = vld [vmem:[#allocation6 + $0x58] sm:$0xff]
        %v3663 = vld [vmem:[#allocation6 + $0x60] sm:$0xff]
        %v3664 = vld [vmem:[#allocation6 + $0x68] sm:$0xff]
        %v3665 = vld [vmem:[#allocation6 + $0x70] sm:$0xff]
        %v3666 = vld [vmem:[#allocation6 + $0x78] sm:$0xff]
        %v3667 = vld [vmem:[#allocation6 + $0x80] sm:$0xff]
        %v3668 = vld [vmem:[#allocation6 + $0x88] sm:$0xff]
        %v3669 = vld [vmem:[#allocation6 + $0x90] sm:$0xff]
        %v3670 = vld [vmem:[#allocation6 + $0x98] sm:$0xff]
        %v3671 = vld [vmem:[#allocation6 + $0xa0] sm:$0xff]
        %v3672 = vld [vmem:[#allocation6 + $0xa8] sm:$0xff]
        %v3673 = vld [vmem:[#allocation6 + $0xb0] sm:$0xff]
        %v3674 = vld [vmem:[#allocation6 + $0xb8] sm:$0xff]
        %v3675 = vld [vmem:[#allocation6 + $0xc0] sm:$0xff]
        %v3676 = vld [vmem:[#allocation6 + $0xc8] sm:$0xff]
        %v3677 = vld [vmem:[#allocation6 + $0xd0] sm:$0xff]
        %v3678 = vld [vmem:[#allocation6 + $0xd8] sm:$0xff]
        %v3679 = vld [vmem:[#allocation6 + $0xe0] sm:$0xff]
        %v3680 = vld [vmem:[#allocation6 + $0xe8] sm:$0xff]
        %v3681 = vld [vmem:[#allocation6 + $0xf0] sm:$0xff]
        %v3682 = vld [vmem:[#allocation6 + $0xf8] sm:$0xff]
        %v3683 = vld [vmem:[#allocation6 + $0x100] sm:$0xff]
        %v3684 = vld [vmem:[#allocation6 + $0x108] sm:$0xff]
        %v3685 = vld [vmem:[#allocation6 + $0x110] sm:$0xff]
        %v3686 = vld [vmem:[#allocation6 + $0x118] sm:$0xff]
        %v3687 = vld [vmem:[#allocation6 + $0x120] sm:$0xff]
        %v3688 = vld [vmem:[#allocation6 + $0x128] sm:$0xff]
        %v3689 = vld [vmem:[#allocation6 + $0x130] sm:$0xff]
        %v3690 = vld [vmem:[#allocation6 + $0x138] sm:$0xff]
        %v3691 = vld [vmem:[#allocation6 + $0x140] sm:$0xff]
        %v3692 = vld [vmem:[#allocation6 + $0x148] sm:$0xff]
        %v3693 = vld [vmem:[#allocation6 + $0x150] sm:$0xff]
        %v3694 = vld [vmem:[#allocation6 + $0x158] sm:$0xff]
        %v3695 = vld [vmem:[#allocation6 + $0x160] sm:$0xff]
        %v3696 = vld [vmem:[#allocation6 + $0x168] sm:$0xff]
        %v3697 = vld [vmem:[#allocation6 + $0x170] sm:$0xff]
        %v3698 = vld [vmem:[#allocation6 + $0x178] sm:$0xff]
        %v3699 = vld [vmem:[#allocation6 + $0x180] sm:$0xff]
        %v3700 = vld [vmem:[#allocation6 + $0x188] sm:$0xff]
        %v3701 = vld [vmem:[#allocation6 + $0x190] sm:$0xff]
        %v3702 = vld [vmem:[#allocation6 + $0x198] sm:$0xff]
        %v3703 = vld [vmem:[#allocation6 + $0x1a0] sm:$0xff]
        %v3704 = vld [vmem:[#allocation6 + $0x1a8] sm:$0xff]
        %v3705 = vld [vmem:[#allocation6 + $0x1b0] sm:$0xff]
        %v3706 = vld [vmem:[#allocation6 + $0x1b8] sm:$0xff]
        %v3707 = vld [vmem:[#allocation6 + $0x1c0] sm:$0xff]
        %v3708 = vld [vmem:[#allocation6 + $0x1c8] sm:$0xff]
        %v3709 = vld [vmem:[#allocation6 + $0x1d0] sm:$0xff]
        %v3710 = vld [vmem:[#allocation6 + $0x1d8] sm:$0xff]
        %v3711 = vld [vmem:[#allocation6 + $0x1e0] sm:$0xff]
        %v3712 = vld [vmem:[#allocation6 + $0x1e8] sm:$0xff]
        %v3713 = vld [vmem:[#allocation6 + $0x1f0] sm:$0xff]
        %v3714 = vld [vmem:[#allocation6 + $0x1f8] sm:$0xff]
        %v3715 = vld [vmem:[#allocation6 + $0x200] sm:$0xff]
        %v3716 = vld [vmem:[#allocation6 + $0x208] sm:$0xff]
        %v3717 = vld [vmem:[#allocation6 + $0x210] sm:$0xff]
        %v3718 = vld [vmem:[#allocation6 + $0x218] sm:$0xff]
        %v3719 = vld [vmem:[#allocation6 + $0x220] sm:$0xff]
        %v3720 = vld [vmem:[#allocation6 + $0x228] sm:$0xff]
        %v3721 = vld [vmem:[#allocation6 + $0x230] sm:$0xff]
        %v3722 = vld [vmem:[#allocation6 + $0x238] sm:$0xff]
        %v3725 = vunpack.c.l.b16 %v3649
        %v3726 = vunpack.c.h.b16 %v3649
        %v3727 = vunpack.c.l.b16 %v3650
        %v3728 = vunpack.c.h.b16 %v3650
        %v3729 = vpack.c.b16 %v3727, %v3725
        %v3730 = vpack.c.b16 %v3728, %v3726
        %v3804 = vunpack.c.l.b16 %v3651
        %v3805 = vunpack.c.h.b16 %v3651
        %v3806 = vunpack.c.l.b16 %v3652
        %v3807 = vunpack.c.h.b16 %v3652
        %v3808 = vunpack.c.l.b16 %v3653
        %v3809 = vunpack.c.h.b16 %v3653
        %v3810 = vunpack.c.l.b16 %v3654
        %v3811 = vunpack.c.h.b16 %v3654
        %v3812 = vunpack.c.l.b16 %v3655
        %v3813 = vunpack.c.h.b16 %v3655
        %v3814 = vunpack.c.l.b16 %v3656
        %v3815 = vunpack.c.h.b16 %v3656
        %v3816 = vunpack.c.l.b16 %v3657
        %v3817 = vunpack.c.h.b16 %v3657
        %v3818 = vunpack.c.l.b16 %v3658
        %v3819 = vunpack.c.h.b16 %v3658
        %v3820 = vunpack.c.l.b16 %v3659
        %v3821 = vunpack.c.h.b16 %v3659
        %v3822 = vunpack.c.l.b16 %v3660
        %v3823 = vunpack.c.h.b16 %v3660
        %v3824 = vunpack.c.l.b16 %v3661
        %v3825 = vunpack.c.h.b16 %v3661
        %v3826 = vunpack.c.l.b16 %v3662
        %v3827 = vunpack.c.h.b16 %v3662
        %v3828 = vunpack.c.l.b16 %v3663
        %v3829 = vunpack.c.h.b16 %v3663
        %v3830 = vunpack.c.l.b16 %v3664
        %v3831 = vunpack.c.h.b16 %v3664
        %v3832 = vunpack.c.l.b16 %v3665
        %v3833 = vunpack.c.h.b16 %v3665
        %v3834 = vunpack.c.l.b16 %v3666
        %v3835 = vunpack.c.h.b16 %v3666
        %v3836 = vunpack.c.l.b16 %v3667
        %v3837 = vunpack.c.h.b16 %v3667
        %v3838 = vunpack.c.l.b16 %v3668
        %v3839 = vunpack.c.h.b16 %v3668
        %v3840 = vunpack.c.l.b16 %v3669
        %v3841 = vunpack.c.h.b16 %v3669
        %v3842 = vunpack.c.l.b16 %v3670
        %v3843 = vunpack.c.h.b16 %v3670
        %v3844 = vunpack.c.l.b16 %v3671
        %v3845 = vunpack.c.h.b16 %v3671
        %v3846 = vunpack.c.l.b16 %v3672
        %v3847 = vunpack.c.h.b16 %v3672
        %v3848 = vunpack.c.l.b16 %v3673
        %v3849 = vunpack.c.h.b16 %v3673
        %v3850 = vunpack.c.l.b16 %v3674
        %v3851 = vunpack.c.h.b16 %v3674
        %v3852 = vunpack.c.l.b16 %v3675
        %v3853 = vunpack.c.h.b16 %v3675
        %v3854 = vunpack.c.l.b16 %v3676
        %v3855 = vunpack.c.h.b16 %v3676
        %v3856 = vunpack.c.l.b16 %v3677
        %v3857 = vunpack.c.h.b16 %v3677
        %v3858 = vunpack.c.l.b16 %v3678
        %v3859 = vunpack.c.h.b16 %v3678
        %v3860 = vunpack.c.l.b16 %v3679
        %v3861 = vunpack.c.h.b16 %v3679
        %v3862 = vunpack.c.l.b16 %v3680
        %v3863 = vunpack.c.h.b16 %v3680
        %v3864 = vunpack.c.l.b16 %v3681
        %v3865 = vunpack.c.h.b16 %v3681
        %v3866 = vunpack.c.l.b16 %v3682
        %v3867 = vunpack.c.h.b16 %v3682
        %v3868 = vunpack.c.l.b16 %v3683
        %v3869 = vunpack.c.h.b16 %v3683
        %v3870 = vunpack.c.l.b16 %v3684
        %v3871 = vunpack.c.h.b16 %v3684
        %v3872 = vunpack.c.l.b16 %v3685
        %v3873 = vunpack.c.h.b16 %v3685
        %v3874 = vunpack.c.l.b16 %v3686
        %v3875 = vunpack.c.h.b16 %v3686
        %v3876 = vunpack.c.l.b16 %v3687
        %v3877 = vunpack.c.h.b16 %v3687
        %v3878 = vunpack.c.l.b16 %v3688
        %v3879 = vunpack.c.h.b16 %v3688
        %v3880 = vunpack.c.l.b16 %v3689
        %v3881 = vunpack.c.h.b16 %v3689
        %v3882 = vunpack.c.l.b16 %v3690
        %v3883 = vunpack.c.h.b16 %v3690
        %v3884 = vunpack.c.l.b16 %v3691
        %v3885 = vunpack.c.h.b16 %v3691
        %v3886 = vunpack.c.l.b16 %v3692
        %v3887 = vunpack.c.h.b16 %v3692
        %v3888 = vunpack.c.l.b16 %v3693
        %v3889 = vunpack.c.h.b16 %v3693
        %v3890 = vunpack.c.l.b16 %v3694
        %v3891 = vunpack.c.h.b16 %v3694
        %v3892 = vunpack.c.l.b16 %v3695
        %v3893 = vunpack.c.h.b16 %v3695
        %v3894 = vunpack.c.l.b16 %v3696
        %v3895 = vunpack.c.h.b16 %v3696
        %v3896 = vunpack.c.l.b16 %v3697
        %v3897 = vunpack.c.h.b16 %v3697
        %v3898 = vunpack.c.l.b16 %v3698
        %v3899 = vunpack.c.h.b16 %v3698
        %v3900 = vunpack.c.l.b16 %v3699
        %v3901 = vunpack.c.h.b16 %v3699
        %v3902 = vunpack.c.l.b16 %v3700
        %v3903 = vunpack.c.h.b16 %v3700
        %v3904 = vunpack.c.l.b16 %v3701
        %v3905 = vunpack.c.h.b16 %v3701
        %v3906 = vunpack.c.l.b16 %v3702
        %v3907 = vunpack.c.h.b16 %v3702
        %v3908 = vunpack.c.l.b16 %v3703
        %v3909 = vunpack.c.h.b16 %v3703
        %v3910 = vunpack.c.l.b16 %v3704
        %v3911 = vunpack.c.h.b16 %v3704
        %v3912 = vunpack.c.l.b16 %v3705
        %v3913 = vunpack.c.h.b16 %v3705
        %v3914 = vunpack.c.l.b16 %v3706
        %v3915 = vunpack.c.h.b16 %v3706
        %v3916 = vunpack.c.l.b16 %v3707
        %v3917 = vunpack.c.h.b16 %v3707
        %v3918 = vunpack.c.l.b16 %v3708
        %v3919 = vunpack.c.h.b16 %v3708
        %v3920 = vunpack.c.l.b16 %v3709
        %v3921 = vunpack.c.h.b16 %v3709
        %v3922 = vunpack.c.l.b16 %v3710
        %v3923 = vunpack.c.h.b16 %v3710
        %v3924 = vunpack.c.l.b16 %v3711
        %v3925 = vunpack.c.h.b16 %v3711
        %v3926 = vunpack.c.l.b16 %v3712
        %v3927 = vunpack.c.h.b16 %v3712
        %v3928 = vunpack.c.l.b16 %v3713
        %v3929 = vunpack.c.h.b16 %v3713
        %v3930 = vunpack.c.l.b16 %v3714
        %v3931 = vunpack.c.h.b16 %v3714
        %v3932 = vunpack.c.l.b16 %v3715
        %v3933 = vunpack.c.h.b16 %v3715
        %v3934 = vunpack.c.l.b16 %v3716
        %v3935 = vunpack.c.h.b16 %v3716
        %v3936 = vunpack.c.l.b16 %v3717
        %v3937 = vunpack.c.h.b16 %v3717
        %v3938 = vunpack.c.l.b16 %v3718
        %v3939 = vunpack.c.h.b16 %v3718
        %v3940 = vunpack.c.l.b16 %v3719
        %v3941 = vunpack.c.h.b16 %v3719
        %v3942 = vunpack.c.l.b16 %v3720
        %v3943 = vunpack.c.h.b16 %v3720
        %v3944 = vunpack.c.l.b16 %v3721
        %v3945 = vunpack.c.h.b16 %v3721
        %v3946 = vunpack.c.l.b16 %v3722
        %v3947 = vunpack.c.h.b16 %v3722
        %v3948 = vpack.c.b16 %v3812, %v3804
        %v3949 = vpack.c.b16 %v3813, %v3805
        %v3950 = vpack.c.b16 %v3814, %v3806
        %v3951 = vpack.c.b16 %v3815, %v3807
        %v3952 = vpack.c.b16 %v3816, %v3808
        %v3953 = vpack.c.b16 %v3817, %v3809
        %v3954 = vpack.c.b16 %v3818, %v3810
        %v3955 = vpack.c.b16 %v3819, %v3811
        %v3956 = vpack.c.b16 %v3828, %v3820
        %v3957 = vpack.c.b16 %v3829, %v3821
        %v3958 = vpack.c.b16 %v3830, %v3822
        %v3959 = vpack.c.b16 %v3831, %v3823
        %v3960 = vpack.c.b16 %v3832, %v3824
        %v3961 = vpack.c.b16 %v3833, %v3825
        %v3962 = vpack.c.b16 %v3834, %v3826
        %v3963 = vpack.c.b16 %v3835, %v3827
        %v3964 = vpack.c.b16 %v3844, %v3836
        %v3965 = vpack.c.b16 %v3845, %v3837
        %v3966 = vpack.c.b16 %v3846, %v3838
        %v3967 = vpack.c.b16 %v3847, %v3839
        %v3968 = vpack.c.b16 %v3848, %v3840
        %v3969 = vpack.c.b16 %v3849, %v3841
        %v3970 = vpack.c.b16 %v3850, %v3842
        %v3971 = vpack.c.b16 %v3851, %v3843
        %v3972 = vpack.c.b16 %v3860, %v3852
        %v3973 = vpack.c.b16 %v3861, %v3853
        %v3974 = vpack.c.b16 %v3862, %v3854
        %v3975 = vpack.c.b16 %v3863, %v3855
        %v3976 = vpack.c.b16 %v3864, %v3856
        %v3977 = vpack.c.b16 %v3865, %v3857
        %v3978 = vpack.c.b16 %v3866, %v3858
        %v3979 = vpack.c.b16 %v3867, %v3859
        %v3980 = vpack.c.b16 %v3876, %v3868
        %v3981 = vpack.c.b16 %v3877, %v3869
        %v3982 = vpack.c.b16 %v3878, %v3870
        %v3983 = vpack.c.b16 %v3879, %v3871
        %v3984 = vpack.c.b16 %v3880, %v3872
        %v3985 = vpack.c.b16 %v3881, %v3873
        %v3986 = vpack.c.b16 %v3882, %v3874
        %v3987 = vpack.c.b16 %v3883, %v3875
        %v3988 = vpack.c.b16 %v3892, %v3884
        %v3989 = vpack.c.b16 %v3893, %v3885
        %v3990 = vpack.c.b16 %v3894, %v3886
        %v3991 = vpack.c.b16 %v3895, %v3887
        %v3992 = vpack.c.b16 %v3896, %v3888
        %v3993 = vpack.c.b16 %v3897, %v3889
        %v3994 = vpack.c.b16 %v3898, %v3890
        %v3995 = vpack.c.b16 %v3899, %v3891
        %v3996 = vpack.c.b16 %v3908, %v3900
        %v3997 = vpack.c.b16 %v3909, %v3901
        %v3998 = vpack.c.b16 %v3910, %v3902
        %v3999 = vpack.c.b16 %v3911, %v3903
        %v4000 = vpack.c.b16 %v3912, %v3904
        %v4001 = vpack.c.b16 %v3913, %v3905
        %v4002 = vpack.c.b16 %v3914, %v3906
        %v4003 = vpack.c.b16 %v3915, %v3907
        %v4004 = vpack.c.b16 %v3924, %v3916
        %v4005 = vpack.c.b16 %v3925, %v3917
        %v4006 = vpack.c.b16 %v3926, %v3918
        %v4007 = vpack.c.b16 %v3927, %v3919
        %v4008 = vpack.c.b16 %v3928, %v3920
        %v4009 = vpack.c.b16 %v3929, %v3921
        %v4010 = vpack.c.b16 %v3930, %v3922
        %v4011 = vpack.c.b16 %v3931, %v3923
        %v4012 = vpack.c.b16 %v3940, %v3932
        %v4013 = vpack.c.b16 %v3941, %v3933
        %v4014 = vpack.c.b16 %v3942, %v3934
        %v4015 = vpack.c.b16 %v3943, %v3935
        %v4016 = vpack.c.b16 %v3944, %v3936
        %v4017 = vpack.c.b16 %v3945, %v3937
        %v4018 = vpack.c.b16 %v3946, %v3938
        %v4019 = vpack.c.b16 %v3947, %v3939
        %vm4092 = vcmask 130048
        %v4094 = vsel %vm4092, %v3730, 0
        %4096 = vmatprep.subr.bf16.mxu0 %v4005
        %4097 = vmatpush1.bf16.msra.mxu0 %v4004
        %4098 = vmatprep.subr.bf16.mxu0 %v3997
        %4099 = vmatpush1.bf16.msra.mxu0 %v3996
        %4100 = vmatprep.subr.bf16.mxu0 %v3989
        %4101 = vmatpush1.bf16.msra.mxu0 %v3988
        %4102 = vmatprep.subr.bf16.mxu0 %v3981
        %4103 = vmatpush1.bf16.msra.mxu0 %v3980
        %4104 = vmatprep.subr.bf16.mxu0 %v3973
        %4105 = vmatpush1.bf16.msra.mxu0 %v3972
        %4106 = vmatprep.subr.bf16.mxu0 %v3965
        %4107 = vmatpush1.bf16.msra.mxu0 %v3964
        %4108 = vmatprep.subr.bf16.mxu0 %v3957
        %4109 = vmatpush1.bf16.msra.mxu0 %v3956
        %4110 = vmatprep.subr.bf16.mxu0 %v3949
        %4111 = vmatpush1.bf16.msra.mxu0 %v3948
        %4112 = vmatprep.subr.bf16.mxu0 0
        %4113 = vmatpush2.bf16.msra.mxu0 0
        %4114 = vmatprep.subr.bf16.mxu0 0
        %4115 = vmatpush2.bf16.msra.mxu0 0
        %4116 = vmatprep.subr.bf16.mxu0 0
        %4117 = vmatpush2.bf16.msra.mxu0 0
        %4118 = vmatprep.subr.bf16.mxu0 0
        %4119 = vmatpush2.bf16.msra.mxu0 0
        %4120 = vmatprep.subr.bf16.mxu0 0
        %4121 = vmatpush2.bf16.msra.mxu0 0
        %4122 = vmatprep.subr.bf16.mxu0 0
        %4123 = vmatpush2.bf16.msra.mxu0 0
        %4124 = vmatprep.subr.bf16.mxu0 0
        %4125 = vmatpush2.bf16.msra.mxu0 0
        %4126 = vmatprep.subr.bf16.mxu0 %v4013
        %4127 = vmatpush2.bf16.msra.mxu0 %v4012
        %4128 = vmatprep.mubr.bf16.mxu0 %v4094
        %4129 = vmatmul.mubr.bf16.gmra.mxu0 %v3729
        %v4130 = vpop.f32.mrf.mxu0
        %v4131 = vadd.f32 0.0, %v4130
        %v4132 = vpop.f32.mrf.mxu0
        %v4133 = vadd.f32 0.0, %v4132
        %v4134 = vpop.f32.mrf.mxu0
        %v4135 = vadd.f32 0.0, %v4134
        %v4136 = vpop.f32.mrf.mxu0
        %v4137 = vadd.f32 0.0, %v4136
        %4138 = vdwg.mxu0
        %4139 = vmatprep.subr.bf16.mxu0 %v4007
        %4140 = vmatpush1.bf16.msra.mxu0 %v4006
        %4141 = vmatprep.subr.bf16.mxu0 %v3999
        %4142 = vmatpush1.bf16.msra.mxu0 %v3998
        %4143 = vmatprep.subr.bf16.mxu0 %v3991
        %4144 = vmatpush1.bf16.msra.mxu0 %v3990
        %4145 = vmatprep.subr.bf16.mxu0 %v3983
        %4146 = vmatpush1.bf16.msra.mxu0 %v3982
        %4147 = vmatprep.subr.bf16.mxu0 %v3975
        %4148 = vmatpush1.bf16.msra.mxu0 %v3974
        %4149 = vmatprep.subr.bf16.mxu0 %v3967
        %4150 = vmatpush1.bf16.msra.mxu0 %v3966
        %4151 = vmatprep.subr.bf16.mxu0 %v3959
        %4152 = vmatpush1.bf16.msra.mxu0 %v3958
        %4153 = vmatprep.subr.bf16.mxu0 %v3951
        %4154 = vmatpush1.bf16.msra.mxu0 %v3950
        %4155 = vmatprep.subr.bf16.mxu0 0
        %4156 = vmatpush2.bf16.msra.mxu0 0
        %4157 = vmatprep.subr.bf16.mxu0 0
        %4158 = vmatpush2.bf16.msra.mxu0 0
        %4159 = vmatprep.subr.bf16.mxu0 0
        %4160 = vmatpush2.bf16.msra.mxu0 0
        %4161 = vmatprep.subr.bf16.mxu0 0
        %4162 = vmatpush2.bf16.msra.mxu0 0
        %4163 = vmatprep.subr.bf16.mxu0 0
        %4164 = vmatpush2.bf16.msra.mxu0 0
        %4165 = vmatprep.subr.bf16.mxu0 0
        %4166 = vmatpush2.bf16.msra.mxu0 0
        %4167 = vmatprep.subr.bf16.mxu0 0
        %4168 = vmatpush2.bf16.msra.mxu0 0
        %4169 = vmatprep.subr.bf16.mxu0 %v4015
        %4170 = vmatpush2.bf16.msra.mxu0 %v4014
        %4171 = vmatprep.mubr.bf16.mxu0 %v4094
        %4172 = vmatmul.mubr.bf16.gmra.mxu0 %v3729
        %v4173 = vpop.f32.mrf.mxu0
        %v4174 = vadd.f32 0.0, %v4173
        %v4175 = vpop.f32.mrf.mxu0
        %v4176 = vadd.f32 0.0, %v4175
        %v4177 = vpop.f32.mrf.mxu0
        %v4178 = vadd.f32 0.0, %v4177
        %v4179 = vpop.f32.mrf.mxu0
        %v4180 = vadd.f32 0.0, %v4179
        %4181 = vdwg.mxu0
        %4182 = vmatprep.subr.bf16.mxu0 %v4009
        %4183 = vmatpush1.bf16.msra.mxu0 %v4008
        %4184 = vmatprep.subr.bf16.mxu0 %v4001
        %4185 = vmatpush1.bf16.msra.mxu0 %v4000
        %4186 = vmatprep.subr.bf16.mxu0 %v3993
        %4187 = vmatpush1.bf16.msra.mxu0 %v3992
        %4188 = vmatprep.subr.bf16.mxu0 %v3985
        %4189 = vmatpush1.bf16.msra.mxu0 %v3984
        %4190 = vmatprep.subr.bf16.mxu0 %v3977
        %4191 = vmatpush1.bf16.msra.mxu0 %v3976
        %4192 = vmatprep.subr.bf16.mxu0 %v3969
        %4193 = vmatpush1.bf16.msra.mxu0 %v3968
        %4194 = vmatprep.subr.bf16.mxu0 %v3961
        %4195 = vmatpush1.bf16.msra.mxu0 %v3960
        %4196 = vmatprep.subr.bf16.mxu0 %v3953
        %4197 = vmatpush1.bf16.msra.mxu0 %v3952
        %4198 = vmatprep.subr.bf16.mxu0 0
        %4199 = vmatpush2.bf16.msra.mxu0 0
        %4200 = vmatprep.subr.bf16.mxu0 0
        %4201 = vmatpush2.bf16.msra.mxu0 0
        %4202 = vmatprep.subr.bf16.mxu0 0
        %4203 = vmatpush2.bf16.msra.mxu0 0
        %4204 = vmatprep.subr.bf16.mxu0 0
        %4205 = vmatpush2.bf16.msra.mxu0 0
        %4206 = vmatprep.subr.bf16.mxu0 0
        %4207 = vmatpush2.bf16.msra.mxu0 0
        %4208 = vmatprep.subr.bf16.mxu0 0
        %4209 = vmatpush2.bf16.msra.mxu0 0
        %4210 = vmatprep.subr.bf16.mxu0 0
        %4211 = vmatpush2.bf16.msra.mxu0 0
        %4212 = vmatprep.subr.bf16.mxu0 %v4017
        %4213 = vmatpush2.bf16.msra.mxu0 %v4016
        %4214 = vmatprep.mubr.bf16.mxu0 %v4094
        %4215 = vmatmul.mubr.bf16.gmra.mxu0 %v3729
        %v4216 = vpop.f32.mrf.mxu0
        %v4217 = vadd.f32 0.0, %v4216
        %v4218 = vpop.f32.mrf.mxu0
        %v4219 = vadd.f32 0.0, %v4218
        %v4220 = vpop.f32.mrf.mxu0
        %v4221 = vadd.f32 0.0, %v4220
        %v4222 = vpop.f32.mrf.mxu0
        %v4223 = vadd.f32 0.0, %v4222
        %4224 = vdwg.mxu0
        %4225 = vmatprep.subr.bf16.mxu0 %v4011
        %4226 = vmatpush1.bf16.msra.mxu0 %v4010
        %4227 = vmatprep.subr.bf16.mxu0 %v4003
        %4228 = vmatpush1.bf16.msra.mxu0 %v4002
        %4229 = vmatprep.subr.bf16.mxu0 %v3995
        %4230 = vmatpush1.bf16.msra.mxu0 %v3994
        %4231 = vmatprep.subr.bf16.mxu0 %v3987
        %4232 = vmatpush1.bf16.msra.mxu0 %v3986
        %4233 = vmatprep.subr.bf16.mxu0 %v3979
        %4234 = vmatpush1.bf16.msra.mxu0 %v3978
        %4235 = vmatprep.subr.bf16.mxu0 %v3971
        %4236 = vmatpush1.bf16.msra.mxu0 %v3970
        %4237 = vmatprep.subr.bf16.mxu0 %v3963
        %4238 = vmatpush1.bf16.msra.mxu0 %v3962
        %4239 = vmatprep.subr.bf16.mxu0 %v3955
        %4240 = vmatpush1.bf16.msra.mxu0 %v3954
        %4241 = vmatprep.subr.bf16.mxu0 0
        %4242 = vmatpush2.bf16.msra.mxu0 0
        %4243 = vmatprep.subr.bf16.mxu0 0
        %4244 = vmatpush2.bf16.msra.mxu0 0
        %4245 = vmatprep.subr.bf16.mxu0 0
        %4246 = vmatpush2.bf16.msra.mxu0 0
        %4247 = vmatprep.subr.bf16.mxu0 0
        %4248 = vmatpush2.bf16.msra.mxu0 0
        %4249 = vmatprep.subr.bf16.mxu0 0
        %4250 = vmatpush2.bf16.msra.mxu0 0
        %4251 = vmatprep.subr.bf16.mxu0 0
        %4252 = vmatpush2.bf16.msra.mxu0 0
        %4253 = vmatprep.subr.bf16.mxu0 0
        %4254 = vmatpush2.bf16.msra.mxu0 0
        %4255 = vmatprep.subr.bf16.mxu0 %v4019
        %4256 = vmatpush2.bf16.msra.mxu0 %v4018
        %4257 = vmatprep.mubr.bf16.mxu0 %v4094
        %4258 = vmatmul.mubr.bf16.gmra.mxu0 %v3729
        %v4259 = vpop.f32.mrf.mxu0
        %v4260 = vadd.f32 0.0, %v4259
        %v4261 = vpop.f32.mrf.mxu0
        %v4262 = vadd.f32 0.0, %v4261
        %v4263 = vpop.f32.mrf.mxu0
        %v4264 = vadd.f32 0.0, %v4263
        %v4265 = vpop.f32.mrf.mxu0
        %v4266 = vadd.f32 0.0, %v4265
        %4267 = vdwg.mxu0
        %4268 = vst [vmem:[#allocation4] sm:$0xff] %v4131
        %4269 = vst [vmem:[#allocation4 + $0x8] sm:$0xff] %v4133
        %4270 = vst [vmem:[#allocation4 + $0x10] sm:$0xff] %v4174
        %4271 = vst [vmem:[#allocation4 + $0x18] sm:$0xff] %v4176
        %4272 = vst [vmem:[#allocation4 + $0x20] sm:$0xff] %v4217
        %4273 = vst [vmem:[#allocation4 + $0x28] sm:$0xff] %v4219
        %4274 = vst [vmem:[#allocation4 + $0x30] sm:$0xff] %v4260
        %4275 = vst [vmem:[#allocation4 + $0x38] sm:$0xff] %v4262
        %4276 = vst [vmem:[#allocation4 + $0x40] sm:$0xff] %v4135
        %4277 = vst [vmem:[#allocation4 + $0x48] sm:$0xff] %v4137
        %4278 = vst [vmem:[#allocation4 + $0x50] sm:$0xff] %v4178
        %4279 = vst [vmem:[#allocation4 + $0x58] sm:$0xff] %v4180
        %4280 = vst [vmem:[#allocation4 + $0x60] sm:$0xff] %v4221
        %4281 = vst [vmem:[#allocation4 + $0x68] sm:$0xff] %v4223
        %4282 = vst [vmem:[#allocation4 + $0x70] sm:$0xff] %v4264
        %4283 = vst [vmem:[#allocation4 + $0x78] sm:$0xff] %v4266
        %v4284 = vld [vmem:[#allocation2] sm:$0xff]
        %v4285 = vld [vmem:[#allocation2 + $0x8] sm:$0xff]
        %v4286 = vld [vmem:[%s7] sm:$0xf]
        %v4287 = vld [vmem:[%s7 + $0x4] sm:$0xf]
        %v4288 = vpack.c.bf16 %v4284, %v4284
        %v4289 = vpack.c.bf16 %v4285, %v4285
        %v4292 = vunpack.c.l.b16 %v4286
        %v4293 = vunpack.c.l.b16 %v4287
        %v4294 = vpack.c.b16 %v4293, %v4292
        %vm4295 = vcmask 64512
        %v4297 = vsel %vm4295, %v4294, 0
        %v4300 = vsel %vm1752, %v4288, 0
        %v4303 = vsel %vm1752, %v4289, 0
        %4305 = vmatprep.subr.bf16.mxu0 0
        %4306 = vmatpush1.bf16.msra.mxu0 0
        %4307 = vmatprep.subr.bf16.mxu0 0
        %4308 = vmatpush1.bf16.msra.mxu0 0
        %4309 = vmatprep.subr.bf16.mxu0 0
        %4310 = vmatpush1.bf16.msra.mxu0 0
        %4311 = vmatprep.subr.bf16.mxu0 0
        %4312 = vmatpush1.bf16.msra.mxu0 0
        %4313 = vmatprep.subr.bf16.mxu0 0
        %4314 = vmatpush1.bf16.msra.mxu0 0
        %4315 = vmatprep.subr.bf16.mxu0 0
        %4316 = vmatpush1.bf16.msra.mxu0 0
        %4317 = vmatprep.subr.bf16.mxu0 0
        %4318 = vmatpush1.bf16.msra.mxu0 0
        %4319 = vmatprep.subr.bf16.mxu0 %v4303
        %4320 = vmatpush1.bf16.msra.mxu0 %v4300
        %4321 = vmatprep.subr.bf16.mxu0 0
        %4322 = vmatpush2.bf16.msra.mxu0 0
        %4323 = vmatprep.subr.bf16.mxu0 0
        %4324 = vmatpush2.bf16.msra.mxu0 0
        %4325 = vmatprep.subr.bf16.mxu0 0
        %4326 = vmatpush2.bf16.msra.mxu0 0
        %4327 = vmatprep.subr.bf16.mxu0 0
        %4328 = vmatpush2.bf16.msra.mxu0 0
        %4329 = vmatprep.subr.bf16.mxu0 0
        %4330 = vmatpush2.bf16.msra.mxu0 0
        %4331 = vmatprep.subr.bf16.mxu0 0
        %4332 = vmatpush2.bf16.msra.mxu0 0
        %4333 = vmatprep.subr.bf16.mxu0 0
        %4334 = vmatpush2.bf16.msra.mxu0 0
        %4335 = vmatprep.subr.bf16.mxu0 0
        %4336 = vmatpush2.bf16.msra.mxu0 0
        %4337 = vmatprep.mubr.bf16.mxu0 0
        %4338 = vmatmul.mubr.bf16.gmra.mxu0 %v4297
        %v4339 = vpop.f32.mrf.mxu0
        %v4340 = vadd.f32 0.0, %v4339
        %v4341 = vpop.f32.mrf.mxu0
        %v4342 = vadd.f32 0.0, %v4341
        %v4343 = vpop.f32.mrf.mxu0
        %v4344 = vadd.f32 0.0, %v4343
        %v4345 = vpop.f32.mrf.mxu0
        %v4346 = vadd.f32 0.0, %v4345
        %4347 = vdwg.mxu0
        %v4348 = vld [vmem:[#allocation4] sm:$0xff]
        %v4349 = vld [vmem:[#allocation4 + $0x8] sm:$0xff]
        %v4350 = vld [vmem:[#allocation4 + $0x40] sm:$0xff]
        %v4351 = vld [vmem:[#allocation4 + $0x48] sm:$0xff]
        %v4352 = vadd.f32 %v4348, %v4340
        %v4353 = vadd.f32 %v4349, %v4342
        %v4354 = vadd.f32 %v4350, %v4344
        %v4355 = vadd.f32 %v4351, %v4346
        %4356 = vst [vmem:[%s420] sm:$0xff] %v4352
        %4357 = vst [vmem:[%s420 + $0x8] sm:$0xff] %v4353
        %4358 = vst [vmem:[%s420 + $0x10] sm:$0xff] %v4354
        %4359 = vst [vmem:[%s420 + $0x18] sm:$0xff] %v4355
        %v4360 = vld [vmem:[%s751] sm:$0xff]
        %v4361 = vld [vmem:[%s751 + $0x8] sm:$0xff]
        %v4362 = vld [vmem:[%s7] sm:$0xf]
        %v4363 = vld [vmem:[%s7 + $0x4] sm:$0xf]
        %v4364 = vpack.c.bf16 %v4360, %v4360
        %v4365 = vpack.c.bf16 %v4361, %v4361
        %v4368 = vunpack.c.l.b16 %v4362
        %v4369 = vunpack.c.l.b16 %v4363
        %v4370 = vpack.c.b16 %v4369, %v4368
        %v4372 = vsel %vm4295, %v4370, 0
        %v4375 = vsel %vm1752, %v4364, 0
        %v4378 = vsel %vm1752, %v4365, 0
        %4380 = vmatprep.subr.bf16.mxu0 0
        %4381 = vmatpush1.bf16.msra.mxu0 0
        %4382 = vmatprep.subr.bf16.mxu0 0
        %4383 = vmatpush1.bf16.msra.mxu0 0
        %4384 = vmatprep.subr.bf16.mxu0 0
        %4385 = vmatpush1.bf16.msra.mxu0 0
        %4386 = vmatprep.subr.bf16.mxu0 0
        %4387 = vmatpush1.bf16.msra.mxu0 0
        %4388 = vmatprep.subr.bf16.mxu0 0
        %4389 = vmatpush1.bf16.msra.mxu0 0
        %4390 = vmatprep.subr.bf16.mxu0 0
        %4391 = vmatpush1.bf16.msra.mxu0 0
        %4392 = vmatprep.subr.bf16.mxu0 0
        %4393 = vmatpush1.bf16.msra.mxu0 0
        %4394 = vmatprep.subr.bf16.mxu0 %v4378
        %4395 = vmatpush1.bf16.msra.mxu0 %v4375
        %4396 = vmatprep.subr.bf16.mxu0 0
        %4397 = vmatpush2.bf16.msra.mxu0 0
        %4398 = vmatprep.subr.bf16.mxu0 0
        %4399 = vmatpush2.bf16.msra.mxu0 0
        %4400 = vmatprep.subr.bf16.mxu0 0
        %4401 = vmatpush2.bf16.msra.mxu0 0
        %4402 = vmatprep.subr.bf16.mxu0 0
        %4403 = vmatpush2.bf16.msra.mxu0 0
        %4404 = vmatprep.subr.bf16.mxu0 0
        %4405 = vmatpush2.bf16.msra.mxu0 0
        %4406 = vmatprep.subr.bf16.mxu0 0
        %4407 = vmatpush2.bf16.msra.mxu0 0
        %4408 = vmatprep.subr.bf16.mxu0 0
        %4409 = vmatpush2.bf16.msra.mxu0 0
        %4410 = vmatprep.subr.bf16.mxu0 0
        %4411 = vmatpush2.bf16.msra.mxu0 0
        %4412 = vmatprep.mubr.bf16.mxu0 0
        %4413 = vmatmul.mubr.bf16.gmra.mxu0 %v4372
        %v4414 = vpop.f32.mrf.mxu0
        %v4415 = vadd.f32 0.0, %v4414
        %v4416 = vpop.f32.mrf.mxu0
        %v4417 = vadd.f32 0.0, %v4416
        %v4418 = vpop.f32.mrf.mxu0
        %v4419 = vadd.f32 0.0, %v4418
        %v4420 = vpop.f32.mrf.mxu0
        %v4421 = vadd.f32 0.0, %v4420
        %4422 = vdwg.mxu0
        %v4423 = vld [vmem:[#allocation4 + $0x10] sm:$0xff]
        %v4424 = vld [vmem:[#allocation4 + $0x18] sm:$0xff]
        %v4425 = vld [vmem:[#allocation4 + $0x50] sm:$0xff]
        %v4426 = vld [vmem:[#allocation4 + $0x58] sm:$0xff]
        %v4427 = vadd.f32 %v4423, %v4415
        %v4428 = vadd.f32 %v4424, %v4417
        %v4429 = vadd.f32 %v4425, %v4419
        %v4430 = vadd.f32 %v4426, %v4421
        %s4431 = scalar_lea.vmem %s420, 32 [#allocation12]
        %4432 = vst [vmem:[%s4431] sm:$0xff] %v4427
        %4433 = vst [vmem:[%s4431 + $0x8] sm:$0xff] %v4428
        %4434 = vst [vmem:[%s4431 + $0x10] sm:$0xff] %v4429
        %4435 = vst [vmem:[%s4431 + $0x18] sm:$0xff] %v4430
        %v4436 = vld [vmem:[%s1009] sm:$0xff]
        %v4437 = vld [vmem:[%s1009 + $0x8] sm:$0xff]
        %v4438 = vld [vmem:[%s7] sm:$0xf]
        %v4439 = vld [vmem:[%s7 + $0x4] sm:$0xf]
        %v4440 = vpack.c.bf16 %v4436, %v4436
        %v4441 = vpack.c.bf16 %v4437, %v4437
        %v4444 = vunpack.c.l.b16 %v4438
        %v4445 = vunpack.c.l.b16 %v4439
        %v4446 = vpack.c.b16 %v4445, %v4444
        %v4448 = vsel %vm4295, %v4446, 0
        %v4451 = vsel %vm1752, %v4440, 0
        %v4454 = vsel %vm1752, %v4441, 0
        %4456 = vmatprep.subr.bf16.mxu0 0
        %4457 = vmatpush1.bf16.msra.mxu0 0
        %4458 = vmatprep.subr.bf16.mxu0 0
        %4459 = vmatpush1.bf16.msra.mxu0 0
        %4460 = vmatprep.subr.bf16.mxu0 0
        %4461 = vmatpush1.bf16.msra.mxu0 0
        %4462 = vmatprep.subr.bf16.mxu0 0
        %4463 = vmatpush1.bf16.msra.mxu0 0
        %4464 = vmatprep.subr.bf16.mxu0 0
        %4465 = vmatpush1.bf16.msra.mxu0 0
        %4466 = vmatprep.subr.bf16.mxu0 0
        %4467 = vmatpush1.bf16.msra.mxu0 0
        %4468 = vmatprep.subr.bf16.mxu0 0
        %4469 = vmatpush1.bf16.msra.mxu0 0
        %4470 = vmatprep.subr.bf16.mxu0 %v4454
        %4471 = vmatpush1.bf16.msra.mxu0 %v4451
        %4472 = vmatprep.subr.bf16.mxu0 0
        %4473 = vmatpush2.bf16.msra.mxu0 0
        %4474 = vmatprep.subr.bf16.mxu0 0
        %4475 = vmatpush2.bf16.msra.mxu0 0
        %4476 = vmatprep.subr.bf16.mxu0 0
        %4477 = vmatpush2.bf16.msra.mxu0 0
        %4478 = vmatprep.subr.bf16.mxu0 0
        %4479 = vmatpush2.bf16.msra.mxu0 0
        %4480 = vmatprep.subr.bf16.mxu0 0
        %4481 = vmatpush2.bf16.msra.mxu0 0
        %4482 = vmatprep.subr.bf16.mxu0 0
        %4483 = vmatpush2.bf16.msra.mxu0 0
        %4484 = vmatprep.subr.bf16.mxu0 0
        %4485 = vmatpush2.bf16.msra.mxu0 0
        %4486 = vmatprep.subr.bf16.mxu0 0
        %4487 = vmatpush2.bf16.msra.mxu0 0
        %4488 = vmatprep.mubr.bf16.mxu0 0
        %4489 = vmatmul.mubr.bf16.gmra.mxu0 %v4448
        %v4490 = vpop.f32.mrf.mxu0
        %v4491 = vadd.f32 0.0, %v4490
        %v4492 = vpop.f32.mrf.mxu0
        %v4493 = vadd.f32 0.0, %v4492
        %v4494 = vpop.f32.mrf.mxu0
        %v4495 = vadd.f32 0.0, %v4494
        %v4496 = vpop.f32.mrf.mxu0
        %v4497 = vadd.f32 0.0, %v4496
        %4498 = vdwg.mxu0
        %v4499 = vld [vmem:[#allocation4 + $0x20] sm:$0xff]
        %v4500 = vld [vmem:[#allocation4 + $0x28] sm:$0xff]
        %v4501 = vld [vmem:[#allocation4 + $0x60] sm:$0xff]
        %v4502 = vld [vmem:[#allocation4 + $0x68] sm:$0xff]
        %v4503 = vadd.f32 %v4499, %v4491
        %v4504 = vadd.f32 %v4500, %v4493
        %v4505 = vadd.f32 %v4501, %v4495
        %v4506 = vadd.f32 %v4502, %v4497
        %s4507 = scalar_lea.vmem %s420, 64 [#allocation12]
        %4508 = vst [vmem:[%s4507] sm:$0xff] %v4503
        %4509 = vst [vmem:[%s4507 + $0x8] sm:$0xff] %v4504
        %4510 = vst [vmem:[%s4507 + $0x10] sm:$0xff] %v4505
        %4511 = vst [vmem:[%s4507 + $0x18] sm:$0xff] %v4506
        %v4512 = vld [vmem:[%s1267] sm:$0xff]
        %v4513 = vld [vmem:[%s1267 + $0x8] sm:$0xff]
        %v4514 = vld [vmem:[%s7] sm:$0xf]
        %v4515 = vld [vmem:[%s7 + $0x4] sm:$0xf]
        %v4516 = vpack.c.bf16 %v4512, %v4512
        %v4517 = vpack.c.bf16 %v4513, %v4513
        %v4520 = vunpack.c.l.b16 %v4514
        %v4521 = vunpack.c.l.b16 %v4515
        %v4522 = vpack.c.b16 %v4521, %v4520
        %v4524 = vsel %vm4295, %v4522, 0
        %v4527 = vsel %vm1752, %v4516, 0
        %v4530 = vsel %vm1752, %v4517, 0
        %4532 = vmatprep.subr.bf16.mxu0 0
        %4533 = vmatpush1.bf16.msra.mxu0 0
        %4534 = vmatprep.subr.bf16.mxu0 0
        %4535 = vmatpush1.bf16.msra.mxu0 0
        %4536 = vmatprep.subr.bf16.mxu0 0
        %4537 = vmatpush1.bf16.msra.mxu0 0
        %4538 = vmatprep.subr.bf16.mxu0 0
        %4539 = vmatpush1.bf16.msra.mxu0 0
        %4540 = vmatprep.subr.bf16.mxu0 0
        %4541 = vmatpush1.bf16.msra.mxu0 0
        %4542 = vmatprep.subr.bf16.mxu0 0
        %4543 = vmatpush1.bf16.msra.mxu0 0
        %4544 = vmatprep.subr.bf16.mxu0 0
        %4545 = vmatpush1.bf16.msra.mxu0 0
        %4546 = vmatprep.subr.bf16.mxu0 %v4530
        %4547 = vmatpush1.bf16.msra.mxu0 %v4527
        %4548 = vmatprep.subr.bf16.mxu0 0
        %4549 = vmatpush2.bf16.msra.mxu0 0
        %4550 = vmatprep.subr.bf16.mxu0 0
        %4551 = vmatpush2.bf16.msra.mxu0 0
        %4552 = vmatprep.subr.bf16.mxu0 0
        %4553 = vmatpush2.bf16.msra.mxu0 0
        %4554 = vmatprep.subr.bf16.mxu0 0
        %4555 = vmatpush2.bf16.msra.mxu0 0
        %4556 = vmatprep.subr.bf16.mxu0 0
        %4557 = vmatpush2.bf16.msra.mxu0 0
        %4558 = vmatprep.subr.bf16.mxu0 0
        %4559 = vmatpush2.bf16.msra.mxu0 0
        %4560 = vmatprep.subr.bf16.mxu0 0
        %4561 = vmatpush2.bf16.msra.mxu0 0
        %4562 = vmatprep.subr.bf16.mxu0 0
        %4563 = vmatpush2.bf16.msra.mxu0 0
        %4564 = vmatprep.mubr.bf16.mxu0 0
        %4565 = vmatmul.mubr.bf16.gmra.mxu0 %v4524
        %v4566 = vpop.f32.mrf.mxu0
        %v4567 = vadd.f32 0.0, %v4566
        %v4568 = vpop.f32.mrf.mxu0
        %v4569 = vadd.f32 0.0, %v4568
        %v4570 = vpop.f32.mrf.mxu0
        %v4571 = vadd.f32 0.0, %v4570
        %v4572 = vpop.f32.mrf.mxu0
        %v4573 = vadd.f32 0.0, %v4572
        %4574 = vdwg.mxu0
        %v4575 = vld [vmem:[#allocation4 + $0x30] sm:$0xff]
        %v4576 = vld [vmem:[#allocation4 + $0x38] sm:$0xff]
        %v4577 = vld [vmem:[#allocation4 + $0x70] sm:$0xff]
        %v4578 = vld [vmem:[#allocation4 + $0x78] sm:$0xff]
        %v4579 = vadd.f32 %v4575, %v4567
        %v4580 = vadd.f32 %v4576, %v4569
        %v4581 = vadd.f32 %v4577, %v4571
        %v4582 = vadd.f32 %v4578, %v4573
        %s4583 = scalar_lea.vmem %s420, 96 [#allocation12]
        %4584 = vst [vmem:[%s4583] sm:$0xff] %v4579
        %4585 = vst [vmem:[%s4583 + $0x8] sm:$0xff] %v4580
        %4586 = vst [vmem:[%s4583 + $0x10] sm:$0xff] %v4581
        %4587 = vst [vmem:[%s4583 + $0x18] sm:$0xff] %v4582
        %s4588 = sand.u32 %s273, 1
        %s4589 = scalar_lea.sflag [#allocation9], %s4588
        %s4590 = sand.u32 %s273, 1
        %s4591 = smul.addr %s4590, 128
        %s4592 = scalar_lea.vmem [#allocation12], %s4591
        // Predicated region
        $region73: #{tpu_custom_call.1} parent=63 // pred_check
          %p4593 = pneg %p283
        $region74: #{tpu_custom_call.1} parent=63 // pred_check_branch
          %4595 = sbr.rel (%p4593) target = $region76
        $region75: #{tpu_custom_call.1} parent=63 // pred_region
          %s4596 = smul.u32 4, %s29
          %s4598 = ssub.s32 2048, 2048
          %4599 = vsyncadd %s4589, %s4598
          %s4600 = smul.addr %s4596, 4
          %s4601 = smul.addr %s4600, 128
          %s4602 = scalar_lea.hbm %s11, %s4601
          %s4603 = sshll.u32 %s4592, 4
          %s4604 = int_to_ptr.vmem [resolvable:$true] %s4603
          %4609 = dma.vmem_to_hbm [thread:$0]  %s4604, 2048, %s4602, %s4589, 256, 256, 16
        $region76: #{tpu_custom_call.1} parent=63 // pred_fallthru
          _
      $region64: #{tpu_custom_call.1} parent=5 // pred_fallthru
        _
      %p4610 = scmp.le.s32.totalorder 2, %s24
      // Predicated region
      $region77: #{tpu_custom_call.1} parent=5 // pred_check
        %p4611 = pneg %p4610
      $region78: #{tpu_custom_call.1} parent=5 // pred_check_branch
        %4613 = sbr.rel (%p4611) target = $region80
      $region79: #{tpu_custom_call.1} parent=5 // pred_region
        %s4614 = ssub.s32 %s24, 2
        // Predicated region
        $region81: #{tpu_custom_call.1} parent=79 // pred_check
          %p4615 = pneg %p289
        $region82: #{tpu_custom_call.1} parent=79 // pred_check_branch
          %4617 = sbr.rel (%p4615) target = $region84
        $region83: #{tpu_custom_call.1} parent=79 // pred_region
          %s4618 = sand.u32 %s274, 1
          %s4619 = scalar_lea.sflag [#allocation9], %s4618
          %s4620 = sand.u32 %s274, 1
          %s4621 = smul.addr %s4620, 128
          %s4622 = scalar_lea.vmem [#allocation12], %s4621
          %4623 = dma.done %s4619, 2048
        $region84: #{tpu_custom_call.1} parent=79 // pred_fallthru
          _
      $region80: #{tpu_custom_call.1} parent=5 // pred_fallthru
        _
    $region6: #{tpu_custom_call.1} parent=1 // loop_footer
      %s28 = sadd.s32 1, %s24
    $region7: #{tpu_custom_call.1} parent=1 // loop_footer_branch
      %23 = sbr.rel target = $region3
    $region8: #{tpu_custom_call.1} parent=1 // loop_exit
      _
    %4624 = vsyncpa [#allocation8], 1
    %s4625 = scalar_lea.sflag [#allocation8], 1
    %4626 = vsyncpa %s4625, 1
    %4627 = vsyncpa [#allocation11], 1
    %4628 = vsyncpa [#allocation9], 1
    %s4629 = scalar_lea.sflag [#allocation9], 1
    %4630 = vsyncpa %s4629, 1

</llo_original>
